<compile_context>
chip_gen: v5e
topology: v5e:2x2
jax: 0.10.0
libtpu: 0.0.40
codegen_flags: <defaults>
</compile_context>

<pallas_src>
import functools

import jax
import jax.numpy as jnp
from jax.experimental import pallas as pl
from jax.experimental.pallas import tpu as pltpu

_PADL = 16  # sublane-aligned left pad inside the VMEM halo scratch


# -----------------------------------------------------------------------------
# Shared in-kernel helper: halo-padded im2col conv as one deep MXU matmul
# -----------------------------------------------------------------------------
def _im2col_conv(xpad_ref, xv, w_ref, b_ref, *, K, H, W, Cin):
    """xv: (H, W, Cin) value.  Returns (H*W, Cout) f32 accumulator."""
    p = K // 2
    # Build the zero-padded tile entirely in VMEM (no HBM pre-pad round trip).
    # Interior sits at a sublane-aligned column offset (_PADL) so the store
    # needs no relayout; halo taps read at small static offsets.
    xpad_ref[...] = jnp.zeros_like(xpad_ref)
    xpad_ref[p:p + H, _PADL:_PADL + W, :] = xv.astype(xpad_ref.dtype)

    patches = []
    for kh in range(K):
        for kw in range(K):
            c0 = _PADL - p + kw
            patches.append(xpad_ref[kh:kh + H, c0:c0 + W, :].reshape(H * W, Cin))
    pm = jnp.concatenate(patches, axis=-1)                    # (H*W, K*K*Cin)
    acc = jnp.dot(pm, w_ref[...], preferred_element_type=jnp.float32)
    return acc + b_ref[...]                                   # bias in f32


# -----------------------------------------------------------------------------
# Pallas fused conv2d ("same", stride 1) kernel
# -----------------------------------------------------------------------------
def _conv2d_kernel(*refs, K, relu, scale, has_add, has_residual):
    it = iter(refs)
    x_ref = next(it)
    x2_ref = next(it) if has_add else None
    w_ref = next(it)                      # (K*K*Cin, Cout)
    b_ref = next(it)                      # (1, Cout) f32
    r_ref = next(it) if has_residual else None
    o_ref = next(it)                      # (1, H, W, Cout)
    xpad_ref = next(it)                   # (H+2p, W+_PADL+p, Cin) VMEM scratch

    H, W, Cout = o_ref.shape[1], o_ref.shape[2], o_ref.shape[3]
    Cin = x_ref.shape[3]

    # Fused "global skip" add on the input side (x + features before upsampling).
    xv = x_ref[0]
    if has_add:
        xv = xv + x2_ref[0]

    acc = _im2col_conv(xpad_ref, xv, w_ref, b_ref, K=K, H=H, W=W, Cin=Cin)
    if relu:
        acc = jnp.maximum(acc, 0.0)
    if scale is not None:
        acc = acc * scale                                     # resblock scaling
    out = acc.reshape(1, H, W, Cout)
    if has_residual:
        out = out + r_ref[...].astype(jnp.float32)            # fused residual add
    o_ref[...] = out.astype(o_ref.dtype)


def conv2d_pallas(x, w, b, *, relu=False, scale=None, residual=None,
                  add_input=None):
    """'same' conv2d, stride 1, with fused bias/ReLU/scale/residual/input-add.

    x: (N,H,W,Cin), w: (K,K,Cin,Cout), b: (Cout,)
    residual  (optional): (N,H,W,Cout) -> out = residual + scale*conv(x)
    add_input (optional): (N,H,W,Cin)  -> out = conv(x + add_input)
    """
    N, H, W, Cin = x.shape
    K = w.shape[0]
    Cout = w.shape[3]
    p = K // 2

    # Host-side weight repack: (K,K,Cin,Cout) -> (K*K*Cin, Cout) MXU operand.
    w2 = w.reshape(K * K * Cin, Cout).astype(x.dtype)
    b2 = b.reshape(1, Cout).astype(jnp.float32)

    inputs = [x]
    in_specs = [pl.BlockSpec((1, H, W, Cin), lambda n: (n, 0, 0, 0))]
    if add_input is not None:
        inputs.append(add_input.astype(x.dtype))
        in_specs.append(pl.BlockSpec((1, H, W, Cin), lambda n: (n, 0, 0, 0)))
    inputs += [w2, b2]
    in_specs += [
        pl.BlockSpec((K * K * Cin, Cout), lambda n: (0, 0)),
        pl.BlockSpec((1, Cout), lambda n: (0, 0)),
    ]
    if residual is not None:
        inputs.append(residual.astype(x.dtype))
        in_specs.append(pl.BlockSpec((1, H, W, Cout), lambda n: (n, 0, 0, 0)))

    kernel = functools.partial(
        _conv2d_kernel, K=K, relu=relu, scale=scale,
        has_add=add_input is not None, has_residual=residual is not None)

    # TODO(synk): for large images add a spatial row-tile grid axis with halo
    # DMA (needed to stay under v7x's 64 MiB VMEM and feed both TensorCores).
    return pl.pallas_call(
        kernel,
        out_shape=jax.ShapeDtypeStruct((N, H, W, Cout), x.dtype),
        grid_spec=pltpu.PrefetchScalarGridSpec(
            num_scalar_prefetch=0,
            grid=(N,),
            in_specs=in_specs,
            out_specs=pl.BlockSpec((1, H, W, Cout), lambda n: (n, 0, 0, 0)),
            scratch_shapes=[
                pltpu.VMEM((H + 2 * p, W + _PADL + p, Cin), x.dtype)],
        ),
        compiler_params=pltpu.CompilerParams(
            dimension_semantics=("parallel",),
            vmem_limit_bytes=48 << 20),
    )(*inputs)


# -----------------------------------------------------------------------------
# Pallas fully-fused ResidualBlock kernel
#   out = x + scale * conv2(relu(conv1(x)))      (both convs 3x3, "same")
# The intermediate activation stays in VMEM; the halo scratch is reused for
# both convs (writes are sequenced after the first conv's reads).
# -----------------------------------------------------------------------------
def _resblock_kernel(x_ref, w1_ref, b1_ref, w2_ref, b2_ref, o_ref, xpad_ref,
                     *, scale):
    K = 3
    H, W, C = o_ref.shape[1], o_ref.shape[2], o_ref.shape[3]

    xv = x_ref[0]                                              # (H, W, C)

    y = _im2col_conv(xpad_ref, xv, w1_ref, b1_ref, K=K, H=H, W=W, Cin=C)
    y = jnp.maximum(y, 0.0)                                    # ReLU (f32)

    z = _im2col_conv(xpad_ref, y.astype(x_ref.dtype).reshape(H, W, C),
                     w2_ref, b2_ref, K=K, H=H, W=W, Cin=C)
    if scale is not None:
        z = z * scale

    out = xv.astype(jnp.float32) + z.reshape(H, W, C)          # residual add
    o_ref[...] = out.reshape(1, H, W, C).astype(o_ref.dtype)


def resblock_pallas(x, w1, b1, w2, b2, *, scale=None):
    """Fused EDSR residual block: x + scale*conv2(relu(conv1(x)))."""
    N, H, W, C = x.shape
    K, p = 3, 1
    w1r = w1.reshape(K * K * C, C).astype(x.dtype)
    w2r = w2.reshape(K * K * C, C).astype(x.dtype)
    b1r = b1.reshape(1, C).astype(jnp.float32)
    b2r = b2.reshape(1, C).astype(jnp.float32)

    kernel = functools.partial(_resblock_kernel, scale=scale)
    return pl.pallas_call(
        kernel,
        out_shape=jax.ShapeDtypeStruct((N, H, W, C), x.dtype),
        grid_spec=pltpu.PrefetchScalarGridSpec(
            num_scalar_prefetch=0,
            grid=(N,),
            in_specs=[
                pl.BlockSpec((1, H, W, C), lambda n: (n, 0, 0, 0)),
                pl.BlockSpec((K * K * C, C), lambda n: (0, 0)),
                pl.BlockSpec((1, C), lambda n: (0, 0)),
                pl.BlockSpec((K * K * C, C), lambda n: (0, 0)),
                pl.BlockSpec((1, C), lambda n: (0, 0)),
            ],
            out_specs=pl.BlockSpec((1, H, W, C), lambda n: (n, 0, 0, 0)),
            scratch_shapes=[
                pltpu.VMEM((H + 2 * p, W + _PADL + p, C), x.dtype)],
        ),
        compiler_params=pltpu.CompilerParams(
            dimension_semantics=("parallel",),
            vmem_limit_bytes=48 << 20),
    )(x, w1r, b1r, w2r, b2r)


# -----------------------------------------------------------------------------
# Plain-JAX references (for correctness checking)
# -----------------------------------------------------------------------------
def conv2d_ref(x, w, b, *, relu=False, scale=None, residual=None,
               add_input=None):
    if add_input is not None:
        x = x + add_input
    out = jax.lax.conv_general_dilated(
        x, w, window_strides=(1, 1), padding="SAME",
        dimension_numbers=("NHWC", "HWIO", "NHWC"))
    out = out + b.reshape(1, 1, 1, -1)
    if relu:
        out = jnp.maximum(out, 0.0)
    if scale is not None:
        out = out * scale
    if residual is not None:
        out = out + residual
    return out


def resblock_ref(x, w1, b1, w2, b2, *, scale=None):
    y = conv2d_ref(x, w1, b1, relu=True)
    z = conv2d_ref(y, w2, b2, scale=scale)
    return x + z


# -----------------------------------------------------------------------------
# Glue ops (pure data movement)
# -----------------------------------------------------------------------------
def pixel_shuffle_nhwc(x, r):
    # PyTorch PixelShuffle: input channel index = c*r*r + i*r + j.
    # TODO(synk): fuse this scatter into the up-conv's output index_map.
    N, H, W, Crr = x.shape
    C = Crr // (r * r)
    x = x.reshape(N, H, W, C, r, r)           # (..., c, i, j)
    x = jnp.transpose(x, (0, 1, 4, 2, 5, 3))  # (N, H, i, W, j, C)
    return x.reshape(N, H * r, W * r, C)


# -----------------------------------------------------------------------------
# Deterministic parameter init (synthetic, matches PyTorch shapes)
# -----------------------------------------------------------------------------
def _conv_params(key, cin, cout, k):
    kw, kb = jax.random.split(key)
    fan_in = cin * k * k
    w = jax.random.normal(kw, (k, k, cin, cout), jnp.float32) / jnp.sqrt(fan_in)
    b = jax.random.normal(kb, (cout,), jnp.float32) * 0.01
    return {"w": w, "b": b}


def init_mdsr_params(key, in_channels, out_channels, scale_factors,
                     num_channels, num_res_blocks):
    keys = iter(jax.random.split(key, 4 * (len(scale_factors) + num_res_blocks) + 8))
    params = {"head": {}, "res": [], "up": {}, "tail": None}
    for s in scale_factors:
        params["head"][s] = _conv_params(next(keys), in_channels, out_channels, 5)
    for _ in range(num_res_blocks):
        params["res"].append({
            "conv1": _conv_params(next(keys), num_channels, num_channels, 3),
            "conv2": _conv_params(next(keys), num_channels, num_channels, 3),
        })
    for s in scale_factors:
        if s in (2, 3):
            params["up"][s] = [(_conv_params(next(keys), num_channels,
                                             num_channels * s * s, 3), s)]
        elif s == 4:  # two cascaded x2 blocks
            params["up"][s] = [
                (_conv_params(next(keys), num_channels, num_channels * 4, 3), 2),
                (_conv_params(next(keys), num_channels, num_channels * 4, 3), 2),
            ]
    params["tail"] = _conv_params(next(keys), num_channels, out_channels, 3)
    return params


# -----------------------------------------------------------------------------
# MDSR forward
# -----------------------------------------------------------------------------
def mdsr_forward(params, x_nchw, scale_factor, resblock_scaling=None,
                 *, use_pallas=True):
    conv = conv2d_pallas if use_pallas else conv2d_ref
    resblock = resblock_pallas if use_pallas else resblock_ref

    x = jnp.transpose(x_nchw, (0, 2, 3, 1))  # NCHW -> NHWC

    # head (5x5, pad 2)
    hp = params["head"][scale_factor]
    x = conv(x, hp["w"], hp["b"])

    # residual blocks: each one is a single fused Pallas kernel
    # (conv1 + ReLU + conv2 + scaling + residual add).
    feat = x
    for rb in params["res"]:
        feat = resblock(feat, rb["conv1"]["w"], rb["conv1"]["b"],
                        rb["conv2"]["w"], rb["conv2"]["b"],
                        scale=resblock_scaling)

    # upsampling; the global skip (x + features) is fused into the first
    # up-conv's input load.
    for idx, (up, r) in enumerate(params["up"][scale_factor]):
        feat = conv(feat, up["w"], up["b"],
                    add_input=x if idx == 0 else None)
        feat = pixel_shuffle_nhwc(feat, r)

    # tail (3x3)
    tp = params["tail"]
    out = conv(feat, tp["w"], tp["b"])
    return jnp.transpose(out, (0, 3, 1, 2))  # NHWC -> NCHW


# -----------------------------------------------------------------------------
if __name__ == "__main__":
    # Note: module requires head out_channels == num_channels for shapes to work.
    N, in_channels, H, W = 2, 4, 16, 16
    num_channels = out_channels = 8
    num_res_blocks = 2
    scale_factors = [2, 3, 4]
    scale_factor = 2
    resblock_scaling = 0.1   # exercise the fused scaling path

    key = jax.random.PRNGKey(0)
    kx, kp = jax.random.split(key)
    x = jax.random.normal(kx, (N, in_channels, H, W), jnp.float32)  # NCHW input
    params = init_mdsr_params(kp, in_channels, out_channels, scale_factors,
                              num_channels, num_res_blocks)

    # f32 Pallas forward vs plain-JAX reference of the same forward pass.
    out = mdsr_forward(params, x, scale_factor, resblock_scaling,
                       use_pallas=True)
    out = jax.block_until_ready(out)
    assert out.shape == (N, out_channels, H * scale_factor, W * scale_factor), out.shape

    ref = mdsr_forward(params, x, scale_factor, resblock_scaling,
                       use_pallas=False)
    ref = jax.block_until_ready(ref)
    err = float(jnp.max(jnp.abs(out - ref)))
    assert err < 2e-3, err

    # bf16 activation/weight path (halved HBM/VMEM traffic; f32 accumulation).
    out_bf16 = mdsr_forward(params, x.astype(jnp.bfloat16), scale_factor,
                            resblock_scaling, use_pallas=True)
    out_bf16 = jax.block_until_ready(out_bf16)
    assert out_bf16.shape == out.shape
    err_bf16 = float(jnp.max(jnp.abs(out_bf16.astype(jnp.float32) - ref)))
    assert err_bf16 < 0.5, err_bf16

    print("KERNEL_OK")
</pallas_src>

<mosaic_0001>
module attributes {stable_mosaic.version = 11 : i64} {
  func.func @_conv2d_kernel(%arg0: i32, %arg1: memref<1x16x16x4xf32, #tpu.memory_space<vmem>>, %arg2: memref<100x8xf32, #tpu.memory_space<vmem>>, %arg3: memref<1x8xf32, #tpu.memory_space<vmem>>, %arg4: memref<1x16x16x8xf32, #tpu.memory_space<vmem>>, %arg5: memref<20x34x4xf32, #tpu.memory_space<vmem>>) attributes {dimension_semantics = [#tpu.dimension_semantics<parallel>], iteration_bounds = array<i64: 2>, scalar_prefetch = 0 : i64, scratch_operands = 1 : i64, tpu.core_type = #tpu.core_type<tc>, window_params = [{transform_indices = @transform_0, window_bounds = array<i64: 1, 16, 16, 4>}, {pipeline_mode = #tpu.pipeline_mode<synchronous>, transform_indices = @transform_1, window_bounds = array<i64: 100, 8>}, {pipeline_mode = #tpu.pipeline_mode<synchronous>, transform_indices = @transform_2, window_bounds = array<i64: 1, 8>}, {transform_indices = @transform_3, window_bounds = array<i64: 1, 16, 16, 8>}]} {
    %c0 = arith.constant 0 : index
    %c0_0 = arith.constant 0 : index
    %c0_1 = arith.constant 0 : index
    %c0_2 = arith.constant 0 : index
    %0 = vector.load %arg1[%c0, %c0_0, %c0_1, %c0_2] : memref<1x16x16x4xf32, #tpu.memory_space<vmem>>, vector<1x16x16x4xf32>
    %1 = vector.shape_cast %0 : vector<1x16x16x4xf32> to vector<16x16x4xf32>
    %cst = arith.constant 0.000000e+00 : f32
    %2 = vector.broadcast %cst : f32 to vector<20x34x4xf32>
    %c0_3 = arith.constant 0 : index
    %c0_4 = arith.constant 0 : index
    %c0_5 = arith.constant 0 : index
    %3 = vector.load %arg5[%c0_3, %c0_4, %c0_5] : memref<20x34x4xf32, #tpu.memory_space<vmem>>, vector<20x34x4xf32>
    tpu.vector_store %arg5[%c0_3, %c0_4, %c0_5], %2 {strides = array<i32>} : memref<20x34x4xf32, #tpu.memory_space<vmem>>, vector<20x34x4xf32>,
    %c2 = arith.constant 2 : index
    %c16 = arith.constant 16 : index
    %c0_6 = arith.constant 0 : index
    %4 = vector.load %arg5[%c2, %c16, %c0_6] : memref<20x34x4xf32, #tpu.memory_space<vmem>>, vector<16x16x4xf32>
    tpu.vector_store %arg5[%c2, %c16, %c0_6], %1 {strides = array<i32>} : memref<20x34x4xf32, #tpu.memory_space<vmem>>, vector<16x16x4xf32>,
    %c0_7 = arith.constant 0 : index
    %c14 = arith.constant 14 : index
    %c0_8 = arith.constant 0 : index
    %5 = vector.load %arg5[%c0_7, %c14, %c0_8] : memref<20x34x4xf32, #tpu.memory_space<vmem>>, vector<16x16x4xf32>
    %6 = vector.shape_cast %5 : vector<16x16x4xf32> to vector<256x4xf32>
    %c0_9 = arith.constant 0 : index
    %c15 = arith.constant 15 : index
    %c0_10 = arith.constant 0 : index
    %7 = vector.load %arg5[%c0_9, %c15, %c0_10] : memref<20x34x4xf32, #tpu.memory_space<vmem>>, vector<16x16x4xf32>
    %8 = vector.shape_cast %7 : vector<16x16x4xf32> to vector<256x4xf32>
    %c0_11 = arith.constant 0 : index
    %c16_12 = arith.constant 16 : index
    %c0_13 = arith.constant 0 : index
    %9 = vector.load %arg5[%c0_11, %c16_12, %c0_13] : memref<20x34x4xf32, #tpu.memory_space<vmem>>, vector<16x16x4xf32>
    %10 = vector.shape_cast %9 : vector<16x16x4xf32> to vector<256x4xf32>
    %c0_14 = arith.constant 0 : index
    %c17 = arith.constant 17 : index
    %c0_15 = arith.constant 0 : index
    %11 = vector.load %arg5[%c0_14, %c17, %c0_15] : memref<20x34x4xf32, #tpu.memory_space<vmem>>, vector<16x16x4xf32>
    %12 = vector.shape_cast %11 : vector<16x16x4xf32> to vector<256x4xf32>
    %c0_16 = arith.constant 0 : index
    %c18 = arith.constant 18 : index
    %c0_17 = arith.constant 0 : index
    %13 = vector.load %arg5[%c0_16, %c18, %c0_17] : memref<20x34x4xf32, #tpu.memory_space<vmem>>, vector<16x16x4xf32>
    %14 = vector.shape_cast %13 : vector<16x16x4xf32> to vector<256x4xf32>
    %c1 = arith.constant 1 : index
    %c14_18 = arith.constant 14 : index
    %c0_19 = arith.constant 0 : index
    %15 = vector.load %arg5[%c1, %c14_18, %c0_19] : memref<20x34x4xf32, #tpu.memory_space<vmem>>, vector<16x16x4xf32>
    %16 = vector.shape_cast %15 : vector<16x16x4xf32> to vector<256x4xf32>
    %c1_20 = arith.constant 1 : index
    %c15_21 = arith.constant 15 : index
    %c0_22 = arith.constant 0 : index
    %17 = vector.load %arg5[%c1_20, %c15_21, %c0_22] : memref<20x34x4xf32, #tpu.memory_space<vmem>>, vector<16x16x4xf32>
    %18 = vector.shape_cast %17 : vector<16x16x4xf32> to vector<256x4xf32>
    %c1_23 = arith.constant 1 : index
    %c16_24 = arith.constant 16 : index
    %c0_25 = arith.constant 0 : index
    %19 = vector.load %arg5[%c1_23, %c16_24, %c0_25] : memref<20x34x4xf32, #tpu.memory_space<vmem>>, vector<16x16x4xf32>
    %20 = vector.shape_cast %19 : vector<16x16x4xf32> to vector<256x4xf32>
    %c1_26 = arith.constant 1 : index
    %c17_27 = arith.constant 17 : index
    %c0_28 = arith.constant 0 : index
    %21 = vector.load %arg5[%c1_26, %c17_27, %c0_28] : memref<20x34x4xf32, #tpu.memory_space<vmem>>, vector<16x16x4xf32>
    %22 = vector.shape_cast %21 : vector<16x16x4xf32> to vector<256x4xf32>
    %c1_29 = arith.constant 1 : index
    %c18_30 = arith.constant 18 : index
    %c0_31 = arith.constant 0 : index
    %23 = vector.load %arg5[%c1_29, %c18_30, %c0_31] : memref<20x34x4xf32, #tpu.memory_space<vmem>>, vector<16x16x4xf32>
    %24 = vector.shape_cast %23 : vector<16x16x4xf32> to vector<256x4xf32>
    %c2_32 = arith.constant 2 : index
    %c14_33 = arith.constant 14 : index
    %c0_34 = arith.constant 0 : index
    %25 = vector.load %arg5[%c2_32, %c14_33, %c0_34] : memref<20x34x4xf32, #tpu.memory_space<vmem>>, vector<16x16x4xf32>
    %26 = vector.shape_cast %25 : vector<16x16x4xf32> to vector<256x4xf32>
    %c2_35 = arith.constant 2 : index
    %c15_36 = arith.constant 15 : index
    %c0_37 = arith.constant 0 : index
    %27 = vector.load %arg5[%c2_35, %c15_36, %c0_37] : memref<20x34x4xf32, #tpu.memory_space<vmem>>, vector<16x16x4xf32>
    %28 = vector.shape_cast %27 : vector<16x16x4xf32> to vector<256x4xf32>
    %c2_38 = arith.constant 2 : index
    %c16_39 = arith.constant 16 : index
    %c0_40 = arith.constant 0 : index
    %29 = vector.load %arg5[%c2_38, %c16_39, %c0_40] : memref<20x34x4xf32, #tpu.memory_space<vmem>>, vector<16x16x4xf32>
    %30 = vector.shape_cast %29 : vector<16x16x4xf32> to vector<256x4xf32>
    %c2_41 = arith.constant 2 : index
    %c17_42 = arith.constant 17 : index
    %c0_43 = arith.constant 0 : index
    %31 = vector.load %arg5[%c2_41, %c17_42, %c0_43] : memref<20x34x4xf32, #tpu.memory_space<vmem>>, vector<16x16x4xf32>
    %32 = vector.shape_cast %31 : vector<16x16x4xf32> to vector<256x4xf32>
    %c2_44 = arith.constant 2 : index
    %c18_45 = arith.constant 18 : index
    %c0_46 = arith.constant 0 : index
    %33 = vector.load %arg5[%c2_44, %c18_45, %c0_46] : memref<20x34x4xf32, #tpu.memory_space<vmem>>, vector<16x16x4xf32>
    %34 = vector.shape_cast %33 : vector<16x16x4xf32> to vector<256x4xf32>
    %c3 = arith.constant 3 : index
    %c14_47 = arith.constant 14 : index
    %c0_48 = arith.constant 0 : index
    %35 = vector.load %arg5[%c3, %c14_47, %c0_48] : memref<20x34x4xf32, #tpu.memory_space<vmem>>, vector<16x16x4xf32>
    %36 = vector.shape_cast %35 : vector<16x16x4xf32> to vector<256x4xf32>
    %c3_49 = arith.constant 3 : index
    %c15_50 = arith.constant 15 : index
    %c0_51 = arith.constant 0 : index
    %37 = vector.load %arg5[%c3_49, %c15_50, %c0_51] : memref<20x34x4xf32, #tpu.memory_space<vmem>>, vector<16x16x4xf32>
    %38 = vector.shape_cast %37 : vector<16x16x4xf32> to vector<256x4xf32>
    %c3_52 = arith.constant 3 : index
    %c16_53 = arith.constant 16 : index
    %c0_54 = arith.constant 0 : index
    %39 = vector.load %arg5[%c3_52, %c16_53, %c0_54] : memref<20x34x4xf32, #tpu.memory_space<vmem>>, vector<16x16x4xf32>
    %40 = vector.shape_cast %39 : vector<16x16x4xf32> to vector<256x4xf32>
    %c3_55 = arith.constant 3 : index
    %c17_56 = arith.constant 17 : index
    %c0_57 = arith.constant 0 : index
    %41 = vector.load %arg5[%c3_55, %c17_56, %c0_57] : memref<20x34x4xf32, #tpu.memory_space<vmem>>, vector<16x16x4xf32>
    %42 = vector.shape_cast %41 : vector<16x16x4xf32> to vector<256x4xf32>
    %c3_58 = arith.constant 3 : index
    %c18_59 = arith.constant 18 : index
    %c0_60 = arith.constant 0 : index
    %43 = vector.load %arg5[%c3_58, %c18_59, %c0_60] : memref<20x34x4xf32, #tpu.memory_space<vmem>>, vector<16x16x4xf32>
    %44 = vector.shape_cast %43 : vector<16x16x4xf32> to vector<256x4xf32>
    %c4 = arith.constant 4 : index
    %c14_61 = arith.constant 14 : index
    %c0_62 = arith.constant 0 : index
    %45 = vector.load %arg5[%c4, %c14_61, %c0_62] : memref<20x34x4xf32, #tpu.memory_space<vmem>>, vector<16x16x4xf32>
    %46 = vector.shape_cast %45 : vector<16x16x4xf32> to vector<256x4xf32>
    %c4_63 = arith.constant 4 : index
    %c15_64 = arith.constant 15 : index
    %c0_65 = arith.constant 0 : index
    %47 = vector.load %arg5[%c4_63, %c15_64, %c0_65] : memref<20x34x4xf32, #tpu.memory_space<vmem>>, vector<16x16x4xf32>
    %48 = vector.shape_cast %47 : vector<16x16x4xf32> to vector<256x4xf32>
    %c4_66 = arith.constant 4 : index
    %c16_67 = arith.constant 16 : index
    %c0_68 = arith.constant 0 : index
    %49 = vector.load %arg5[%c4_66, %c16_67, %c0_68] : memref<20x34x4xf32, #tpu.memory_space<vmem>>, vector<16x16x4xf32>
    %50 = vector.shape_cast %49 : vector<16x16x4xf32> to vector<256x4xf32>
    %c4_69 = arith.constant 4 : index
    %c17_70 = arith.constant 17 : index
    %c0_71 = arith.constant 0 : index
    %51 = vector.load %arg5[%c4_69, %c17_70, %c0_71] : memref<20x34x4xf32, #tpu.memory_space<vmem>>, vector<16x16x4xf32>
    %52 = vector.shape_cast %51 : vector<16x16x4xf32> to vector<256x4xf32>
    %c4_72 = arith.constant 4 : index
    %c18_73 = arith.constant 18 : index
    %c0_74 = arith.constant 0 : index
    %53 = vector.load %arg5[%c4_72, %c18_73, %c0_74] : memref<20x34x4xf32, #tpu.memory_space<vmem>>, vector<16x16x4xf32>
    %54 = vector.shape_cast %53 : vector<16x16x4xf32> to vector<256x4xf32>
    %55 = tpu.concatenate %6, %8, %10, %12, %14, %16, %18, %20, %22, %24, %26, %28, %30, %32, %34, %36 in 1 : vector<256x4xf32>, vector<256x4xf32>, vector<256x4xf32>, vector<256x4xf32>, vector<256x4xf32>, vector<256x4xf32>, vector<256x4xf32>, vector<256x4xf32>, vector<256x4xf32>, vector<256x4xf32>, vector<256x4xf32>, vector<256x4xf32>, vector<256x4xf32>, vector<256x4xf32>, vector<256x4xf32>, vector<256x4xf32> -> vector<256x64xf32>
    %56 = tpu.concatenate %38, %40, %42, %44, %46, %48, %50, %52, %54 in 1 : vector<256x4xf32>, vector<256x4xf32>, vector<256x4xf32>, vector<256x4xf32>, vector<256x4xf32>, vector<256x4xf32>, vector<256x4xf32>, vector<256x4xf32>, vector<256x4xf32> -> vector<256x36xf32>
    %57 = tpu.concatenate %55, %56 in 1 : vector<256x64xf32>, vector<256x36xf32> -> vector<256x100xf32>
    %c0_75 = arith.constant 0 : index
    %c0_76 = arith.constant 0 : index
    %58 = vector.load %arg2[%c0_75, %c0_76] : memref<100x8xf32, #tpu.memory_space<vmem>>, vector<100x8xf32>
    %cst_77 = arith.constant dense<0.000000e+00> : vector<256x8xf32>
    %59 = tpu.matmul %57, %58, %cst_77 {dimension_numbers = #tpu.dot_dimension_numbers<[1], [0], [0], [1], [0, 0, 1, 1], [], []>} : vector<256x100xf32>, vector<100x8xf32>, vector<256x8xf32> -> vector<256x8xf32>
    %c0_78 = arith.constant 0 : index
    %c0_79 = arith.constant 0 : index
    %60 = vector.load %arg3[%c0_78, %c0_79] : memref<1x8xf32, #tpu.memory_space<vmem>>, vector<1x8xf32>
    %61 = vector.broadcast %60 : vector<1x8xf32> to vector<256x8xf32>
    %62 = arith.addf %59, %61 : vector<256x8xf32>
    %63 = vector.shape_cast %62 : vector<256x8xf32> to vector<1x16x16x8xf32>
    %c0_80 = arith.constant 0 : index
    %c0_81 = arith.constant 0 : index
    %c0_82 = arith.constant 0 : index
    %c0_83 = arith.constant 0 : index
    %64 = vector.load %arg4[%c0_80, %c0_81, %c0_82, %c0_83] : memref<1x16x16x8xf32, #tpu.memory_space<vmem>>, vector<1x16x16x8xf32>
    tpu.vector_store %arg4[%c0_80, %c0_81, %c0_82, %c0_83], %63 {strides = array<i32>} : memref<1x16x16x8xf32, #tpu.memory_space<vmem>>, vector<1x16x16x8xf32>,
    return
  }
  func.func @transform_0(%arg0: i32) -> (i32, i32, i32, i32) {
    %c0_i32 = arith.constant 0 : i32
    %c0_i32_0 = arith.constant 0 : i32
    %c0_i32_1 = arith.constant 0 : i32
    %c0_i32_2 = arith.constant 0 : i32
    return %arg0, %c0_i32, %c0_i32_0, %c0_i32_1 : i32, i32, i32, i32
  }
  func.func @transform_1(%arg0: i32) -> (i32, i32) {
    %c0_i32 = arith.constant 0 : i32
    %c0_i32_0 = arith.constant 0 : i32
    %c0_i32_1 = arith.constant 0 : i32
    return %c0_i32, %c0_i32_0 : i32, i32
  }
  func.func @transform_2(%arg0: i32) -> (i32, i32) {
    %c0_i32 = arith.constant 0 : i32
    %c0_i32_0 = arith.constant 0 : i32
    %c0_i32_1 = arith.constant 0 : i32
    return %c0_i32, %c0_i32_0 : i32, i32
  }
  func.func @transform_3(%arg0: i32) -> (i32, i32, i32, i32) {
    %c0_i32 = arith.constant 0 : i32
    %c0_i32_0 = arith.constant 0 : i32
    %c0_i32_1 = arith.constant 0 : i32
    %c0_i32_2 = arith.constant 0 : i32
    return %arg0, %c0_i32, %c0_i32_0, %c0_i32_1 : i32, i32, i32, i32
  }
}

</mosaic_0001>

<llo_original>
// kernel: tpu_custom_call.1
$region0: #{tpu_custom_call.1}
  #allocation0 [shape = 'u32[]', space=smem, size = 0x4, offset = 0x4, fixed_abs, tag = 'smem constant byte address 0x4 - core index']
  #allocation1 [shape = 'u32[72,128]{1,0:T(1,128)}', space=vmem, size = 0x9000, scoped, tag = 'internal scratch']
  #allocation2 [shape = 'f32[20,34,4]{2,1,0:T(8,128)}', space=vmem, size = 0x64000, scoped, tag = 'scratch operand']
  %s0 = inlined_call_operand.vmem [shape: f32[2,16,16,4], index: 0, kind: input, shape index: {}]
  %s1 = inlined_call_operand.vmem [shape: f32[100,8], index: 1, kind: input, shape index: {}]
  %s2 = inlined_call_operand.vmem [shape: f32[1,8], index: 2, kind: input, shape index: {}]
  %s3 = inlined_call_operand.vmem [shape: f32[2,16,16,8], index: 3, kind: output, shape index: {}]
  %s4 = sld [smem:[#allocation0]]
  $region45: #{tpu_custom_call.1} parent=0
    _
  %s6 = ssub.s32 1, %s4
  %s7 = scalar_select 0, %s6, %s4
  loop: start=0, step=1, limit=4
  $region2: #{tpu_custom_call.1} parent=0 // loop_pre_header
    _
  $region3: #{tpu_custom_call.1} parent=0 // loop_header
    %s9 = sphi 0, %s13
    %p10 = scmp.ge.s32.totalorder %s9, 4
    %s19 = sphi 0, %s21
    %s22 = sphi 0, %s19
    %s23 = sphi 0, %s22
    %s39 = sphi 0, %s23
    %s43 = sphi 0, %s43
    %s45 = sphi 0, %s43
    %s46 = sphi 0, %s45
    %s60 = sphi 0, %s46
    %s64 = sphi 0, %s64
    %s66 = sphi 0, %s64
    %s67 = sphi 0, %s66
    %s81 = sphi 0, %s67
    %s87 = sphi 0, %s89
    %s90 = sphi 0, %s87
    %s91 = sphi 0, %s90
    %s107 = sphi 0, %s91
  $region4: #{tpu_custom_call.1} parent=0 // loop_header_branch
    %12 = sbr.rel (%p10) target = $region8
  $region5: #{tpu_custom_call.1} parent=0 // loop_body
    %s14 = ssub.s32 %s9, 1
    %s15 = ssub.s32 %s9, 2
    %s16 = sadd.s32 %s9, 1
    %s17 = ssub.s32 %s9, %s16
    %p18 = scmp.eq.s32.totalorder %s17, 0
    %s20 = sadd.s32 %s19, 1
    %s21 = scalar_select %p18, %s19, %s20
    %p24 = pneg %p18
    %p25 = scmp.eq.s32.totalorder %s9, 1
    %p26 = por %p24, %p25
    %p27 = scmp.ne.s32.totalorder %s19, %s22
    %p28 = scmp.eq.s32.totalorder %s9, 0
    %p29 = por %p27, %p28
    %p30 = scmp.ne.s32.totalorder %s19, %s22
    %p31 = scmp.eq.s32.totalorder %s14, 1
    %p32 = por %p30, %p31
    %p33 = scmp.ne.s32.totalorder %s22, %s23
    %p34 = scmp.eq.s32.totalorder %s14, 0
    %p35 = por %p33, %p34
    %p36 = scmp.ne.s32.totalorder %s22, %s23
    %p37 = scmp.eq.s32.totalorder %s15, 1
    %p38 = por %p36, %p37
    %p40 = scmp.ne.s32.totalorder %s23, %s39
    %p41 = scmp.eq.s32.totalorder %s15, 0
    %p42 = por %p40, %p41
    %s44 = sadd.s32 %s43, 1
    %p47 = scmp.eq.s32.totalorder %s9, 1
    %p48 = scmp.ne.s32.totalorder %s43, %s45
    %p49 = scmp.eq.s32.totalorder %s9, 0
    %p50 = por %p48, %p49
    %p51 = scmp.ne.s32.totalorder %s43, %s45
    %p52 = scmp.eq.s32.totalorder %s14, 1
    %p53 = por %p51, %p52
    %p54 = scmp.ne.s32.totalorder %s45, %s46
    %p55 = scmp.eq.s32.totalorder %s14, 0
    %p56 = por %p54, %p55
    %p57 = scmp.ne.s32.totalorder %s45, %s46
    %p58 = scmp.eq.s32.totalorder %s15, 1
    %p59 = por %p57, %p58
    %p61 = scmp.ne.s32.totalorder %s46, %s60
    %p62 = scmp.eq.s32.totalorder %s15, 0
    %p63 = por %p61, %p62
    %s65 = sadd.s32 %s64, 1
    %p68 = scmp.eq.s32.totalorder %s9, 1
    %p69 = scmp.ne.s32.totalorder %s64, %s66
    %p70 = scmp.eq.s32.totalorder %s9, 0
    %p71 = por %p69, %p70
    %p72 = scmp.ne.s32.totalorder %s64, %s66
    %p73 = scmp.eq.s32.totalorder %s14, 1
    %p74 = por %p72, %p73
    %p75 = scmp.ne.s32.totalorder %s66, %s67
    %p76 = scmp.eq.s32.totalorder %s14, 0
    %p77 = por %p75, %p76
    %p78 = scmp.ne.s32.totalorder %s66, %s67
    %p79 = scmp.eq.s32.totalorder %s15, 1
    %p80 = por %p78, %p79
    %p82 = scmp.ne.s32.totalorder %s67, %s81
    %p83 = scmp.eq.s32.totalorder %s15, 0
    %p84 = por %p82, %p83
    %s85 = ssub.s32 %s9, %s16
    %p86 = scmp.eq.s32.totalorder %s85, 0
    %s88 = sadd.s32 %s87, 1
    %s89 = scalar_select %p86, %s87, %s88
    %p92 = pneg %p86
    %p93 = scmp.eq.s32.totalorder %s9, 1
    %p94 = por %p92, %p93
    %p95 = scmp.ne.s32.totalorder %s87, %s90
    %p96 = scmp.eq.s32.totalorder %s9, 0
    %p97 = por %p95, %p96
    %p98 = scmp.ne.s32.totalorder %s87, %s90
    %p99 = scmp.eq.s32.totalorder %s14, 1
    %p100 = por %p98, %p99
    %p101 = scmp.ne.s32.totalorder %s90, %s91
    %p102 = scmp.eq.s32.totalorder %s14, 0
    %p103 = por %p101, %p102
    %p104 = scmp.ne.s32.totalorder %s90, %s91
    %p105 = scmp.eq.s32.totalorder %s15, 1
    %p106 = por %p104, %p105
    %p108 = scmp.ne.s32.totalorder %s91, %s107
    %p109 = scmp.eq.s32.totalorder %s15, 0
    %p110 = por %p108, %p109
    %p111 = scmp.le.s32.totalorder 1, %s9
    %p112 = scmp.lt.s32.totalorder %s9, 3
    %p113 = pnand %p111, %p112
    %p114 = pneg %p113
    // Predicated region
    $region9: #{tpu_custom_call.1} parent=5 // pred_check
      _
    $region10: #{tpu_custom_call.1} parent=5 // pred_check_branch
      %116 = sbr.rel (%p113) target = $region12
    $region11: #{tpu_custom_call.1} parent=5 // pred_region
      %s117 = ssub.s32 %s9, 1
      // Predicated region
      $region13: #{tpu_custom_call.1} parent=11 // pred_check
        %p118 = pneg %p56
      $region14: #{tpu_custom_call.1} parent=11 // pred_check_branch
        %120 = sbr.rel (%p118) target = $region16
      $region15: #{tpu_custom_call.1} parent=11 // pred_region
        _
      $region16: #{tpu_custom_call.1} parent=11 // pred_fallthru
        _
      // Predicated region
      $region17: #{tpu_custom_call.1} parent=11 // pred_check
        %p121 = pneg %p77
      $region18: #{tpu_custom_call.1} parent=11 // pred_check_branch
        %123 = sbr.rel (%p121) target = $region20
      $region19: #{tpu_custom_call.1} parent=11 // pred_region
        _
      $region20: #{tpu_custom_call.1} parent=11 // pred_fallthru
        _
    $region12: #{tpu_custom_call.1} parent=5 // pred_fallthru
      _
    %p124 = scmp.lt.s32.totalorder %s9, 2
    // Predicated region
    $region21: #{tpu_custom_call.1} parent=5 // pred_check
      %p125 = pneg %p124
    $region22: #{tpu_custom_call.1} parent=5 // pred_check_branch
      %127 = sbr.rel (%p125) target = $region24
    $region23: #{tpu_custom_call.1} parent=5 // pred_region
      // Predicated region
      $region25: #{tpu_custom_call.1} parent=23 // pred_check
        %p128 = pneg %p29
      $region26: #{tpu_custom_call.1} parent=23 // pred_check_branch
        %130 = sbr.rel (%p128) target = $region28
      $region27: #{tpu_custom_call.1} parent=23 // pred_region
        %p131 = scmp.lt.s32.totalorder %s9, 1
        %s132 = scalar_select %p131, %s9, 1
        %s133 = smul.addr %s132, 32
        %s134 = smul.addr %s133, 8
        %s135 = scalar_lea.vmem %s0, %s134
      $region28: #{tpu_custom_call.1} parent=23 // pred_fallthru
        _
    $region24: #{tpu_custom_call.1} parent=5 // pred_fallthru
      _
    %p136 = scmp.le.s32.totalorder 1, %s9
    %p137 = scmp.lt.s32.totalorder %s9, 3
    %p138 = pnand %p136, %p137
    %p139 = pneg %p138
    // Predicated region
    $region29: #{tpu_custom_call.1} parent=5 // pred_check
      _
    $region30: #{tpu_custom_call.1} parent=5 // pred_check_branch
      %141 = sbr.rel (%p138) target = $region32
    $region31: #{tpu_custom_call.1} parent=5 // pred_region
      %s142 = ssub.s32 %s9, 1
      %p143 = scmp.lt.s32.totalorder %s14, 1
      %s144 = scalar_select %p143, %s14, 1
      %s145 = smul.addr %s144, 32
      %s146 = smul.addr %s145, 8
      %s147 = scalar_lea.vmem %s0, %s146
      %p148 = pneg %p35
      %p149 = pneg %p32
      %p150 = pneg %p56
      %p151 = pneg %p53
      %p152 = pneg %p77
      %p153 = pneg %p74
      %p154 = pneg %p103
      %p155 = pneg %p100
      %p156 = scmp.lt.s32.totalorder %s14, 1
      %s157 = scalar_select %p156, %s14, 1
      %s158 = smul.addr %s157, 32
      %s159 = smul.addr %s158, 8
      %s160 = scalar_lea.vmem %s3, %s159
      %p161 = scmp.lt.s32.totalorder %s14, 1
      %s162 = scalar_select %p161, %s14, 1
      %s163 = smul.addr %s162, 32
      %s164 = smul.addr %s163, 8
      %s165 = scalar_lea.vmem %s0, %s164
      %p166 = scmp.lt.s32.totalorder %s14, 1
      %s167 = scalar_select %p166, %s14, 1
      %s168 = smul.addr %s167, 32
      %s169 = smul.addr %s168, 8
      %s170 = scalar_lea.vmem %s3, %s169
      %v171 = vld [vmem:[%s165] sm:$0xff]
      %v172 = vld [vmem:[%s165 + $0x8] sm:$0xff]
      %v173 = vld [vmem:[%s165 + $0x10] sm:$0xff]
      %v174 = vld [vmem:[%s165 + $0x18] sm:$0xff]
      %v175 = vld [vmem:[%s165 + $0x20] sm:$0xff]
      %v176 = vld [vmem:[%s165 + $0x28] sm:$0xff]
      %v177 = vld [vmem:[%s165 + $0x30] sm:$0xff]
      %v178 = vld [vmem:[%s165 + $0x38] sm:$0xff]
      %v179 = vld [vmem:[%s165 + $0x40] sm:$0xff]
      %v180 = vld [vmem:[%s165 + $0x48] sm:$0xff]
      %v181 = vld [vmem:[%s165 + $0x50] sm:$0xff]
      %v182 = vld [vmem:[%s165 + $0x58] sm:$0xff]
      %v183 = vld [vmem:[%s165 + $0x60] sm:$0xff]
      %v184 = vld [vmem:[%s165 + $0x68] sm:$0xff]
      %v185 = vld [vmem:[%s165 + $0x70] sm:$0xff]
      %v186 = vld [vmem:[%s165 + $0x78] sm:$0xff]
      %v187 = vld [vmem:[%s165 + $0x80] sm:$0xff]
      %v188 = vld [vmem:[%s165 + $0x88] sm:$0xff]
      %v189 = vld [vmem:[%s165 + $0x90] sm:$0xff]
      %v190 = vld [vmem:[%s165 + $0x98] sm:$0xff]
      %v191 = vld [vmem:[%s165 + $0xa0] sm:$0xff]
      %v192 = vld [vmem:[%s165 + $0xa8] sm:$0xff]
      %v193 = vld [vmem:[%s165 + $0xb0] sm:$0xff]
      %v194 = vld [vmem:[%s165 + $0xb8] sm:$0xff]
      %v195 = vld [vmem:[%s165 + $0xc0] sm:$0xff]
      %v196 = vld [vmem:[%s165 + $0xc8] sm:$0xff]
      %v197 = vld [vmem:[%s165 + $0xd0] sm:$0xff]
      %v198 = vld [vmem:[%s165 + $0xd8] sm:$0xff]
      %v199 = vld [vmem:[%s165 + $0xe0] sm:$0xff]
      %v200 = vld [vmem:[%s165 + $0xe8] sm:$0xff]
      %v201 = vld [vmem:[%s165 + $0xf0] sm:$0xff]
      %v202 = vld [vmem:[%s165 + $0xf8] sm:$0xff]
      %vm203 = vcmask 31744
      %204 = vst.msk [vmem:[#allocation2] sm:$0xff] %vm203, 0.0
      %205 = vst.msk [vmem:[#allocation2 + $0x8] sm:$0xff] %vm203, 0.0
      %206 = vst.msk [vmem:[#allocation2 + $0x10] sm:$0xff] %vm203, 0.0
      %207 = vst.msk [vmem:[#allocation2 + $0x18] sm:$0xff] %vm203, 0.0
      %vm208 = vcmask 25600
      %209 = vst.msk [vmem:[#allocation2 + $0x20] sm:$0x3] %vm208, 0.0
      %210 = vst.msk [vmem:[#allocation2 + $0x28] sm:$0xff] %vm203, 0.0
      %211 = vst.msk [vmem:[#allocation2 + $0x30] sm:$0xff] %vm203, 0.0
      %212 = vst.msk [vmem:[#allocation2 + $0x38] sm:$0xff] %vm203, 0.0
      %213 = vst.msk [vmem:[#allocation2 + $0x40] sm:$0xff] %vm203, 0.0
      %214 = vst.msk [vmem:[#allocation2 + $0x48] sm:$0x3] %vm208, 0.0
      %215 = vst.msk [vmem:[#allocation2 + $0x50] sm:$0xff] %vm203, 0.0
      %216 = vst.msk [vmem:[#allocation2 + $0x58] sm:$0xff] %vm203, 0.0
      %217 = vst.msk [vmem:[#allocation2 + $0x60] sm:$0xff] %vm203, 0.0
      %218 = vst.msk [vmem:[#allocation2 + $0x68] sm:$0xff] %vm203, 0.0
      %219 = vst.msk [vmem:[#allocation2 + $0x70] sm:$0x3] %vm208, 0.0
      %220 = vst.msk [vmem:[#allocation2 + $0x78] sm:$0xff] %vm203, 0.0
      %221 = vst.msk [vmem:[#allocation2 + $0x80] sm:$0xff] %vm203, 0.0
      %222 = vst.msk [vmem:[#allocation2 + $0x88] sm:$0xff] %vm203, 0.0
      %223 = vst.msk [vmem:[#allocation2 + $0x90] sm:$0xff] %vm203, 0.0
      %224 = vst.msk [vmem:[#allocation2 + $0x98] sm:$0x3] %vm208, 0.0
      %225 = vst.msk [vmem:[#allocation2 + $0xa0] sm:$0xff] %vm203, 0.0
      %226 = vst.msk [vmem:[#allocation2 + $0xa8] sm:$0xff] %vm203, 0.0
      %227 = vst.msk [vmem:[#allocation2 + $0xb0] sm:$0xff] %vm203, 0.0
      %228 = vst.msk [vmem:[#allocation2 + $0xb8] sm:$0xff] %vm203, 0.0
      %229 = vst.msk [vmem:[#allocation2 + $0xc0] sm:$0x3] %vm208, 0.0
      %230 = vst.msk [vmem:[#allocation2 + $0xc8] sm:$0xff] %vm203, 0.0
      %231 = vst.msk [vmem:[#allocation2 + $0xd0] sm:$0xff] %vm203, 0.0
      %232 = vst.msk [vmem:[#allocation2 + $0xd8] sm:$0xff] %vm203, 0.0
      %233 = vst.msk [vmem:[#allocation2 + $0xe0] sm:$0xff] %vm203, 0.0
      %234 = vst.msk [vmem:[#allocation2 + $0xe8] sm:$0x3] %vm208, 0.0
      %235 = vst.msk [vmem:[#allocation2 + $0xf0] sm:$0xff] %vm203, 0.0
      %236 = vst.msk [vmem:[#allocation2 + $0xf8] sm:$0xff] %vm203, 0.0
      %237 = vst.msk [vmem:[#allocation2 + $0x100] sm:$0xff] %vm203, 0.0
      %238 = vst.msk [vmem:[#allocation2 + $0x108] sm:$0xff] %vm203, 0.0
      %239 = vst.msk [vmem:[#allocation2 + $0x110] sm:$0x3] %vm208, 0.0
      %240 = vst.msk [vmem:[#allocation2 + $0x118] sm:$0xff] %vm203, 0.0
      %241 = vst.msk [vmem:[#allocation2 + $0x120] sm:$0xff] %vm203, 0.0
      %242 = vst.msk [vmem:[#allocation2 + $0x128] sm:$0xff] %vm203, 0.0
      %243 = vst.msk [vmem:[#allocation2 + $0x130] sm:$0xff] %vm203, 0.0
      %244 = vst.msk [vmem:[#allocation2 + $0x138] sm:$0x3] %vm208, 0.0
      %245 = vst.msk [vmem:[#allocation2 + $0x140] sm:$0xff] %vm203, 0.0
      %246 = vst.msk [vmem:[#allocation2 + $0x148] sm:$0xff] %vm203, 0.0
      %247 = vst.msk [vmem:[#allocation2 + $0x150] sm:$0xff] %vm203, 0.0
      %248 = vst.msk [vmem:[#allocation2 + $0x158] sm:$0xff] %vm203, 0.0
      %249 = vst.msk [vmem:[#allocation2 + $0x160] sm:$0x3] %vm208, 0.0
      %250 = vst.msk [vmem:[#allocation2 + $0x168] sm:$0xff] %vm203, 0.0
      %251 = vst.msk [vmem:[#allocation2 + $0x170] sm:$0xff] %vm203, 0.0
      %252 = vst.msk [vmem:[#allocation2 + $0x178] sm:$0xff] %vm203, 0.0
      %253 = vst.msk [vmem:[#allocation2 + $0x180] sm:$0xff] %vm203, 0.0
      %254 = vst.msk [vmem:[#allocation2 + $0x188] sm:$0x3] %vm208, 0.0
      %255 = vst.msk [vmem:[#allocation2 + $0x190] sm:$0xff] %vm203, 0.0
      %256 = vst.msk [vmem:[#allocation2 + $0x198] sm:$0xff] %vm203, 0.0
      %257 = vst.msk [vmem:[#allocation2 + $0x1a0] sm:$0xff] %vm203, 0.0
      %258 = vst.msk [vmem:[#allocation2 + $0x1a8] sm:$0xff] %vm203, 0.0
      %259 = vst.msk [vmem:[#allocation2 + $0x1b0] sm:$0x3] %vm208, 0.0
      %260 = vst.msk [vmem:[#allocation2 + $0x1b8] sm:$0xff] %vm203, 0.0
      %261 = vst.msk [vmem:[#allocation2 + $0x1c0] sm:$0xff] %vm203, 0.0
      %262 = vst.msk [vmem:[#allocation2 + $0x1c8] sm:$0xff] %vm203, 0.0
      %263 = vst.msk [vmem:[#allocation2 + $0x1d0] sm:$0xff] %vm203, 0.0
      %264 = vst.msk [vmem:[#allocation2 + $0x1d8] sm:$0x3] %vm208, 0.0
      %265 = vst.msk [vmem:[#allocation2 + $0x1e0] sm:$0xff] %vm203, 0.0
      %266 = vst.msk [vmem:[#allocation2 + $0x1e8] sm:$0xff] %vm203, 0.0
      %267 = vst.msk [vmem:[#allocation2 + $0x1f0] sm:$0xff] %vm203, 0.0
      %268 = vst.msk [vmem:[#allocation2 + $0x1f8] sm:$0xff] %vm203, 0.0
      %269 = vst.msk [vmem:[#allocation2 + $0x200] sm:$0x3] %vm208, 0.0
      %270 = vst.msk [vmem:[#allocation2 + $0x208] sm:$0xff] %vm203, 0.0
      %271 = vst.msk [vmem:[#allocation2 + $0x210] sm:$0xff] %vm203, 0.0
      %272 = vst.msk [vmem:[#allocation2 + $0x218] sm:$0xff] %vm203, 0.0
      %273 = vst.msk [vmem:[#allocation2 + $0x220] sm:$0xff] %vm203, 0.0
      %274 = vst.msk [vmem:[#allocation2 + $0x228] sm:$0x3] %vm208, 0.0
      %275 = vst.msk [vmem:[#allocation2 + $0x230] sm:$0xff] %vm203, 0.0
      %276 = vst.msk [vmem:[#allocation2 + $0x238] sm:$0xff] %vm203, 0.0
      %277 = vst.msk [vmem:[#allocation2 + $0x240] sm:$0xff] %vm203, 0.0
      %278 = vst.msk [vmem:[#allocation2 + $0x248] sm:$0xff] %vm203, 0.0
      %279 = vst.msk [vmem:[#allocation2 + $0x250] sm:$0x3] %vm208, 0.0
      %280 = vst.msk [vmem:[#allocation2 + $0x258] sm:$0xff] %vm203, 0.0
      %281 = vst.msk [vmem:[#allocation2 + $0x260] sm:$0xff] %vm203, 0.0
      %282 = vst.msk [vmem:[#allocation2 + $0x268] sm:$0xff] %vm203, 0.0
      %283 = vst.msk [vmem:[#allocation2 + $0x270] sm:$0xff] %vm203, 0.0
      %284 = vst.msk [vmem:[#allocation2 + $0x278] sm:$0x3] %vm208, 0.0
      %285 = vst.msk [vmem:[#allocation2 + $0x280] sm:$0xff] %vm203, 0.0
      %286 = vst.msk [vmem:[#allocation2 + $0x288] sm:$0xff] %vm203, 0.0
      %287 = vst.msk [vmem:[#allocation2 + $0x290] sm:$0xff] %vm203, 0.0
      %288 = vst.msk [vmem:[#allocation2 + $0x298] sm:$0xff] %vm203, 0.0
      %289 = vst.msk [vmem:[#allocation2 + $0x2a0] sm:$0x3] %vm208, 0.0
      %290 = vst.msk [vmem:[#allocation2 + $0x2a8] sm:$0xff] %vm203, 0.0
      %291 = vst.msk [vmem:[#allocation2 + $0x2b0] sm:$0xff] %vm203, 0.0
      %292 = vst.msk [vmem:[#allocation2 + $0x2b8] sm:$0xff] %vm203, 0.0
      %293 = vst.msk [vmem:[#allocation2 + $0x2c0] sm:$0xff] %vm203, 0.0
      %294 = vst.msk [vmem:[#allocation2 + $0x2c8] sm:$0x3] %vm208, 0.0
      %295 = vst.msk [vmem:[#allocation2 + $0x2d0] sm:$0xff] %vm203, 0.0
      %296 = vst.msk [vmem:[#allocation2 + $0x2d8] sm:$0xff] %vm203, 0.0
      %297 = vst.msk [vmem:[#allocation2 + $0x2e0] sm:$0xff] %vm203, 0.0
      %298 = vst.msk [vmem:[#allocation2 + $0x2e8] sm:$0xff] %vm203, 0.0
      %299 = vst.msk [vmem:[#allocation2 + $0x2f0] sm:$0x3] %vm208, 0.0
      %300 = vst.msk [vmem:[#allocation2 + $0x2f8] sm:$0xff] %vm203, 0.0
      %301 = vst.msk [vmem:[#allocation2 + $0x300] sm:$0xff] %vm203, 0.0
      %302 = vst.msk [vmem:[#allocation2 + $0x308] sm:$0xff] %vm203, 0.0
      %303 = vst.msk [vmem:[#allocation2 + $0x310] sm:$0xff] %vm203, 0.0
      %304 = vst.msk [vmem:[#allocation2 + $0x318] sm:$0x3] %vm208, 0.0
      %s305 = scalar_lea.vmem [#allocation2], 80
      %306 = vst.msk [vmem:[%s305 + $0x10] sm:$0xff] %vm203, %v171
      %307 = vst.msk [vmem:[%s305 + $0x18] sm:$0xff] %vm203, %v172
      %308 = vst.msk [vmem:[%s305 + $0x38] sm:$0xff] %vm203, %v173
      %309 = vst.msk [vmem:[%s305 + $0x40] sm:$0xff] %vm203, %v174
      %310 = vst.msk [vmem:[%s305 + $0x60] sm:$0xff] %vm203, %v175
      %311 = vst.msk [vmem:[%s305 + $0x68] sm:$0xff] %vm203, %v176
      %312 = vst.msk [vmem:[%s305 + $0x88] sm:$0xff] %vm203, %v177
      %313 = vst.msk [vmem:[%s305 + $0x90] sm:$0xff] %vm203, %v178
      %314 = vst.msk [vmem:[%s305 + $0xb0] sm:$0xff] %vm203, %v179
      %315 = vst.msk [vmem:[%s305 + $0xb8] sm:$0xff] %vm203, %v180
      %316 = vst.msk [vmem:[%s305 + $0xd8] sm:$0xff] %vm203, %v181
      %317 = vst.msk [vmem:[%s305 + $0xe0] sm:$0xff] %vm203, %v182
      %318 = vst.msk [vmem:[%s305 + $0x100] sm:$0xff] %vm203, %v183
      %319 = vst.msk [vmem:[%s305 + $0x108] sm:$0xff] %vm203, %v184
      %320 = vst.msk [vmem:[%s305 + $0x128] sm:$0xff] %vm203, %v185
      %321 = vst.msk [vmem:[%s305 + $0x130] sm:$0xff] %vm203, %v186
      %322 = vst.msk [vmem:[%s305 + $0x150] sm:$0xff] %vm203, %v187
      %323 = vst.msk [vmem:[%s305 + $0x158] sm:$0xff] %vm203, %v188
      %324 = vst.msk [vmem:[%s305 + $0x178] sm:$0xff] %vm203, %v189
      %325 = vst.msk [vmem:[%s305 + $0x180] sm:$0xff] %vm203, %v190
      %326 = vst.msk [vmem:[%s305 + $0x1a0] sm:$0xff] %vm203, %v191
      %327 = vst.msk [vmem:[%s305 + $0x1a8] sm:$0xff] %vm203, %v192
      %328 = vst.msk [vmem:[%s305 + $0x1c8] sm:$0xff] %vm203, %v193
      %329 = vst.msk [vmem:[%s305 + $0x1d0] sm:$0xff] %vm203, %v194
      %330 = vst.msk [vmem:[%s305 + $0x1f0] sm:$0xff] %vm203, %v195
      %331 = vst.msk [vmem:[%s305 + $0x1f8] sm:$0xff] %vm203, %v196
      %332 = vst.msk [vmem:[%s305 + $0x218] sm:$0xff] %vm203, %v197
      %333 = vst.msk [vmem:[%s305 + $0x220] sm:$0xff] %vm203, %v198
      %334 = vst.msk [vmem:[%s305 + $0x240] sm:$0xff] %vm203, %v199
      %335 = vst.msk [vmem:[%s305 + $0x248] sm:$0xff] %vm203, %v200
      %336 = vst.msk [vmem:[%s305 + $0x268] sm:$0xff] %vm203, %v201
      %337 = vst.msk [vmem:[%s305 + $0x270] sm:$0xff] %vm203, %v202
      %v338 = vld [vmem:[#allocation2 + $0xe] sm:$0xff]
      %v339 = vld [vmem:[#allocation2 + $0x16] sm:$0xff]
      %v340 = vld [vmem:[#allocation2 + $0x36] sm:$0xff]
      %v341 = vld [vmem:[#allocation2 + $0x3e] sm:$0xff]
      %v342 = vld [vmem:[#allocation2 + $0x5e] sm:$0xff]
      %v343 = vld [vmem:[#allocation2 + $0x66] sm:$0xff]
      %v344 = vld [vmem:[#allocation2 + $0x86] sm:$0xff]
      %v345 = vld [vmem:[#allocation2 + $0x8e] sm:$0xff]
      %v346 = vld [vmem:[#allocation2 + $0xae] sm:$0xff]
      %v347 = vld [vmem:[#allocation2 + $0xb6] sm:$0xff]
      %v348 = vld [vmem:[#allocation2 + $0xd6] sm:$0xff]
      %v349 = vld [vmem:[#allocation2 + $0xde] sm:$0xff]
      %v350 = vld [vmem:[#allocation2 + $0xfe] sm:$0xff]
      %v351 = vld [vmem:[#allocation2 + $0x106] sm:$0xff]
      %v352 = vld [vmem:[#allocation2 + $0x126] sm:$0xff]
      %v353 = vld [vmem:[#allocation2 + $0x12e] sm:$0xff]
      %v354 = vld [vmem:[#allocation2 + $0x14e] sm:$0xff]
      %v355 = vld [vmem:[#allocation2 + $0x156] sm:$0xff]
      %v356 = vld [vmem:[#allocation2 + $0x176] sm:$0xff]
      %v357 = vld [vmem:[#allocation2 + $0x17e] sm:$0xff]
      %v358 = vld [vmem:[#allocation2 + $0x19e] sm:$0xff]
      %v359 = vld [vmem:[#allocation2 + $0x1a6] sm:$0xff]
      %v360 = vld [vmem:[#allocation2 + $0x1c6] sm:$0xff]
      %v361 = vld [vmem:[#allocation2 + $0x1ce] sm:$0xff]
      %v362 = vld [vmem:[#allocation2 + $0x1ee] sm:$0xff]
      %v363 = vld [vmem:[#allocation2 + $0x1f6] sm:$0xff]
      %v364 = vld [vmem:[#allocation2 + $0x216] sm:$0xff]
      %v365 = vld [vmem:[#allocation2 + $0x21e] sm:$0xff]
      %v366 = vld [vmem:[#allocation2 + $0x23e] sm:$0xff]
      %v367 = vld [vmem:[#allocation2 + $0x246] sm:$0xff]
      %v368 = vld [vmem:[#allocation2 + $0x266] sm:$0xff]
      %v369 = vld [vmem:[#allocation2 + $0x26e] sm:$0xff]
      %v370 = vld [vmem:[#allocation2 + $0xf] sm:$0xff]
      %v371 = vld [vmem:[#allocation2 + $0x17] sm:$0xff]
      %v372 = vld [vmem:[#allocation2 + $0x37] sm:$0xff]
      %v373 = vld [vmem:[#allocation2 + $0x3f] sm:$0xff]
      %v374 = vld [vmem:[#allocation2 + $0x5f] sm:$0xff]
      %v375 = vld [vmem:[#allocation2 + $0x67] sm:$0xff]
      %v376 = vld [vmem:[#allocation2 + $0x87] sm:$0xff]
      %v377 = vld [vmem:[#allocation2 + $0x8f] sm:$0xff]
      %v378 = vld [vmem:[#allocation2 + $0xaf] sm:$0xff]
      %v379 = vld [vmem:[#allocation2 + $0xb7] sm:$0xff]
      %v380 = vld [vmem:[#allocation2 + $0xd7] sm:$0xff]
      %v381 = vld [vmem:[#allocation2 + $0xdf] sm:$0xff]
      %v382 = vld [vmem:[#allocation2 + $0xff] sm:$0xff]
      %v383 = vld [vmem:[#allocation2 + $0x107] sm:$0xff]
      %v384 = vld [vmem:[#allocation2 + $0x127] sm:$0xff]
      %v385 = vld [vmem:[#allocation2 + $0x12f] sm:$0xff]
      %v386 = vld [vmem:[#allocation2 + $0x14f] sm:$0xff]
      %v387 = vld [vmem:[#allocation2 + $0x157] sm:$0xff]
      %v388 = vld [vmem:[#allocation2 + $0x177] sm:$0xff]
      %v389 = vld [vmem:[#allocation2 + $0x17f] sm:$0xff]
      %v390 = vld [vmem:[#allocation2 + $0x19f] sm:$0xff]
      %v391 = vld [vmem:[#allocation2 + $0x1a7] sm:$0xff]
      %v392 = vld [vmem:[#allocation2 + $0x1c7] sm:$0xff]
      %v393 = vld [vmem:[#allocation2 + $0x1cf] sm:$0xff]
      %v394 = vld [vmem:[#allocation2 + $0x1ef] sm:$0xff]
      %v395 = vld [vmem:[#allocation2 + $0x1f7] sm:$0xff]
      %v396 = vld [vmem:[#allocation2 + $0x217] sm:$0xff]
      %v397 = vld [vmem:[#allocation2 + $0x21f] sm:$0xff]
      %v398 = vld [vmem:[#allocation2 + $0x23f] sm:$0xff]
      %v399 = vld [vmem:[#allocation2 + $0x247] sm:$0xff]
      %v400 = vld [vmem:[#allocation2 + $0x267] sm:$0xff]
      %v401 = vld [vmem:[#allocation2 + $0x26f] sm:$0xff]
      %v402 = vld [vmem:[#allocation2 + $0x10] sm:$0xff]
      %v403 = vld [vmem:[#allocation2 + $0x18] sm:$0xff]
      %v404 = vld [vmem:[#allocation2 + $0x38] sm:$0xff]
      %v405 = vld [vmem:[#allocation2 + $0x40] sm:$0xff]
      %v406 = vld [vmem:[#allocation2 + $0x60] sm:$0xff]
      %v407 = vld [vmem:[#allocation2 + $0x68] sm:$0xff]
      %v408 = vld [vmem:[#allocation2 + $0x88] sm:$0xff]
      %v409 = vld [vmem:[#allocation2 + $0x90] sm:$0xff]
      %v410 = vld [vmem:[#allocation2 + $0xb0] sm:$0xff]
      %v411 = vld [vmem:[#allocation2 + $0xb8] sm:$0xff]
      %v412 = vld [vmem:[#allocation2 + $0xd8] sm:$0xff]
      %v413 = vld [vmem:[#allocation2 + $0xe0] sm:$0xff]
      %v414 = vld [vmem:[#allocation2 + $0x100] sm:$0xff]
      %v415 = vld [vmem:[#allocation2 + $0x108] sm:$0xff]
      %v416 = vld [vmem:[#allocation2 + $0x128] sm:$0xff]
      %v417 = vld [vmem:[#allocation2 + $0x130] sm:$0xff]
      %v418 = vld [vmem:[#allocation2 + $0x150] sm:$0xff]
      %v419 = vld [vmem:[#allocation2 + $0x158] sm:$0xff]
      %v420 = vld [vmem:[#allocation2 + $0x178] sm:$0xff]
      %v421 = vld [vmem:[#allocation2 + $0x180] sm:$0xff]
      %v422 = vld [vmem:[#allocation2 + $0x1a0] sm:$0xff]
      %v423 = vld [vmem:[#allocation2 + $0x1a8] sm:$0xff]
      %v424 = vld [vmem:[#allocation2 + $0x1c8] sm:$0xff]
      %v425 = vld [vmem:[#allocation2 + $0x1d0] sm:$0xff]
      %v426 = vld [vmem:[#allocation2 + $0x1f0] sm:$0xff]
      %v427 = vld [vmem:[#allocation2 + $0x1f8] sm:$0xff]
      %v428 = vld [vmem:[#allocation2 + $0x218] sm:$0xff]
      %v429 = vld [vmem:[#allocation2 + $0x220] sm:$0xff]
      %v430 = vld [vmem:[#allocation2 + $0x240] sm:$0xff]
      %v431 = vld [vmem:[#allocation2 + $0x248] sm:$0xff]
      %v432 = vld [vmem:[#allocation2 + $0x268] sm:$0xff]
      %v433 = vld [vmem:[#allocation2 + $0x270] sm:$0xff]
      %v434 = vld [vmem:[#allocation2 + $0x11] sm:$0xff]
      %v435 = vld [vmem:[#allocation2 + $0x19] sm:$0xff]
      %v436 = vld [vmem:[#allocation2 + $0x39] sm:$0xff]
      %v437 = vld [vmem:[#allocation2 + $0x41] sm:$0xff]
      %v438 = vld [vmem:[#allocation2 + $0x61] sm:$0xff]
      %v439 = vld [vmem:[#allocation2 + $0x69] sm:$0xff]
      %v440 = vld [vmem:[#allocation2 + $0x89] sm:$0xff]
      %v441 = vld [vmem:[#allocation2 + $0x91] sm:$0xff]
      %v442 = vld [vmem:[#allocation2 + $0xb1] sm:$0xff]
      %v443 = vld [vmem:[#allocation2 + $0xb9] sm:$0xff]
      %v444 = vld [vmem:[#allocation2 + $0xd9] sm:$0xff]
      %v445 = vld [vmem:[#allocation2 + $0xe1] sm:$0xff]
      %v446 = vld [vmem:[#allocation2 + $0x101] sm:$0xff]
      %v447 = vld [vmem:[#allocation2 + $0x109] sm:$0xff]
      %v448 = vld [vmem:[#allocation2 + $0x129] sm:$0xff]
      %v449 = vld [vmem:[#allocation2 + $0x131] sm:$0xff]
      %v450 = vld [vmem:[#allocation2 + $0x151] sm:$0xff]
      %v451 = vld [vmem:[#allocation2 + $0x159] sm:$0xff]
      %v452 = vld [vmem:[#allocation2 + $0x179] sm:$0xff]
      %v453 = vld [vmem:[#allocation2 + $0x181] sm:$0xff]
      %v454 = vld [vmem:[#allocation2 + $0x1a1] sm:$0xff]
      %v455 = vld [vmem:[#allocation2 + $0x1a9] sm:$0xff]
      %v456 = vld [vmem:[#allocation2 + $0x1c9] sm:$0xff]
      %v457 = vld [vmem:[#allocation2 + $0x1d1] sm:$0xff]
      %v458 = vld [vmem:[#allocation2 + $0x1f1] sm:$0xff]
      %v459 = vld [vmem:[#allocation2 + $0x1f9] sm:$0xff]
      %v460 = vld [vmem:[#allocation2 + $0x219] sm:$0xff]
      %v461 = vld [vmem:[#allocation2 + $0x221] sm:$0xff]
      %v462 = vld [vmem:[#allocation2 + $0x241] sm:$0xff]
      %v463 = vld [vmem:[#allocation2 + $0x249] sm:$0xff]
      %v464 = vld [vmem:[#allocation2 + $0x269] sm:$0xff]
      %v465 = vld [vmem:[#allocation2 + $0x271] sm:$0xff]
      %v466 = vld [vmem:[#allocation2 + $0x12] sm:$0xff]
      %v467 = vld [vmem:[#allocation2 + $0x1a] sm:$0xff]
      %v468 = vld [vmem:[#allocation2 + $0x3a] sm:$0xff]
      %v469 = vld [vmem:[#allocation2 + $0x42] sm:$0xff]
      %v470 = vld [vmem:[#allocation2 + $0x62] sm:$0xff]
      %v471 = vld [vmem:[#allocation2 + $0x6a] sm:$0xff]
      %v472 = vld [vmem:[#allocation2 + $0x8a] sm:$0xff]
      %v473 = vld [vmem:[#allocation2 + $0x92] sm:$0xff]
      %v474 = vld [vmem:[#allocation2 + $0xb2] sm:$0xff]
      %v475 = vld [vmem:[#allocation2 + $0xba] sm:$0xff]
      %v476 = vld [vmem:[#allocation2 + $0xda] sm:$0xff]
      %v477 = vld [vmem:[#allocation2 + $0xe2] sm:$0xff]
      %v478 = vld [vmem:[#allocation2 + $0x102] sm:$0xff]
      %v479 = vld [vmem:[#allocation2 + $0x10a] sm:$0xff]
      %v480 = vld [vmem:[#allocation2 + $0x12a] sm:$0xff]
      %v481 = vld [vmem:[#allocation2 + $0x132] sm:$0xff]
      %v482 = vld [vmem:[#allocation2 + $0x152] sm:$0xff]
      %v483 = vld [vmem:[#allocation2 + $0x15a] sm:$0xff]
      %v484 = vld [vmem:[#allocation2 + $0x17a] sm:$0xff]
      %v485 = vld [vmem:[#allocation2 + $0x182] sm:$0xff]
      %v486 = vld [vmem:[#allocation2 + $0x1a2] sm:$0xff]
      %v487 = vld [vmem:[#allocation2 + $0x1aa] sm:$0xff]
      %v488 = vld [vmem:[#allocation2 + $0x1ca] sm:$0xff]
      %v489 = vld [vmem:[#allocation2 + $0x1d2] sm:$0xff]
      %v490 = vld [vmem:[#allocation2 + $0x1f2] sm:$0xff]
      %v491 = vld [vmem:[#allocation2 + $0x1fa] sm:$0xff]
      %v492 = vld [vmem:[#allocation2 + $0x21a] sm:$0xff]
      %v493 = vld [vmem:[#allocation2 + $0x222] sm:$0xff]
      %v494 = vld [vmem:[#allocation2 + $0x242] sm:$0xff]
      %v495 = vld [vmem:[#allocation2 + $0x24a] sm:$0xff]
      %v496 = vld [vmem:[#allocation2 + $0x26a] sm:$0xff]
      %v497 = vld [vmem:[#allocation2 + $0x272] sm:$0xff]
      %s498 = scalar_lea.vmem [#allocation2], 40
      %v499 = vld [vmem:[%s498 + $0xe] sm:$0xff]
      %v500 = vld [vmem:[%s498 + $0x16] sm:$0xff]
      %v501 = vld [vmem:[%s498 + $0x36] sm:$0xff]
      %v502 = vld [vmem:[%s498 + $0x3e] sm:$0xff]
      %v503 = vld [vmem:[%s498 + $0x5e] sm:$0xff]
      %v504 = vld [vmem:[%s498 + $0x66] sm:$0xff]
      %v505 = vld [vmem:[%s498 + $0x86] sm:$0xff]
      %v506 = vld [vmem:[%s498 + $0x8e] sm:$0xff]
      %v507 = vld [vmem:[%s498 + $0xae] sm:$0xff]
      %v508 = vld [vmem:[%s498 + $0xb6] sm:$0xff]
      %v509 = vld [vmem:[%s498 + $0xd6] sm:$0xff]
      %v510 = vld [vmem:[%s498 + $0xde] sm:$0xff]
      %v511 = vld [vmem:[%s498 + $0xfe] sm:$0xff]
      %v512 = vld [vmem:[%s498 + $0x106] sm:$0xff]
      %v513 = vld [vmem:[%s498 + $0x126] sm:$0xff]
      %v514 = vld [vmem:[%s498 + $0x12e] sm:$0xff]
      %v515 = vld [vmem:[%s498 + $0x14e] sm:$0xff]
      %v516 = vld [vmem:[%s498 + $0x156] sm:$0xff]
      %v517 = vld [vmem:[%s498 + $0x176] sm:$0xff]
      %v518 = vld [vmem:[%s498 + $0x17e] sm:$0xff]
      %v519 = vld [vmem:[%s498 + $0x19e] sm:$0xff]
      %v520 = vld [vmem:[%s498 + $0x1a6] sm:$0xff]
      %v521 = vld [vmem:[%s498 + $0x1c6] sm:$0xff]
      %v522 = vld [vmem:[%s498 + $0x1ce] sm:$0xff]
      %v523 = vld [vmem:[%s498 + $0x1ee] sm:$0xff]
      %v524 = vld [vmem:[%s498 + $0x1f6] sm:$0xff]
      %v525 = vld [vmem:[%s498 + $0x216] sm:$0xff]
      %v526 = vld [vmem:[%s498 + $0x21e] sm:$0xff]
      %v527 = vld [vmem:[%s498 + $0x23e] sm:$0xff]
      %v528 = vld [vmem:[%s498 + $0x246] sm:$0xff]
      %v529 = vld [vmem:[%s498 + $0x266] sm:$0xff]
      %v530 = vld [vmem:[%s498 + $0x26e] sm:$0xff]
      %v531 = vld [vmem:[%s498 + $0xf] sm:$0xff]
      %v532 = vld [vmem:[%s498 + $0x17] sm:$0xff]
      %v533 = vld [vmem:[%s498 + $0x37] sm:$0xff]
      %v534 = vld [vmem:[%s498 + $0x3f] sm:$0xff]
      %v535 = vld [vmem:[%s498 + $0x5f] sm:$0xff]
      %v536 = vld [vmem:[%s498 + $0x67] sm:$0xff]
      %v537 = vld [vmem:[%s498 + $0x87] sm:$0xff]
      %v538 = vld [vmem:[%s498 + $0x8f] sm:$0xff]
      %v539 = vld [vmem:[%s498 + $0xaf] sm:$0xff]
      %v540 = vld [vmem:[%s498 + $0xb7] sm:$0xff]
      %v541 = vld [vmem:[%s498 + $0xd7] sm:$0xff]
      %v542 = vld [vmem:[%s498 + $0xdf] sm:$0xff]
      %v543 = vld [vmem:[%s498 + $0xff] sm:$0xff]
      %v544 = vld [vmem:[%s498 + $0x107] sm:$0xff]
      %v545 = vld [vmem:[%s498 + $0x127] sm:$0xff]
      %v546 = vld [vmem:[%s498 + $0x12f] sm:$0xff]
      %v547 = vld [vmem:[%s498 + $0x14f] sm:$0xff]
      %v548 = vld [vmem:[%s498 + $0x157] sm:$0xff]
      %v549 = vld [vmem:[%s498 + $0x177] sm:$0xff]
      %v550 = vld [vmem:[%s498 + $0x17f] sm:$0xff]
      %v551 = vld [vmem:[%s498 + $0x19f] sm:$0xff]
      %v552 = vld [vmem:[%s498 + $0x1a7] sm:$0xff]
      %v553 = vld [vmem:[%s498 + $0x1c7] sm:$0xff]
      %v554 = vld [vmem:[%s498 + $0x1cf] sm:$0xff]
      %v555 = vld [vmem:[%s498 + $0x1ef] sm:$0xff]
      %v556 = vld [vmem:[%s498 + $0x1f7] sm:$0xff]
      %v557 = vld [vmem:[%s498 + $0x217] sm:$0xff]
      %v558 = vld [vmem:[%s498 + $0x21f] sm:$0xff]
      %v559 = vld [vmem:[%s498 + $0x23f] sm:$0xff]
      %v560 = vld [vmem:[%s498 + $0x247] sm:$0xff]
      %v561 = vld [vmem:[%s498 + $0x267] sm:$0xff]
      %v562 = vld [vmem:[%s498 + $0x26f] sm:$0xff]
      %v563 = vld [vmem:[%s498 + $0x10] sm:$0xff]
      %v564 = vld [vmem:[%s498 + $0x18] sm:$0xff]
      %v565 = vld [vmem:[%s498 + $0x38] sm:$0xff]
      %v566 = vld [vmem:[%s498 + $0x40] sm:$0xff]
      %v567 = vld [vmem:[%s498 + $0x60] sm:$0xff]
      %v568 = vld [vmem:[%s498 + $0x68] sm:$0xff]
      %v569 = vld [vmem:[%s498 + $0x88] sm:$0xff]
      %v570 = vld [vmem:[%s498 + $0x90] sm:$0xff]
      %v571 = vld [vmem:[%s498 + $0xb0] sm:$0xff]
      %v572 = vld [vmem:[%s498 + $0xb8] sm:$0xff]
      %v573 = vld [vmem:[%s498 + $0xd8] sm:$0xff]
      %v574 = vld [vmem:[%s498 + $0xe0] sm:$0xff]
      %v575 = vld [vmem:[%s498 + $0x100] sm:$0xff]
      %v576 = vld [vmem:[%s498 + $0x108] sm:$0xff]
      %v577 = vld [vmem:[%s498 + $0x128] sm:$0xff]
      %v578 = vld [vmem:[%s498 + $0x130] sm:$0xff]
      %v579 = vld [vmem:[%s498 + $0x150] sm:$0xff]
      %v580 = vld [vmem:[%s498 + $0x158] sm:$0xff]
      %v581 = vld [vmem:[%s498 + $0x178] sm:$0xff]
      %v582 = vld [vmem:[%s498 + $0x180] sm:$0xff]
      %v583 = vld [vmem:[%s498 + $0x1a0] sm:$0xff]
      %v584 = vld [vmem:[%s498 + $0x1a8] sm:$0xff]
      %v585 = vld [vmem:[%s498 + $0x1c8] sm:$0xff]
      %v586 = vld [vmem:[%s498 + $0x1d0] sm:$0xff]
      %v587 = vld [vmem:[%s498 + $0x1f0] sm:$0xff]
      %v588 = vld [vmem:[%s498 + $0x1f8] sm:$0xff]
      %v589 = vld [vmem:[%s498 + $0x218] sm:$0xff]
      %v590 = vld [vmem:[%s498 + $0x220] sm:$0xff]
      %v591 = vld [vmem:[%s498 + $0x240] sm:$0xff]
      %v592 = vld [vmem:[%s498 + $0x248] sm:$0xff]
      %v593 = vld [vmem:[%s498 + $0x268] sm:$0xff]
      %v594 = vld [vmem:[%s498 + $0x270] sm:$0xff]
      %v595 = vld [vmem:[%s498 + $0x11] sm:$0xff]
      %v596 = vld [vmem:[%s498 + $0x19] sm:$0xff]
      %v597 = vld [vmem:[%s498 + $0x39] sm:$0xff]
      %v598 = vld [vmem:[%s498 + $0x41] sm:$0xff]
      %v599 = vld [vmem:[%s498 + $0x61] sm:$0xff]
      %v600 = vld [vmem:[%s498 + $0x69] sm:$0xff]
      %v601 = vld [vmem:[%s498 + $0x89] sm:$0xff]
      %v602 = vld [vmem:[%s498 + $0x91] sm:$0xff]
      %v603 = vld [vmem:[%s498 + $0xb1] sm:$0xff]
      %v604 = vld [vmem:[%s498 + $0xb9] sm:$0xff]
      %v605 = vld [vmem:[%s498 + $0xd9] sm:$0xff]
      %v606 = vld [vmem:[%s498 + $0xe1] sm:$0xff]
      %v607 = vld [vmem:[%s498 + $0x101] sm:$0xff]
      %v608 = vld [vmem:[%s498 + $0x109] sm:$0xff]
      %v609 = vld [vmem:[%s498 + $0x129] sm:$0xff]
      %v610 = vld [vmem:[%s498 + $0x131] sm:$0xff]
      %v611 = vld [vmem:[%s498 + $0x151] sm:$0xff]
      %v612 = vld [vmem:[%s498 + $0x159] sm:$0xff]
      %v613 = vld [vmem:[%s498 + $0x179] sm:$0xff]
      %v614 = vld [vmem:[%s498 + $0x181] sm:$0xff]
      %v615 = vld [vmem:[%s498 + $0x1a1] sm:$0xff]
      %v616 = vld [vmem:[%s498 + $0x1a9] sm:$0xff]
      %v617 = vld [vmem:[%s498 + $0x1c9] sm:$0xff]
      %v618 = vld [vmem:[%s498 + $0x1d1] sm:$0xff]
      %v619 = vld [vmem:[%s498 + $0x1f1] sm:$0xff]
      %v620 = vld [vmem:[%s498 + $0x1f9] sm:$0xff]
      %v621 = vld [vmem:[%s498 + $0x219] sm:$0xff]
      %v622 = vld [vmem:[%s498 + $0x221] sm:$0xff]
      %v623 = vld [vmem:[%s498 + $0x241] sm:$0xff]
      %v624 = vld [vmem:[%s498 + $0x249] sm:$0xff]
      %v625 = vld [vmem:[%s498 + $0x269] sm:$0xff]
      %v626 = vld [vmem:[%s498 + $0x271] sm:$0xff]
      %v627 = vld [vmem:[%s498 + $0x12] sm:$0xff]
      %v628 = vld [vmem:[%s498 + $0x1a] sm:$0xff]
      %v629 = vld [vmem:[%s498 + $0x3a] sm:$0xff]
      %v630 = vld [vmem:[%s498 + $0x42] sm:$0xff]
      %v631 = vld [vmem:[%s498 + $0x62] sm:$0xff]
      %v632 = vld [vmem:[%s498 + $0x6a] sm:$0xff]
      %v633 = vld [vmem:[%s498 + $0x8a] sm:$0xff]
      %v634 = vld [vmem:[%s498 + $0x92] sm:$0xff]
      %v635 = vld [vmem:[%s498 + $0xb2] sm:$0xff]
      %v636 = vld [vmem:[%s498 + $0xba] sm:$0xff]
      %v637 = vld [vmem:[%s498 + $0xda] sm:$0xff]
      %v638 = vld [vmem:[%s498 + $0xe2] sm:$0xff]
      %v639 = vld [vmem:[%s498 + $0x102] sm:$0xff]
      %v640 = vld [vmem:[%s498 + $0x10a] sm:$0xff]
      %v641 = vld [vmem:[%s498 + $0x12a] sm:$0xff]
      %v642 = vld [vmem:[%s498 + $0x132] sm:$0xff]
      %v643 = vld [vmem:[%s498 + $0x152] sm:$0xff]
      %v644 = vld [vmem:[%s498 + $0x15a] sm:$0xff]
      %v645 = vld [vmem:[%s498 + $0x17a] sm:$0xff]
      %v646 = vld [vmem:[%s498 + $0x182] sm:$0xff]
      %v647 = vld [vmem:[%s498 + $0x1a2] sm:$0xff]
      %v648 = vld [vmem:[%s498 + $0x1aa] sm:$0xff]
      %v649 = vld [vmem:[%s498 + $0x1ca] sm:$0xff]
      %v650 = vld [vmem:[%s498 + $0x1d2] sm:$0xff]
      %v651 = vld [vmem:[%s498 + $0x1f2] sm:$0xff]
      %v652 = vld [vmem:[%s498 + $0x1fa] sm:$0xff]
      %v653 = vld [vmem:[%s498 + $0x21a] sm:$0xff]
      %v654 = vld [vmem:[%s498 + $0x222] sm:$0xff]
      %v655 = vld [vmem:[%s498 + $0x242] sm:$0xff]
      %v656 = vld [vmem:[%s498 + $0x24a] sm:$0xff]
      %v657 = vld [vmem:[%s498 + $0x26a] sm:$0xff]
      %v658 = vld [vmem:[%s498 + $0x272] sm:$0xff]
      %v659 = vld [vmem:[%s305 + $0xe] sm:$0xff]
      %v660 = vld [vmem:[%s305 + $0x16] sm:$0xff]
      %v661 = vld [vmem:[%s305 + $0x36] sm:$0xff]
      %v662 = vld [vmem:[%s305 + $0x3e] sm:$0xff]
      %v663 = vld [vmem:[%s305 + $0x5e] sm:$0xff]
      %v664 = vld [vmem:[%s305 + $0x66] sm:$0xff]
      %v665 = vld [vmem:[%s305 + $0x86] sm:$0xff]
      %v666 = vld [vmem:[%s305 + $0x8e] sm:$0xff]
      %v667 = vld [vmem:[%s305 + $0xae] sm:$0xff]
      %v668 = vld [vmem:[%s305 + $0xb6] sm:$0xff]
      %v669 = vld [vmem:[%s305 + $0xd6] sm:$0xff]
      %v670 = vld [vmem:[%s305 + $0xde] sm:$0xff]
      %v671 = vld [vmem:[%s305 + $0xfe] sm:$0xff]
      %v672 = vld [vmem:[%s305 + $0x106] sm:$0xff]
      %v673 = vld [vmem:[%s305 + $0x126] sm:$0xff]
      %v674 = vld [vmem:[%s305 + $0x12e] sm:$0xff]
      %v675 = vld [vmem:[%s305 + $0x14e] sm:$0xff]
      %v676 = vld [vmem:[%s305 + $0x156] sm:$0xff]
      %v677 = vld [vmem:[%s305 + $0x176] sm:$0xff]
      %v678 = vld [vmem:[%s305 + $0x17e] sm:$0xff]
      %v679 = vld [vmem:[%s305 + $0x19e] sm:$0xff]
      %v680 = vld [vmem:[%s305 + $0x1a6] sm:$0xff]
      %v681 = vld [vmem:[%s305 + $0x1c6] sm:$0xff]
      %v682 = vld [vmem:[%s305 + $0x1ce] sm:$0xff]
      %v683 = vld [vmem:[%s305 + $0x1ee] sm:$0xff]
      %v684 = vld [vmem:[%s305 + $0x1f6] sm:$0xff]
      %v685 = vld [vmem:[%s305 + $0x216] sm:$0xff]
      %v686 = vld [vmem:[%s305 + $0x21e] sm:$0xff]
      %v687 = vld [vmem:[%s305 + $0x23e] sm:$0xff]
      %v688 = vld [vmem:[%s305 + $0x246] sm:$0xff]
      %v689 = vld [vmem:[%s305 + $0x266] sm:$0xff]
      %v690 = vld [vmem:[%s305 + $0x26e] sm:$0xff]
      %v691 = vld [vmem:[%s305 + $0xf] sm:$0xff]
      %v692 = vld [vmem:[%s305 + $0x17] sm:$0xff]
      %v693 = vld [vmem:[%s305 + $0x37] sm:$0xff]
      %v694 = vld [vmem:[%s305 + $0x3f] sm:$0xff]
      %v695 = vld [vmem:[%s305 + $0x5f] sm:$0xff]
      %v696 = vld [vmem:[%s305 + $0x67] sm:$0xff]
      %v697 = vld [vmem:[%s305 + $0x87] sm:$0xff]
      %v698 = vld [vmem:[%s305 + $0x8f] sm:$0xff]
      %v699 = vld [vmem:[%s305 + $0xaf] sm:$0xff]
      %v700 = vld [vmem:[%s305 + $0xb7] sm:$0xff]
      %v701 = vld [vmem:[%s305 + $0xd7] sm:$0xff]
      %v702 = vld [vmem:[%s305 + $0xdf] sm:$0xff]
      %v703 = vld [vmem:[%s305 + $0xff] sm:$0xff]
      %v704 = vld [vmem:[%s305 + $0x107] sm:$0xff]
      %v705 = vld [vmem:[%s305 + $0x127] sm:$0xff]
      %v706 = vld [vmem:[%s305 + $0x12f] sm:$0xff]
      %v707 = vld [vmem:[%s305 + $0x14f] sm:$0xff]
      %v708 = vld [vmem:[%s305 + $0x157] sm:$0xff]
      %v709 = vld [vmem:[%s305 + $0x177] sm:$0xff]
      %v710 = vld [vmem:[%s305 + $0x17f] sm:$0xff]
      %v711 = vld [vmem:[%s305 + $0x19f] sm:$0xff]
      %v712 = vld [vmem:[%s305 + $0x1a7] sm:$0xff]
      %v713 = vld [vmem:[%s305 + $0x1c7] sm:$0xff]
      %v714 = vld [vmem:[%s305 + $0x1cf] sm:$0xff]
      %v715 = vld [vmem:[%s305 + $0x1ef] sm:$0xff]
      %v716 = vld [vmem:[%s305 + $0x1f7] sm:$0xff]
      %v717 = vld [vmem:[%s305 + $0x217] sm:$0xff]
      %v718 = vld [vmem:[%s305 + $0x21f] sm:$0xff]
      %v719 = vld [vmem:[%s305 + $0x23f] sm:$0xff]
      %v720 = vld [vmem:[%s305 + $0x247] sm:$0xff]
      %v721 = vld [vmem:[%s305 + $0x267] sm:$0xff]
      %v722 = vld [vmem:[%s305 + $0x26f] sm:$0xff]
      %v723 = vld [vmem:[%s305 + $0x10] sm:$0xff]
      %v724 = vld [vmem:[%s305 + $0x18] sm:$0xff]
      %v725 = vld [vmem:[%s305 + $0x38] sm:$0xff]
      %v726 = vld [vmem:[%s305 + $0x40] sm:$0xff]
      %v727 = vld [vmem:[%s305 + $0x60] sm:$0xff]
      %v728 = vld [vmem:[%s305 + $0x68] sm:$0xff]
      %v729 = vld [vmem:[%s305 + $0x88] sm:$0xff]
      %v730 = vld [vmem:[%s305 + $0x90] sm:$0xff]
      %v731 = vld [vmem:[%s305 + $0xb0] sm:$0xff]
      %v732 = vld [vmem:[%s305 + $0xb8] sm:$0xff]
      %v733 = vld [vmem:[%s305 + $0xd8] sm:$0xff]
      %v734 = vld [vmem:[%s305 + $0xe0] sm:$0xff]
      %v735 = vld [vmem:[%s305 + $0x100] sm:$0xff]
      %v736 = vld [vmem:[%s305 + $0x108] sm:$0xff]
      %v737 = vld [vmem:[%s305 + $0x128] sm:$0xff]
      %v738 = vld [vmem:[%s305 + $0x130] sm:$0xff]
      %v739 = vld [vmem:[%s305 + $0x150] sm:$0xff]
      %v740 = vld [vmem:[%s305 + $0x158] sm:$0xff]
      %v741 = vld [vmem:[%s305 + $0x178] sm:$0xff]
      %v742 = vld [vmem:[%s305 + $0x180] sm:$0xff]
      %v743 = vld [vmem:[%s305 + $0x1a0] sm:$0xff]
      %v744 = vld [vmem:[%s305 + $0x1a8] sm:$0xff]
      %v745 = vld [vmem:[%s305 + $0x1c8] sm:$0xff]
      %v746 = vld [vmem:[%s305 + $0x1d0] sm:$0xff]
      %v747 = vld [vmem:[%s305 + $0x1f0] sm:$0xff]
      %v748 = vld [vmem:[%s305 + $0x1f8] sm:$0xff]
      %v749 = vld [vmem:[%s305 + $0x218] sm:$0xff]
      %v750 = vld [vmem:[%s305 + $0x220] sm:$0xff]
      %v751 = vld [vmem:[%s305 + $0x240] sm:$0xff]
      %v752 = vld [vmem:[%s305 + $0x248] sm:$0xff]
      %v753 = vld [vmem:[%s305 + $0x268] sm:$0xff]
      %v754 = vld [vmem:[%s305 + $0x270] sm:$0xff]
      %v755 = vld [vmem:[%s305 + $0x11] sm:$0xff]
      %v756 = vld [vmem:[%s305 + $0x19] sm:$0xff]
      %v757 = vld [vmem:[%s305 + $0x39] sm:$0xff]
      %v758 = vld [vmem:[%s305 + $0x41] sm:$0xff]
      %v759 = vld [vmem:[%s305 + $0x61] sm:$0xff]
      %v760 = vld [vmem:[%s305 + $0x69] sm:$0xff]
      %v761 = vld [vmem:[%s305 + $0x89] sm:$0xff]
      %v762 = vld [vmem:[%s305 + $0x91] sm:$0xff]
      %v763 = vld [vmem:[%s305 + $0xb1] sm:$0xff]
      %v764 = vld [vmem:[%s305 + $0xb9] sm:$0xff]
      %v765 = vld [vmem:[%s305 + $0xd9] sm:$0xff]
      %v766 = vld [vmem:[%s305 + $0xe1] sm:$0xff]
      %v767 = vld [vmem:[%s305 + $0x101] sm:$0xff]
      %v768 = vld [vmem:[%s305 + $0x109] sm:$0xff]
      %v769 = vld [vmem:[%s305 + $0x129] sm:$0xff]
      %v770 = vld [vmem:[%s305 + $0x131] sm:$0xff]
      %v771 = vld [vmem:[%s305 + $0x151] sm:$0xff]
      %v772 = vld [vmem:[%s305 + $0x159] sm:$0xff]
      %v773 = vld [vmem:[%s305 + $0x179] sm:$0xff]
      %v774 = vld [vmem:[%s305 + $0x181] sm:$0xff]
      %v775 = vld [vmem:[%s305 + $0x1a1] sm:$0xff]
      %v776 = vld [vmem:[%s305 + $0x1a9] sm:$0xff]
      %v777 = vld [vmem:[%s305 + $0x1c9] sm:$0xff]
      %v778 = vld [vmem:[%s305 + $0x1d1] sm:$0xff]
      %v779 = vld [vmem:[%s305 + $0x1f1] sm:$0xff]
      %v780 = vld [vmem:[%s305 + $0x1f9] sm:$0xff]
      %v781 = vld [vmem:[%s305 + $0x219] sm:$0xff]
      %v782 = vld [vmem:[%s305 + $0x221] sm:$0xff]
      %v783 = vld [vmem:[%s305 + $0x241] sm:$0xff]
      %v784 = vld [vmem:[%s305 + $0x249] sm:$0xff]
      %v785 = vld [vmem:[%s305 + $0x269] sm:$0xff]
      %v786 = vld [vmem:[%s305 + $0x271] sm:$0xff]
      %v787 = vld [vmem:[%s305 + $0x12] sm:$0xff]
      %v788 = vld [vmem:[%s305 + $0x1a] sm:$0xff]
      %v789 = vld [vmem:[%s305 + $0x3a] sm:$0xff]
      %v790 = vld [vmem:[%s305 + $0x42] sm:$0xff]
      %v791 = vld [vmem:[%s305 + $0x62] sm:$0xff]
      %v792 = vld [vmem:[%s305 + $0x6a] sm:$0xff]
      %v793 = vld [vmem:[%s305 + $0x8a] sm:$0xff]
      %v794 = vld [vmem:[%s305 + $0x92] sm:$0xff]
      %v795 = vld [vmem:[%s305 + $0xb2] sm:$0xff]
      %v796 = vld [vmem:[%s305 + $0xba] sm:$0xff]
      %v797 = vld [vmem:[%s305 + $0xda] sm:$0xff]
      %v798 = vld [vmem:[%s305 + $0xe2] sm:$0xff]
      %v799 = vld [vmem:[%s305 + $0x102] sm:$0xff]
      %v800 = vld [vmem:[%s305 + $0x10a] sm:$0xff]
      %v801 = vld [vmem:[%s305 + $0x12a] sm:$0xff]
      %v802 = vld [vmem:[%s305 + $0x132] sm:$0xff]
      %v803 = vld [vmem:[%s305 + $0x152] sm:$0xff]
      %v804 = vld [vmem:[%s305 + $0x15a] sm:$0xff]
      %v805 = vld [vmem:[%s305 + $0x17a] sm:$0xff]
      %v806 = vld [vmem:[%s305 + $0x182] sm:$0xff]
      %v807 = vld [vmem:[%s305 + $0x1a2] sm:$0xff]
      %v808 = vld [vmem:[%s305 + $0x1aa] sm:$0xff]
      %v809 = vld [vmem:[%s305 + $0x1ca] sm:$0xff]
      %v810 = vld [vmem:[%s305 + $0x1d2] sm:$0xff]
      %v811 = vld [vmem:[%s305 + $0x1f2] sm:$0xff]
      %v812 = vld [vmem:[%s305 + $0x1fa] sm:$0xff]
      %v813 = vld [vmem:[%s305 + $0x21a] sm:$0xff]
      %v814 = vld [vmem:[%s305 + $0x222] sm:$0xff]
      %v815 = vld [vmem:[%s305 + $0x242] sm:$0xff]
      %v816 = vld [vmem:[%s305 + $0x24a] sm:$0xff]
      %v817 = vld [vmem:[%s305 + $0x26a] sm:$0xff]
      %v818 = vld [vmem:[%s305 + $0x272] sm:$0xff]
      %s819 = scalar_lea.vmem [#allocation2], 120
      %v820 = vld [vmem:[%s819 + $0xe] sm:$0xff]
      %v821 = vld [vmem:[%s819 + $0x16] sm:$0xff]
      %v822 = vld [vmem:[%s819 + $0x36] sm:$0xff]
      %v823 = vld [vmem:[%s819 + $0x3e] sm:$0xff]
      %v824 = vld [vmem:[%s819 + $0x5e] sm:$0xff]
      %v825 = vld [vmem:[%s819 + $0x66] sm:$0xff]
      %v826 = vld [vmem:[%s819 + $0x86] sm:$0xff]
      %v827 = vld [vmem:[%s819 + $0x8e] sm:$0xff]
      %v828 = vld [vmem:[%s819 + $0xae] sm:$0xff]
      %v829 = vld [vmem:[%s819 + $0xb6] sm:$0xff]
      %v830 = vld [vmem:[%s819 + $0xd6] sm:$0xff]
      %v831 = vld [vmem:[%s819 + $0xde] sm:$0xff]
      %v832 = vld [vmem:[%s819 + $0xfe] sm:$0xff]
      %v833 = vld [vmem:[%s819 + $0x106] sm:$0xff]
      %v834 = vld [vmem:[%s819 + $0x126] sm:$0xff]
      %v835 = vld [vmem:[%s819 + $0x12e] sm:$0xff]
      %v836 = vld [vmem:[%s819 + $0x14e] sm:$0xff]
      %v837 = vld [vmem:[%s819 + $0x156] sm:$0xff]
      %v838 = vld [vmem:[%s819 + $0x176] sm:$0xff]
      %v839 = vld [vmem:[%s819 + $0x17e] sm:$0xff]
      %v840 = vld [vmem:[%s819 + $0x19e] sm:$0xff]
      %v841 = vld [vmem:[%s819 + $0x1a6] sm:$0xff]
      %v842 = vld [vmem:[%s819 + $0x1c6] sm:$0xff]
      %v843 = vld [vmem:[%s819 + $0x1ce] sm:$0xff]
      %v844 = vld [vmem:[%s819 + $0x1ee] sm:$0xff]
      %v845 = vld [vmem:[%s819 + $0x1f6] sm:$0xff]
      %v846 = vld [vmem:[%s819 + $0x216] sm:$0xff]
      %v847 = vld [vmem:[%s819 + $0x21e] sm:$0xff]
      %v848 = vld [vmem:[%s819 + $0x23e] sm:$0xff]
      %v849 = vld [vmem:[%s819 + $0x246] sm:$0xff]
      %v850 = vld [vmem:[%s819 + $0x266] sm:$0xff]
      %v851 = vld [vmem:[%s819 + $0x26e] sm:$0xff]
      %v852 = vld [vmem:[%s819 + $0xf] sm:$0xff]
      %v853 = vld [vmem:[%s819 + $0x17] sm:$0xff]
      %v854 = vld [vmem:[%s819 + $0x37] sm:$0xff]
      %v855 = vld [vmem:[%s819 + $0x3f] sm:$0xff]
      %v856 = vld [vmem:[%s819 + $0x5f] sm:$0xff]
      %v857 = vld [vmem:[%s819 + $0x67] sm:$0xff]
      %v858 = vld [vmem:[%s819 + $0x87] sm:$0xff]
      %v859 = vld [vmem:[%s819 + $0x8f] sm:$0xff]
      %v860 = vld [vmem:[%s819 + $0xaf] sm:$0xff]
      %v861 = vld [vmem:[%s819 + $0xb7] sm:$0xff]
      %v862 = vld [vmem:[%s819 + $0xd7] sm:$0xff]
      %v863 = vld [vmem:[%s819 + $0xdf] sm:$0xff]
      %v864 = vld [vmem:[%s819 + $0xff] sm:$0xff]
      %v865 = vld [vmem:[%s819 + $0x107] sm:$0xff]
      %v866 = vld [vmem:[%s819 + $0x127] sm:$0xff]
      %v867 = vld [vmem:[%s819 + $0x12f] sm:$0xff]
      %v868 = vld [vmem:[%s819 + $0x14f] sm:$0xff]
      %v869 = vld [vmem:[%s819 + $0x157] sm:$0xff]
      %v870 = vld [vmem:[%s819 + $0x177] sm:$0xff]
      %v871 = vld [vmem:[%s819 + $0x17f] sm:$0xff]
      %v872 = vld [vmem:[%s819 + $0x19f] sm:$0xff]
      %v873 = vld [vmem:[%s819 + $0x1a7] sm:$0xff]
      %v874 = vld [vmem:[%s819 + $0x1c7] sm:$0xff]
      %v875 = vld [vmem:[%s819 + $0x1cf] sm:$0xff]
      %v876 = vld [vmem:[%s819 + $0x1ef] sm:$0xff]
      %v877 = vld [vmem:[%s819 + $0x1f7] sm:$0xff]
      %v878 = vld [vmem:[%s819 + $0x217] sm:$0xff]
      %v879 = vld [vmem:[%s819 + $0x21f] sm:$0xff]
      %v880 = vld [vmem:[%s819 + $0x23f] sm:$0xff]
      %v881 = vld [vmem:[%s819 + $0x247] sm:$0xff]
      %v882 = vld [vmem:[%s819 + $0x267] sm:$0xff]
      %v883 = vld [vmem:[%s819 + $0x26f] sm:$0xff]
      %v884 = vld [vmem:[%s819 + $0x10] sm:$0xff]
      %v885 = vld [vmem:[%s819 + $0x18] sm:$0xff]
      %v886 = vld [vmem:[%s819 + $0x38] sm:$0xff]
      %v887 = vld [vmem:[%s819 + $0x40] sm:$0xff]
      %v888 = vld [vmem:[%s819 + $0x60] sm:$0xff]
      %v889 = vld [vmem:[%s819 + $0x68] sm:$0xff]
      %v890 = vld [vmem:[%s819 + $0x88] sm:$0xff]
      %v891 = vld [vmem:[%s819 + $0x90] sm:$0xff]
      %v892 = vld [vmem:[%s819 + $0xb0] sm:$0xff]
      %v893 = vld [vmem:[%s819 + $0xb8] sm:$0xff]
      %v894 = vld [vmem:[%s819 + $0xd8] sm:$0xff]
      %v895 = vld [vmem:[%s819 + $0xe0] sm:$0xff]
      %v896 = vld [vmem:[%s819 + $0x100] sm:$0xff]
      %v897 = vld [vmem:[%s819 + $0x108] sm:$0xff]
      %v898 = vld [vmem:[%s819 + $0x128] sm:$0xff]
      %v899 = vld [vmem:[%s819 + $0x130] sm:$0xff]
      %v900 = vld [vmem:[%s819 + $0x150] sm:$0xff]
      %v901 = vld [vmem:[%s819 + $0x158] sm:$0xff]
      %v902 = vld [vmem:[%s819 + $0x178] sm:$0xff]
      %v903 = vld [vmem:[%s819 + $0x180] sm:$0xff]
      %v904 = vld [vmem:[%s819 + $0x1a0] sm:$0xff]
      %v905 = vld [vmem:[%s819 + $0x1a8] sm:$0xff]
      %v906 = vld [vmem:[%s819 + $0x1c8] sm:$0xff]
      %v907 = vld [vmem:[%s819 + $0x1d0] sm:$0xff]
      %v908 = vld [vmem:[%s819 + $0x1f0] sm:$0xff]
      %v909 = vld [vmem:[%s819 + $0x1f8] sm:$0xff]
      %v910 = vld [vmem:[%s819 + $0x218] sm:$0xff]
      %v911 = vld [vmem:[%s819 + $0x220] sm:$0xff]
      %v912 = vld [vmem:[%s819 + $0x240] sm:$0xff]
      %v913 = vld [vmem:[%s819 + $0x248] sm:$0xff]
      %v914 = vld [vmem:[%s819 + $0x268] sm:$0xff]
      %v915 = vld [vmem:[%s819 + $0x270] sm:$0xff]
      %v916 = vld [vmem:[%s819 + $0x11] sm:$0xff]
      %v917 = vld [vmem:[%s819 + $0x19] sm:$0xff]
      %v918 = vld [vmem:[%s819 + $0x39] sm:$0xff]
      %v919 = vld [vmem:[%s819 + $0x41] sm:$0xff]
      %v920 = vld [vmem:[%s819 + $0x61] sm:$0xff]
      %v921 = vld [vmem:[%s819 + $0x69] sm:$0xff]
      %v922 = vld [vmem:[%s819 + $0x89] sm:$0xff]
      %v923 = vld [vmem:[%s819 + $0x91] sm:$0xff]
      %v924 = vld [vmem:[%s819 + $0xb1] sm:$0xff]
      %v925 = vld [vmem:[%s819 + $0xb9] sm:$0xff]
      %v926 = vld [vmem:[%s819 + $0xd9] sm:$0xff]
      %v927 = vld [vmem:[%s819 + $0xe1] sm:$0xff]
      %v928 = vld [vmem:[%s819 + $0x101] sm:$0xff]
      %v929 = vld [vmem:[%s819 + $0x109] sm:$0xff]
      %v930 = vld [vmem:[%s819 + $0x129] sm:$0xff]
      %v931 = vld [vmem:[%s819 + $0x131] sm:$0xff]
      %v932 = vld [vmem:[%s819 + $0x151] sm:$0xff]
      %v933 = vld [vmem:[%s819 + $0x159] sm:$0xff]
      %v934 = vld [vmem:[%s819 + $0x179] sm:$0xff]
      %v935 = vld [vmem:[%s819 + $0x181] sm:$0xff]
      %v936 = vld [vmem:[%s819 + $0x1a1] sm:$0xff]
      %v937 = vld [vmem:[%s819 + $0x1a9] sm:$0xff]
      %v938 = vld [vmem:[%s819 + $0x1c9] sm:$0xff]
      %v939 = vld [vmem:[%s819 + $0x1d1] sm:$0xff]
      %v940 = vld [vmem:[%s819 + $0x1f1] sm:$0xff]
      %v941 = vld [vmem:[%s819 + $0x1f9] sm:$0xff]
      %v942 = vld [vmem:[%s819 + $0x219] sm:$0xff]
      %v943 = vld [vmem:[%s819 + $0x221] sm:$0xff]
      %v944 = vld [vmem:[%s819 + $0x241] sm:$0xff]
      %v945 = vld [vmem:[%s819 + $0x249] sm:$0xff]
      %v946 = vld [vmem:[%s819 + $0x269] sm:$0xff]
      %v947 = vld [vmem:[%s819 + $0x271] sm:$0xff]
      %v948 = vld [vmem:[%s819 + $0x12] sm:$0xff]
      %v949 = vld [vmem:[%s819 + $0x1a] sm:$0xff]
      %v950 = vld [vmem:[%s819 + $0x3a] sm:$0xff]
      %v951 = vld [vmem:[%s819 + $0x42] sm:$0xff]
      %v952 = vld [vmem:[%s819 + $0x62] sm:$0xff]
      %v953 = vld [vmem:[%s819 + $0x6a] sm:$0xff]
      %v954 = vld [vmem:[%s819 + $0x8a] sm:$0xff]
      %v955 = vld [vmem:[%s819 + $0x92] sm:$0xff]
      %v956 = vld [vmem:[%s819 + $0xb2] sm:$0xff]
      %v957 = vld [vmem:[%s819 + $0xba] sm:$0xff]
      %v958 = vld [vmem:[%s819 + $0xda] sm:$0xff]
      %v959 = vld [vmem:[%s819 + $0xe2] sm:$0xff]
      %v960 = vld [vmem:[%s819 + $0x102] sm:$0xff]
      %v961 = vld [vmem:[%s819 + $0x10a] sm:$0xff]
      %v962 = vld [vmem:[%s819 + $0x12a] sm:$0xff]
      %v963 = vld [vmem:[%s819 + $0x132] sm:$0xff]
      %v964 = vld [vmem:[%s819 + $0x152] sm:$0xff]
      %v965 = vld [vmem:[%s819 + $0x15a] sm:$0xff]
      %v966 = vld [vmem:[%s819 + $0x17a] sm:$0xff]
      %v967 = vld [vmem:[%s819 + $0x182] sm:$0xff]
      %v968 = vld [vmem:[%s819 + $0x1a2] sm:$0xff]
      %v969 = vld [vmem:[%s819 + $0x1aa] sm:$0xff]
      %v970 = vld [vmem:[%s819 + $0x1ca] sm:$0xff]
      %v971 = vld [vmem:[%s819 + $0x1d2] sm:$0xff]
      %v972 = vld [vmem:[%s819 + $0x1f2] sm:$0xff]
      %v973 = vld [vmem:[%s819 + $0x1fa] sm:$0xff]
      %v974 = vld [vmem:[%s819 + $0x21a] sm:$0xff]
      %v975 = vld [vmem:[%s819 + $0x222] sm:$0xff]
      %v976 = vld [vmem:[%s819 + $0x242] sm:$0xff]
      %v977 = vld [vmem:[%s819 + $0x24a] sm:$0xff]
      %v978 = vld [vmem:[%s819 + $0x26a] sm:$0xff]
      %v979 = vld [vmem:[%s819 + $0x272] sm:$0xff]
      %s980 = scalar_lea.vmem [#allocation2], 160
      %v981 = vld [vmem:[%s980 + $0xe] sm:$0xff]
      %v982 = vld [vmem:[%s980 + $0x16] sm:$0xff]
      %v983 = vld [vmem:[%s980 + $0x36] sm:$0xff]
      %v984 = vld [vmem:[%s980 + $0x3e] sm:$0xff]
      %v985 = vld [vmem:[%s980 + $0x5e] sm:$0xff]
      %v986 = vld [vmem:[%s980 + $0x66] sm:$0xff]
      %v987 = vld [vmem:[%s980 + $0x86] sm:$0xff]
      %v988 = vld [vmem:[%s980 + $0x8e] sm:$0xff]
      %v989 = vld [vmem:[%s980 + $0xae] sm:$0xff]
      %v990 = vld [vmem:[%s980 + $0xb6] sm:$0xff]
      %v991 = vld [vmem:[%s980 + $0xd6] sm:$0xff]
      %v992 = vld [vmem:[%s980 + $0xde] sm:$0xff]
      %v993 = vld [vmem:[%s980 + $0xfe] sm:$0xff]
      %v994 = vld [vmem:[%s980 + $0x106] sm:$0xff]
      %v995 = vld [vmem:[%s980 + $0x126] sm:$0xff]
      %v996 = vld [vmem:[%s980 + $0x12e] sm:$0xff]
      %v997 = vld [vmem:[%s980 + $0x14e] sm:$0xff]
      %v998 = vld [vmem:[%s980 + $0x156] sm:$0xff]
      %v999 = vld [vmem:[%s980 + $0x176] sm:$0xff]
      %v1000 = vld [vmem:[%s980 + $0x17e] sm:$0xff]
      %v1001 = vld [vmem:[%s980 + $0x19e] sm:$0xff]
      %v1002 = vld [vmem:[%s980 + $0x1a6] sm:$0xff]
      %v1003 = vld [vmem:[%s980 + $0x1c6] sm:$0xff]
      %v1004 = vld [vmem:[%s980 + $0x1ce] sm:$0xff]
      %v1005 = vld [vmem:[%s980 + $0x1ee] sm:$0xff]
      %v1006 = vld [vmem:[%s980 + $0x1f6] sm:$0xff]
      %v1007 = vld [vmem:[%s980 + $0x216] sm:$0xff]
      %v1008 = vld [vmem:[%s980 + $0x21e] sm:$0xff]
      %v1009 = vld [vmem:[%s980 + $0x23e] sm:$0xff]
      %v1010 = vld [vmem:[%s980 + $0x246] sm:$0xff]
      %v1011 = vld [vmem:[%s980 + $0x266] sm:$0xff]
      %v1012 = vld [vmem:[%s980 + $0x26e] sm:$0xff]
      %v1013 = vld [vmem:[%s980 + $0xf] sm:$0xff]
      %v1014 = vld [vmem:[%s980 + $0x17] sm:$0xff]
      %v1015 = vld [vmem:[%s980 + $0x37] sm:$0xff]
      %v1016 = vld [vmem:[%s980 + $0x3f] sm:$0xff]
      %v1017 = vld [vmem:[%s980 + $0x5f] sm:$0xff]
      %v1018 = vld [vmem:[%s980 + $0x67] sm:$0xff]
      %v1019 = vld [vmem:[%s980 + $0x87] sm:$0xff]
      %v1020 = vld [vmem:[%s980 + $0x8f] sm:$0xff]
      %v1021 = vld [vmem:[%s980 + $0xaf] sm:$0xff]
      %v1022 = vld [vmem:[%s980 + $0xb7] sm:$0xff]
      %v1023 = vld [vmem:[%s980 + $0xd7] sm:$0xff]
      %v1024 = vld [vmem:[%s980 + $0xdf] sm:$0xff]
      %v1025 = vld [vmem:[%s980 + $0xff] sm:$0xff]
      %v1026 = vld [vmem:[%s980 + $0x107] sm:$0xff]
      %v1027 = vld [vmem:[%s980 + $0x127] sm:$0xff]
      %v1028 = vld [vmem:[%s980 + $0x12f] sm:$0xff]
      %v1029 = vld [vmem:[%s980 + $0x14f] sm:$0xff]
      %v1030 = vld [vmem:[%s980 + $0x157] sm:$0xff]
      %v1031 = vld [vmem:[%s980 + $0x177] sm:$0xff]
      %v1032 = vld [vmem:[%s980 + $0x17f] sm:$0xff]
      %v1033 = vld [vmem:[%s980 + $0x19f] sm:$0xff]
      %v1034 = vld [vmem:[%s980 + $0x1a7] sm:$0xff]
      %v1035 = vld [vmem:[%s980 + $0x1c7] sm:$0xff]
      %v1036 = vld [vmem:[%s980 + $0x1cf] sm:$0xff]
      %v1037 = vld [vmem:[%s980 + $0x1ef] sm:$0xff]
      %v1038 = vld [vmem:[%s980 + $0x1f7] sm:$0xff]
      %v1039 = vld [vmem:[%s980 + $0x217] sm:$0xff]
      %v1040 = vld [vmem:[%s980 + $0x21f] sm:$0xff]
      %v1041 = vld [vmem:[%s980 + $0x23f] sm:$0xff]
      %v1042 = vld [vmem:[%s980 + $0x247] sm:$0xff]
      %v1043 = vld [vmem:[%s980 + $0x267] sm:$0xff]
      %v1044 = vld [vmem:[%s980 + $0x26f] sm:$0xff]
      %v1045 = vld [vmem:[%s980 + $0x10] sm:$0xff]
      %v1046 = vld [vmem:[%s980 + $0x18] sm:$0xff]
      %v1047 = vld [vmem:[%s980 + $0x38] sm:$0xff]
      %v1048 = vld [vmem:[%s980 + $0x40] sm:$0xff]
      %v1049 = vld [vmem:[%s980 + $0x60] sm:$0xff]
      %v1050 = vld [vmem:[%s980 + $0x68] sm:$0xff]
      %v1051 = vld [vmem:[%s980 + $0x88] sm:$0xff]
      %v1052 = vld [vmem:[%s980 + $0x90] sm:$0xff]
      %v1053 = vld [vmem:[%s980 + $0xb0] sm:$0xff]
      %v1054 = vld [vmem:[%s980 + $0xb8] sm:$0xff]
      %v1055 = vld [vmem:[%s980 + $0xd8] sm:$0xff]
      %v1056 = vld [vmem:[%s980 + $0xe0] sm:$0xff]
      %v1057 = vld [vmem:[%s980 + $0x100] sm:$0xff]
      %v1058 = vld [vmem:[%s980 + $0x108] sm:$0xff]
      %v1059 = vld [vmem:[%s980 + $0x128] sm:$0xff]
      %v1060 = vld [vmem:[%s980 + $0x130] sm:$0xff]
      %v1061 = vld [vmem:[%s980 + $0x150] sm:$0xff]
      %v1062 = vld [vmem:[%s980 + $0x158] sm:$0xff]
      %v1063 = vld [vmem:[%s980 + $0x178] sm:$0xff]
      %v1064 = vld [vmem:[%s980 + $0x180] sm:$0xff]
      %v1065 = vld [vmem:[%s980 + $0x1a0] sm:$0xff]
      %v1066 = vld [vmem:[%s980 + $0x1a8] sm:$0xff]
      %v1067 = vld [vmem:[%s980 + $0x1c8] sm:$0xff]
      %v1068 = vld [vmem:[%s980 + $0x1d0] sm:$0xff]
      %v1069 = vld [vmem:[%s980 + $0x1f0] sm:$0xff]
      %v1070 = vld [vmem:[%s980 + $0x1f8] sm:$0xff]
      %v1071 = vld [vmem:[%s980 + $0x218] sm:$0xff]
      %v1072 = vld [vmem:[%s980 + $0x220] sm:$0xff]
      %v1073 = vld [vmem:[%s980 + $0x240] sm:$0xff]
      %v1074 = vld [vmem:[%s980 + $0x248] sm:$0xff]
      %v1075 = vld [vmem:[%s980 + $0x268] sm:$0xff]
      %v1076 = vld [vmem:[%s980 + $0x270] sm:$0xff]
      %v1077 = vld [vmem:[%s980 + $0x11] sm:$0xff]
      %v1078 = vld [vmem:[%s980 + $0x19] sm:$0xff]
      %v1079 = vld [vmem:[%s980 + $0x39] sm:$0xff]
      %v1080 = vld [vmem:[%s980 + $0x41] sm:$0xff]
      %v1081 = vld [vmem:[%s980 + $0x61] sm:$0xff]
      %v1082 = vld [vmem:[%s980 + $0x69] sm:$0xff]
      %v1083 = vld [vmem:[%s980 + $0x89] sm:$0xff]
      %v1084 = vld [vmem:[%s980 + $0x91] sm:$0xff]
      %v1085 = vld [vmem:[%s980 + $0xb1] sm:$0xff]
      %v1086 = vld [vmem:[%s980 + $0xb9] sm:$0xff]
      %v1087 = vld [vmem:[%s980 + $0xd9] sm:$0xff]
      %v1088 = vld [vmem:[%s980 + $0xe1] sm:$0xff]
      %v1089 = vld [vmem:[%s980 + $0x101] sm:$0xff]
      %v1090 = vld [vmem:[%s980 + $0x109] sm:$0xff]
      %v1091 = vld [vmem:[%s980 + $0x129] sm:$0xff]
      %v1092 = vld [vmem:[%s980 + $0x131] sm:$0xff]
      %v1093 = vld [vmem:[%s980 + $0x151] sm:$0xff]
      %v1094 = vld [vmem:[%s980 + $0x159] sm:$0xff]
      %v1095 = vld [vmem:[%s980 + $0x179] sm:$0xff]
      %v1096 = vld [vmem:[%s980 + $0x181] sm:$0xff]
      %v1097 = vld [vmem:[%s980 + $0x1a1] sm:$0xff]
      %v1098 = vld [vmem:[%s980 + $0x1a9] sm:$0xff]
      %v1099 = vld [vmem:[%s980 + $0x1c9] sm:$0xff]
      %v1100 = vld [vmem:[%s980 + $0x1d1] sm:$0xff]
      %v1101 = vld [vmem:[%s980 + $0x1f1] sm:$0xff]
      %v1102 = vld [vmem:[%s980 + $0x1f9] sm:$0xff]
      %v1103 = vld [vmem:[%s980 + $0x219] sm:$0xff]
      %v1104 = vld [vmem:[%s980 + $0x221] sm:$0xff]
      %v1105 = vld [vmem:[%s980 + $0x241] sm:$0xff]
      %v1106 = vld [vmem:[%s980 + $0x249] sm:$0xff]
      %v1107 = vld [vmem:[%s980 + $0x269] sm:$0xff]
      %v1108 = vld [vmem:[%s980 + $0x271] sm:$0xff]
      %v1109 = vld [vmem:[%s980 + $0x12] sm:$0xff]
      %v1110 = vld [vmem:[%s980 + $0x1a] sm:$0xff]
      %v1111 = vld [vmem:[%s980 + $0x3a] sm:$0xff]
      %v1112 = vld [vmem:[%s980 + $0x42] sm:$0xff]
      %v1113 = vld [vmem:[%s980 + $0x62] sm:$0xff]
      %v1114 = vld [vmem:[%s980 + $0x6a] sm:$0xff]
      %v1115 = vld [vmem:[%s980 + $0x8a] sm:$0xff]
      %v1116 = vld [vmem:[%s980 + $0x92] sm:$0xff]
      %v1117 = vld [vmem:[%s980 + $0xb2] sm:$0xff]
      %v1118 = vld [vmem:[%s980 + $0xba] sm:$0xff]
      %v1119 = vld [vmem:[%s980 + $0xda] sm:$0xff]
      %v1120 = vld [vmem:[%s980 + $0xe2] sm:$0xff]
      %v1121 = vld [vmem:[%s980 + $0x102] sm:$0xff]
      %v1122 = vld [vmem:[%s980 + $0x10a] sm:$0xff]
      %v1123 = vld [vmem:[%s980 + $0x12a] sm:$0xff]
      %v1124 = vld [vmem:[%s980 + $0x132] sm:$0xff]
      %v1125 = vld [vmem:[%s980 + $0x152] sm:$0xff]
      %v1126 = vld [vmem:[%s980 + $0x15a] sm:$0xff]
      %v1127 = vld [vmem:[%s980 + $0x17a] sm:$0xff]
      %v1128 = vld [vmem:[%s980 + $0x182] sm:$0xff]
      %v1129 = vld [vmem:[%s980 + $0x1a2] sm:$0xff]
      %v1130 = vld [vmem:[%s980 + $0x1aa] sm:$0xff]
      %v1131 = vld [vmem:[%s980 + $0x1ca] sm:$0xff]
      %v1132 = vld [vmem:[%s980 + $0x1d2] sm:$0xff]
      %v1133 = vld [vmem:[%s980 + $0x1f2] sm:$0xff]
      %v1134 = vld [vmem:[%s980 + $0x1fa] sm:$0xff]
      %v1135 = vld [vmem:[%s980 + $0x21a] sm:$0xff]
      %v1136 = vld [vmem:[%s980 + $0x222] sm:$0xff]
      %v1137 = vld [vmem:[%s980 + $0x242] sm:$0xff]
      %v1138 = vld [vmem:[%s980 + $0x24a] sm:$0xff]
      %v1139 = vld [vmem:[%s980 + $0x26a] sm:$0xff]
      %v1140 = vld [vmem:[%s980 + $0x272] sm:$0xff]
      %1173 = vrot.lane.b32.xlu0 %v370, 4
      %v1174 = vpop.permute.xlu0 %1173
      %1175 = vrot.lane.b32.xlu0 %v371, 4
      %v1176 = vpop.permute.xlu0 %1175
      %1177 = vrot.lane.b32.xlu0 %v372, 4
      %v1178 = vpop.permute.xlu0 %1177
      %1179 = vrot.lane.b32.xlu0 %v373, 4
      %v1180 = vpop.permute.xlu0 %1179
      %1181 = vrot.lane.b32.xlu0 %v374, 4
      %v1182 = vpop.permute.xlu0 %1181
      %1183 = vrot.lane.b32.xlu0 %v375, 4
      %v1184 = vpop.permute.xlu0 %1183
      %1185 = vrot.lane.b32.xlu0 %v376, 4
      %v1186 = vpop.permute.xlu0 %1185
      %1187 = vrot.lane.b32.xlu0 %v377, 4
      %v1188 = vpop.permute.xlu0 %1187
      %1189 = vrot.lane.b32.xlu0 %v378, 4
      %v1190 = vpop.permute.xlu0 %1189
      %1191 = vrot.lane.b32.xlu0 %v379, 4
      %v1192 = vpop.permute.xlu0 %1191
      %1193 = vrot.lane.b32.xlu0 %v380, 4
      %v1194 = vpop.permute.xlu0 %1193
      %1195 = vrot.lane.b32.xlu0 %v381, 4
      %v1196 = vpop.permute.xlu0 %1195
      %1197 = vrot.lane.b32.xlu0 %v382, 4
      %v1198 = vpop.permute.xlu0 %1197
      %1199 = vrot.lane.b32.xlu0 %v383, 4
      %v1200 = vpop.permute.xlu0 %1199
      %1201 = vrot.lane.b32.xlu0 %v384, 4
      %v1202 = vpop.permute.xlu0 %1201
      %1203 = vrot.lane.b32.xlu0 %v385, 4
      %v1204 = vpop.permute.xlu0 %1203
      %1205 = vrot.lane.b32.xlu0 %v386, 4
      %v1206 = vpop.permute.xlu0 %1205
      %1207 = vrot.lane.b32.xlu0 %v387, 4
      %v1208 = vpop.permute.xlu0 %1207
      %1209 = vrot.lane.b32.xlu0 %v388, 4
      %v1210 = vpop.permute.xlu0 %1209
      %1211 = vrot.lane.b32.xlu0 %v389, 4
      %v1212 = vpop.permute.xlu0 %1211
      %1213 = vrot.lane.b32.xlu0 %v390, 4
      %v1214 = vpop.permute.xlu0 %1213
      %1215 = vrot.lane.b32.xlu0 %v391, 4
      %v1216 = vpop.permute.xlu0 %1215
      %1217 = vrot.lane.b32.xlu0 %v392, 4
      %v1218 = vpop.permute.xlu0 %1217
      %1219 = vrot.lane.b32.xlu0 %v393, 4
      %v1220 = vpop.permute.xlu0 %1219
      %1221 = vrot.lane.b32.xlu0 %v394, 4
      %v1222 = vpop.permute.xlu0 %1221
      %1223 = vrot.lane.b32.xlu0 %v395, 4
      %v1224 = vpop.permute.xlu0 %1223
      %1225 = vrot.lane.b32.xlu0 %v396, 4
      %v1226 = vpop.permute.xlu0 %1225
      %1227 = vrot.lane.b32.xlu0 %v397, 4
      %v1228 = vpop.permute.xlu0 %1227
      %1229 = vrot.lane.b32.xlu0 %v398, 4
      %v1230 = vpop.permute.xlu0 %1229
      %1231 = vrot.lane.b32.xlu0 %v399, 4
      %v1232 = vpop.permute.xlu0 %1231
      %1233 = vrot.lane.b32.xlu0 %v400, 4
      %v1234 = vpop.permute.xlu0 %1233
      %1235 = vrot.lane.b32.xlu0 %v401, 4
      %v1236 = vpop.permute.xlu0 %1235
      %1301 = vrot.lane.b32.xlu0 %v402, 8
      %v1302 = vpop.permute.xlu0 %1301
      %1303 = vrot.lane.b32.xlu0 %v403, 8
      %v1304 = vpop.permute.xlu0 %1303
      %1305 = vrot.lane.b32.xlu0 %v404, 8
      %v1306 = vpop.permute.xlu0 %1305
      %1307 = vrot.lane.b32.xlu0 %v405, 8
      %v1308 = vpop.permute.xlu0 %1307
      %1309 = vrot.lane.b32.xlu0 %v406, 8
      %v1310 = vpop.permute.xlu0 %1309
      %1311 = vrot.lane.b32.xlu0 %v407, 8
      %v1312 = vpop.permute.xlu0 %1311
      %1313 = vrot.lane.b32.xlu0 %v408, 8
      %v1314 = vpop.permute.xlu0 %1313
      %1315 = vrot.lane.b32.xlu0 %v409, 8
      %v1316 = vpop.permute.xlu0 %1315
      %1317 = vrot.lane.b32.xlu0 %v410, 8
      %v1318 = vpop.permute.xlu0 %1317
      %1319 = vrot.lane.b32.xlu0 %v411, 8
      %v1320 = vpop.permute.xlu0 %1319
      %1321 = vrot.lane.b32.xlu0 %v412, 8
      %v1322 = vpop.permute.xlu0 %1321
      %1323 = vrot.lane.b32.xlu0 %v413, 8
      %v1324 = vpop.permute.xlu0 %1323
      %1325 = vrot.lane.b32.xlu0 %v414, 8
      %v1326 = vpop.permute.xlu0 %1325
      %1327 = vrot.lane.b32.xlu0 %v415, 8
      %v1328 = vpop.permute.xlu0 %1327
      %1329 = vrot.lane.b32.xlu0 %v416, 8
      %v1330 = vpop.permute.xlu0 %1329
      %1331 = vrot.lane.b32.xlu0 %v417, 8
      %v1332 = vpop.permute.xlu0 %1331
      %1333 = vrot.lane.b32.xlu0 %v418, 8
      %v1334 = vpop.permute.xlu0 %1333
      %1335 = vrot.lane.b32.xlu0 %v419, 8
      %v1336 = vpop.permute.xlu0 %1335
      %1337 = vrot.lane.b32.xlu0 %v420, 8
      %v1338 = vpop.permute.xlu0 %1337
      %1339 = vrot.lane.b32.xlu0 %v421, 8
      %v1340 = vpop.permute.xlu0 %1339
      %1341 = vrot.lane.b32.xlu0 %v422, 8
      %v1342 = vpop.permute.xlu0 %1341
      %1343 = vrot.lane.b32.xlu0 %v423, 8
      %v1344 = vpop.permute.xlu0 %1343
      %1345 = vrot.lane.b32.xlu0 %v424, 8
      %v1346 = vpop.permute.xlu0 %1345
      %1347 = vrot.lane.b32.xlu0 %v425, 8
      %v1348 = vpop.permute.xlu0 %1347
      %1349 = vrot.lane.b32.xlu0 %v426, 8
      %v1350 = vpop.permute.xlu0 %1349
      %1351 = vrot.lane.b32.xlu0 %v427, 8
      %v1352 = vpop.permute.xlu0 %1351
      %1353 = vrot.lane.b32.xlu0 %v428, 8
      %v1354 = vpop.permute.xlu0 %1353
      %1355 = vrot.lane.b32.xlu0 %v429, 8
      %v1356 = vpop.permute.xlu0 %1355
      %1357 = vrot.lane.b32.xlu0 %v430, 8
      %v1358 = vpop.permute.xlu0 %1357
      %1359 = vrot.lane.b32.xlu0 %v431, 8
      %v1360 = vpop.permute.xlu0 %1359
      %1361 = vrot.lane.b32.xlu0 %v432, 8
      %v1362 = vpop.permute.xlu0 %1361
      %1363 = vrot.lane.b32.xlu0 %v433, 8
      %v1364 = vpop.permute.xlu0 %1363
      %1429 = vrot.lane.b32.xlu0 %v434, 12
      %v1430 = vpop.permute.xlu0 %1429
      %1431 = vrot.lane.b32.xlu0 %v435, 12
      %v1432 = vpop.permute.xlu0 %1431
      %1433 = vrot.lane.b32.xlu0 %v436, 12
      %v1434 = vpop.permute.xlu0 %1433
      %1435 = vrot.lane.b32.xlu0 %v437, 12
      %v1436 = vpop.permute.xlu0 %1435
      %1437 = vrot.lane.b32.xlu0 %v438, 12
      %v1438 = vpop.permute.xlu0 %1437
      %1439 = vrot.lane.b32.xlu0 %v439, 12
      %v1440 = vpop.permute.xlu0 %1439
      %1441 = vrot.lane.b32.xlu0 %v440, 12
      %v1442 = vpop.permute.xlu0 %1441
      %1443 = vrot.lane.b32.xlu0 %v441, 12
      %v1444 = vpop.permute.xlu0 %1443
      %1445 = vrot.lane.b32.xlu0 %v442, 12
      %v1446 = vpop.permute.xlu0 %1445
      %1447 = vrot.lane.b32.xlu0 %v443, 12
      %v1448 = vpop.permute.xlu0 %1447
      %1449 = vrot.lane.b32.xlu0 %v444, 12
      %v1450 = vpop.permute.xlu0 %1449
      %1451 = vrot.lane.b32.xlu0 %v445, 12
      %v1452 = vpop.permute.xlu0 %1451
      %1453 = vrot.lane.b32.xlu0 %v446, 12
      %v1454 = vpop.permute.xlu0 %1453
      %1455 = vrot.lane.b32.xlu0 %v447, 12
      %v1456 = vpop.permute.xlu0 %1455
      %1457 = vrot.lane.b32.xlu0 %v448, 12
      %v1458 = vpop.permute.xlu0 %1457
      %1459 = vrot.lane.b32.xlu0 %v449, 12
      %v1460 = vpop.permute.xlu0 %1459
      %1461 = vrot.lane.b32.xlu0 %v450, 12
      %v1462 = vpop.permute.xlu0 %1461
      %1463 = vrot.lane.b32.xlu0 %v451, 12
      %v1464 = vpop.permute.xlu0 %1463
      %1465 = vrot.lane.b32.xlu0 %v452, 12
      %v1466 = vpop.permute.xlu0 %1465
      %1467 = vrot.lane.b32.xlu0 %v453, 12
      %v1468 = vpop.permute.xlu0 %1467
      %1469 = vrot.lane.b32.xlu0 %v454, 12
      %v1470 = vpop.permute.xlu0 %1469
      %1471 = vrot.lane.b32.xlu0 %v455, 12
      %v1472 = vpop.permute.xlu0 %1471
      %1473 = vrot.lane.b32.xlu0 %v456, 12
      %v1474 = vpop.permute.xlu0 %1473
      %1475 = vrot.lane.b32.xlu0 %v457, 12
      %v1476 = vpop.permute.xlu0 %1475
      %1477 = vrot.lane.b32.xlu0 %v458, 12
      %v1478 = vpop.permute.xlu0 %1477
      %1479 = vrot.lane.b32.xlu0 %v459, 12
      %v1480 = vpop.permute.xlu0 %1479
      %1481 = vrot.lane.b32.xlu0 %v460, 12
      %v1482 = vpop.permute.xlu0 %1481
      %1483 = vrot.lane.b32.xlu0 %v461, 12
      %v1484 = vpop.permute.xlu0 %1483
      %1485 = vrot.lane.b32.xlu0 %v462, 12
      %v1486 = vpop.permute.xlu0 %1485
      %1487 = vrot.lane.b32.xlu0 %v463, 12
      %v1488 = vpop.permute.xlu0 %1487
      %1489 = vrot.lane.b32.xlu0 %v464, 12
      %v1490 = vpop.permute.xlu0 %1489
      %1491 = vrot.lane.b32.xlu0 %v465, 12
      %v1492 = vpop.permute.xlu0 %1491
      %1557 = vrot.lane.b32.xlu0 %v466, 16
      %v1558 = vpop.permute.xlu0 %1557
      %1559 = vrot.lane.b32.xlu0 %v467, 16
      %v1560 = vpop.permute.xlu0 %1559
      %1561 = vrot.lane.b32.xlu0 %v468, 16
      %v1562 = vpop.permute.xlu0 %1561
      %1563 = vrot.lane.b32.xlu0 %v469, 16
      %v1564 = vpop.permute.xlu0 %1563
      %1565 = vrot.lane.b32.xlu0 %v470, 16
      %v1566 = vpop.permute.xlu0 %1565
      %1567 = vrot.lane.b32.xlu0 %v471, 16
      %v1568 = vpop.permute.xlu0 %1567
      %1569 = vrot.lane.b32.xlu0 %v472, 16
      %v1570 = vpop.permute.xlu0 %1569
      %1571 = vrot.lane.b32.xlu0 %v473, 16
      %v1572 = vpop.permute.xlu0 %1571
      %1573 = vrot.lane.b32.xlu0 %v474, 16
      %v1574 = vpop.permute.xlu0 %1573
      %1575 = vrot.lane.b32.xlu0 %v475, 16
      %v1576 = vpop.permute.xlu0 %1575
      %1577 = vrot.lane.b32.xlu0 %v476, 16
      %v1578 = vpop.permute.xlu0 %1577
      %1579 = vrot.lane.b32.xlu0 %v477, 16
      %v1580 = vpop.permute.xlu0 %1579
      %1581 = vrot.lane.b32.xlu0 %v478, 16
      %v1582 = vpop.permute.xlu0 %1581
      %1583 = vrot.lane.b32.xlu0 %v479, 16
      %v1584 = vpop.permute.xlu0 %1583
      %1585 = vrot.lane.b32.xlu0 %v480, 16
      %v1586 = vpop.permute.xlu0 %1585
      %1587 = vrot.lane.b32.xlu0 %v481, 16
      %v1588 = vpop.permute.xlu0 %1587
      %1589 = vrot.lane.b32.xlu0 %v482, 16
      %v1590 = vpop.permute.xlu0 %1589
      %1591 = vrot.lane.b32.xlu0 %v483, 16
      %v1592 = vpop.permute.xlu0 %1591
      %1593 = vrot.lane.b32.xlu0 %v484, 16
      %v1594 = vpop.permute.xlu0 %1593
      %1595 = vrot.lane.b32.xlu0 %v485, 16
      %v1596 = vpop.permute.xlu0 %1595
      %1597 = vrot.lane.b32.xlu0 %v486, 16
      %v1598 = vpop.permute.xlu0 %1597
      %1599 = vrot.lane.b32.xlu0 %v487, 16
      %v1600 = vpop.permute.xlu0 %1599
      %1601 = vrot.lane.b32.xlu0 %v488, 16
      %v1602 = vpop.permute.xlu0 %1601
      %1603 = vrot.lane.b32.xlu0 %v489, 16
      %v1604 = vpop.permute.xlu0 %1603
      %1605 = vrot.lane.b32.xlu0 %v490, 16
      %v1606 = vpop.permute.xlu0 %1605
      %1607 = vrot.lane.b32.xlu0 %v491, 16
      %v1608 = vpop.permute.xlu0 %1607
      %1609 = vrot.lane.b32.xlu0 %v492, 16
      %v1610 = vpop.permute.xlu0 %1609
      %1611 = vrot.lane.b32.xlu0 %v493, 16
      %v1612 = vpop.permute.xlu0 %1611
      %1613 = vrot.lane.b32.xlu0 %v494, 16
      %v1614 = vpop.permute.xlu0 %1613
      %1615 = vrot.lane.b32.xlu0 %v495, 16
      %v1616 = vpop.permute.xlu0 %1615
      %1617 = vrot.lane.b32.xlu0 %v496, 16
      %v1618 = vpop.permute.xlu0 %1617
      %1619 = vrot.lane.b32.xlu0 %v497, 16
      %v1620 = vpop.permute.xlu0 %1619
      %1685 = vrot.lane.b32.xlu0 %v499, 20
      %v1686 = vpop.permute.xlu0 %1685
      %1687 = vrot.lane.b32.xlu0 %v500, 20
      %v1688 = vpop.permute.xlu0 %1687
      %1689 = vrot.lane.b32.xlu0 %v501, 20
      %v1690 = vpop.permute.xlu0 %1689
      %1691 = vrot.lane.b32.xlu0 %v502, 20
      %v1692 = vpop.permute.xlu0 %1691
      %1693 = vrot.lane.b32.xlu0 %v503, 20
      %v1694 = vpop.permute.xlu0 %1693
      %1695 = vrot.lane.b32.xlu0 %v504, 20
      %v1696 = vpop.permute.xlu0 %1695
      %1697 = vrot.lane.b32.xlu0 %v505, 20
      %v1698 = vpop.permute.xlu0 %1697
      %1699 = vrot.lane.b32.xlu0 %v506, 20
      %v1700 = vpop.permute.xlu0 %1699
      %1701 = vrot.lane.b32.xlu0 %v507, 20
      %v1702 = vpop.permute.xlu0 %1701
      %1703 = vrot.lane.b32.xlu0 %v508, 20
      %v1704 = vpop.permute.xlu0 %1703
      %1705 = vrot.lane.b32.xlu0 %v509, 20
      %v1706 = vpop.permute.xlu0 %1705
      %1707 = vrot.lane.b32.xlu0 %v510, 20
      %v1708 = vpop.permute.xlu0 %1707
      %1709 = vrot.lane.b32.xlu0 %v511, 20
      %v1710 = vpop.permute.xlu0 %1709
      %1711 = vrot.lane.b32.xlu0 %v512, 20
      %v1712 = vpop.permute.xlu0 %1711
      %1713 = vrot.lane.b32.xlu0 %v513, 20
      %v1714 = vpop.permute.xlu0 %1713
      %1715 = vrot.lane.b32.xlu0 %v514, 20
      %v1716 = vpop.permute.xlu0 %1715
      %1717 = vrot.lane.b32.xlu0 %v515, 20
      %v1718 = vpop.permute.xlu0 %1717
      %1719 = vrot.lane.b32.xlu0 %v516, 20
      %v1720 = vpop.permute.xlu0 %1719
      %1721 = vrot.lane.b32.xlu0 %v517, 20
      %v1722 = vpop.permute.xlu0 %1721
      %1723 = vrot.lane.b32.xlu0 %v518, 20
      %v1724 = vpop.permute.xlu0 %1723
      %1725 = vrot.lane.b32.xlu0 %v519, 20
      %v1726 = vpop.permute.xlu0 %1725
      %1727 = vrot.lane.b32.xlu0 %v520, 20
      %v1728 = vpop.permute.xlu0 %1727
      %1729 = vrot.lane.b32.xlu0 %v521, 20
      %v1730 = vpop.permute.xlu0 %1729
      %1731 = vrot.lane.b32.xlu0 %v522, 20
      %v1732 = vpop.permute.xlu0 %1731
      %1733 = vrot.lane.b32.xlu0 %v523, 20
      %v1734 = vpop.permute.xlu0 %1733
      %1735 = vrot.lane.b32.xlu0 %v524, 20
      %v1736 = vpop.permute.xlu0 %1735
      %1737 = vrot.lane.b32.xlu0 %v525, 20
      %v1738 = vpop.permute.xlu0 %1737
      %1739 = vrot.lane.b32.xlu0 %v526, 20
      %v1740 = vpop.permute.xlu0 %1739
      %1741 = vrot.lane.b32.xlu0 %v527, 20
      %v1742 = vpop.permute.xlu0 %1741
      %1743 = vrot.lane.b32.xlu0 %v528, 20
      %v1744 = vpop.permute.xlu0 %1743
      %1745 = vrot.lane.b32.xlu0 %v529, 20
      %v1746 = vpop.permute.xlu0 %1745
      %1747 = vrot.lane.b32.xlu0 %v530, 20
      %v1748 = vpop.permute.xlu0 %1747
      %1813 = vrot.lane.b32.xlu0 %v531, 24
      %v1814 = vpop.permute.xlu0 %1813
      %1815 = vrot.lane.b32.xlu0 %v532, 24
      %v1816 = vpop.permute.xlu0 %1815
      %1817 = vrot.lane.b32.xlu0 %v533, 24
      %v1818 = vpop.permute.xlu0 %1817
      %1819 = vrot.lane.b32.xlu0 %v534, 24
      %v1820 = vpop.permute.xlu0 %1819
      %1821 = vrot.lane.b32.xlu0 %v535, 24
      %v1822 = vpop.permute.xlu0 %1821
      %1823 = vrot.lane.b32.xlu0 %v536, 24
      %v1824 = vpop.permute.xlu0 %1823
      %1825 = vrot.lane.b32.xlu0 %v537, 24
      %v1826 = vpop.permute.xlu0 %1825
      %1827 = vrot.lane.b32.xlu0 %v538, 24
      %v1828 = vpop.permute.xlu0 %1827
      %1829 = vrot.lane.b32.xlu0 %v539, 24
      %v1830 = vpop.permute.xlu0 %1829
      %1831 = vrot.lane.b32.xlu0 %v540, 24
      %v1832 = vpop.permute.xlu0 %1831
      %1833 = vrot.lane.b32.xlu0 %v541, 24
      %v1834 = vpop.permute.xlu0 %1833
      %1835 = vrot.lane.b32.xlu0 %v542, 24
      %v1836 = vpop.permute.xlu0 %1835
      %1837 = vrot.lane.b32.xlu0 %v543, 24
      %v1838 = vpop.permute.xlu0 %1837
      %1839 = vrot.lane.b32.xlu0 %v544, 24
      %v1840 = vpop.permute.xlu0 %1839
      %1841 = vrot.lane.b32.xlu0 %v545, 24
      %v1842 = vpop.permute.xlu0 %1841
      %1843 = vrot.lane.b32.xlu0 %v546, 24
      %v1844 = vpop.permute.xlu0 %1843
      %1845 = vrot.lane.b32.xlu0 %v547, 24
      %v1846 = vpop.permute.xlu0 %1845
      %1847 = vrot.lane.b32.xlu0 %v548, 24
      %v1848 = vpop.permute.xlu0 %1847
      %1849 = vrot.lane.b32.xlu0 %v549, 24
      %v1850 = vpop.permute.xlu0 %1849
      %1851 = vrot.lane.b32.xlu0 %v550, 24
      %v1852 = vpop.permute.xlu0 %1851
      %1853 = vrot.lane.b32.xlu0 %v551, 24
      %v1854 = vpop.permute.xlu0 %1853
      %1855 = vrot.lane.b32.xlu0 %v552, 24
      %v1856 = vpop.permute.xlu0 %1855
      %1857 = vrot.lane.b32.xlu0 %v553, 24
      %v1858 = vpop.permute.xlu0 %1857
      %1859 = vrot.lane.b32.xlu0 %v554, 24
      %v1860 = vpop.permute.xlu0 %1859
      %1861 = vrot.lane.b32.xlu0 %v555, 24
      %v1862 = vpop.permute.xlu0 %1861
      %1863 = vrot.lane.b32.xlu0 %v556, 24
      %v1864 = vpop.permute.xlu0 %1863
      %1865 = vrot.lane.b32.xlu0 %v557, 24
      %v1866 = vpop.permute.xlu0 %1865
      %1867 = vrot.lane.b32.xlu0 %v558, 24
      %v1868 = vpop.permute.xlu0 %1867
      %1869 = vrot.lane.b32.xlu0 %v559, 24
      %v1870 = vpop.permute.xlu0 %1869
      %1871 = vrot.lane.b32.xlu0 %v560, 24
      %v1872 = vpop.permute.xlu0 %1871
      %1873 = vrot.lane.b32.xlu0 %v561, 24
      %v1874 = vpop.permute.xlu0 %1873
      %1875 = vrot.lane.b32.xlu0 %v562, 24
      %v1876 = vpop.permute.xlu0 %1875
      %1941 = vrot.lane.b32.xlu0 %v563, 28
      %v1942 = vpop.permute.xlu0 %1941
      %1943 = vrot.lane.b32.xlu0 %v564, 28
      %v1944 = vpop.permute.xlu0 %1943
      %1945 = vrot.lane.b32.xlu0 %v565, 28
      %v1946 = vpop.permute.xlu0 %1945
      %1947 = vrot.lane.b32.xlu0 %v566, 28
      %v1948 = vpop.permute.xlu0 %1947
      %1949 = vrot.lane.b32.xlu0 %v567, 28
      %v1950 = vpop.permute.xlu0 %1949
      %1951 = vrot.lane.b32.xlu0 %v568, 28
      %v1952 = vpop.permute.xlu0 %1951
      %1953 = vrot.lane.b32.xlu0 %v569, 28
      %v1954 = vpop.permute.xlu0 %1953
      %1955 = vrot.lane.b32.xlu0 %v570, 28
      %v1956 = vpop.permute.xlu0 %1955
      %1957 = vrot.lane.b32.xlu0 %v571, 28
      %v1958 = vpop.permute.xlu0 %1957
      %1959 = vrot.lane.b32.xlu0 %v572, 28
      %v1960 = vpop.permute.xlu0 %1959
      %1961 = vrot.lane.b32.xlu0 %v573, 28
      %v1962 = vpop.permute.xlu0 %1961
      %1963 = vrot.lane.b32.xlu0 %v574, 28
      %v1964 = vpop.permute.xlu0 %1963
      %1965 = vrot.lane.b32.xlu0 %v575, 28
      %v1966 = vpop.permute.xlu0 %1965
      %1967 = vrot.lane.b32.xlu0 %v576, 28
      %v1968 = vpop.permute.xlu0 %1967
      %1969 = vrot.lane.b32.xlu0 %v577, 28
      %v1970 = vpop.permute.xlu0 %1969
      %1971 = vrot.lane.b32.xlu0 %v578, 28
      %v1972 = vpop.permute.xlu0 %1971
      %1973 = vrot.lane.b32.xlu0 %v579, 28
      %v1974 = vpop.permute.xlu0 %1973
      %1975 = vrot.lane.b32.xlu0 %v580, 28
      %v1976 = vpop.permute.xlu0 %1975
      %1977 = vrot.lane.b32.xlu0 %v581, 28
      %v1978 = vpop.permute.xlu0 %1977
      %1979 = vrot.lane.b32.xlu0 %v582, 28
      %v1980 = vpop.permute.xlu0 %1979
      %1981 = vrot.lane.b32.xlu0 %v583, 28
      %v1982 = vpop.permute.xlu0 %1981
      %1983 = vrot.lane.b32.xlu0 %v584, 28
      %v1984 = vpop.permute.xlu0 %1983
      %1985 = vrot.lane.b32.xlu0 %v585, 28
      %v1986 = vpop.permute.xlu0 %1985
      %1987 = vrot.lane.b32.xlu0 %v586, 28
      %v1988 = vpop.permute.xlu0 %1987
      %1989 = vrot.lane.b32.xlu0 %v587, 28
      %v1990 = vpop.permute.xlu0 %1989
      %1991 = vrot.lane.b32.xlu0 %v588, 28
      %v1992 = vpop.permute.xlu0 %1991
      %1993 = vrot.lane.b32.xlu0 %v589, 28
      %v1994 = vpop.permute.xlu0 %1993
      %1995 = vrot.lane.b32.xlu0 %v590, 28
      %v1996 = vpop.permute.xlu0 %1995
      %1997 = vrot.lane.b32.xlu0 %v591, 28
      %v1998 = vpop.permute.xlu0 %1997
      %1999 = vrot.lane.b32.xlu0 %v592, 28
      %v2000 = vpop.permute.xlu0 %1999
      %2001 = vrot.lane.b32.xlu0 %v593, 28
      %v2002 = vpop.permute.xlu0 %2001
      %2003 = vrot.lane.b32.xlu0 %v594, 28
      %v2004 = vpop.permute.xlu0 %2003
      %2069 = vrot.lane.b32.xlu0 %v595, 32
      %v2070 = vpop.permute.xlu0 %2069
      %2071 = vrot.lane.b32.xlu0 %v596, 32
      %v2072 = vpop.permute.xlu0 %2071
      %2073 = vrot.lane.b32.xlu0 %v597, 32
      %v2074 = vpop.permute.xlu0 %2073
      %2075 = vrot.lane.b32.xlu0 %v598, 32
      %v2076 = vpop.permute.xlu0 %2075
      %2077 = vrot.lane.b32.xlu0 %v599, 32
      %v2078 = vpop.permute.xlu0 %2077
      %2079 = vrot.lane.b32.xlu0 %v600, 32
      %v2080 = vpop.permute.xlu0 %2079
      %2081 = vrot.lane.b32.xlu0 %v601, 32
      %v2082 = vpop.permute.xlu0 %2081
      %2083 = vrot.lane.b32.xlu0 %v602, 32
      %v2084 = vpop.permute.xlu0 %2083
      %2085 = vrot.lane.b32.xlu0 %v603, 32
      %v2086 = vpop.permute.xlu0 %2085
      %2087 = vrot.lane.b32.xlu0 %v604, 32
      %v2088 = vpop.permute.xlu0 %2087
      %2089 = vrot.lane.b32.xlu0 %v605, 32
      %v2090 = vpop.permute.xlu0 %2089
      %2091 = vrot.lane.b32.xlu0 %v606, 32
      %v2092 = vpop.permute.xlu0 %2091
      %2093 = vrot.lane.b32.xlu0 %v607, 32
      %v2094 = vpop.permute.xlu0 %2093
      %2095 = vrot.lane.b32.xlu0 %v608, 32
      %v2096 = vpop.permute.xlu0 %2095
      %2097 = vrot.lane.b32.xlu0 %v609, 32
      %v2098 = vpop.permute.xlu0 %2097
      %2099 = vrot.lane.b32.xlu0 %v610, 32
      %v2100 = vpop.permute.xlu0 %2099
      %2101 = vrot.lane.b32.xlu0 %v611, 32
      %v2102 = vpop.permute.xlu0 %2101
      %2103 = vrot.lane.b32.xlu0 %v612, 32
      %v2104 = vpop.permute.xlu0 %2103
      %2105 = vrot.lane.b32.xlu0 %v613, 32
      %v2106 = vpop.permute.xlu0 %2105
      %2107 = vrot.lane.b32.xlu0 %v614, 32
      %v2108 = vpop.permute.xlu0 %2107
      %2109 = vrot.lane.b32.xlu0 %v615, 32
      %v2110 = vpop.permute.xlu0 %2109
      %2111 = vrot.lane.b32.xlu0 %v616, 32
      %v2112 = vpop.permute.xlu0 %2111
      %2113 = vrot.lane.b32.xlu0 %v617, 32
      %v2114 = vpop.permute.xlu0 %2113
      %2115 = vrot.lane.b32.xlu0 %v618, 32
      %v2116 = vpop.permute.xlu0 %2115
      %2117 = vrot.lane.b32.xlu0 %v619, 32
      %v2118 = vpop.permute.xlu0 %2117
      %2119 = vrot.lane.b32.xlu0 %v620, 32
      %v2120 = vpop.permute.xlu0 %2119
      %2121 = vrot.lane.b32.xlu0 %v621, 32
      %v2122 = vpop.permute.xlu0 %2121
      %2123 = vrot.lane.b32.xlu0 %v622, 32
      %v2124 = vpop.permute.xlu0 %2123
      %2125 = vrot.lane.b32.xlu0 %v623, 32
      %v2126 = vpop.permute.xlu0 %2125
      %2127 = vrot.lane.b32.xlu0 %v624, 32
      %v2128 = vpop.permute.xlu0 %2127
      %2129 = vrot.lane.b32.xlu0 %v625, 32
      %v2130 = vpop.permute.xlu0 %2129
      %2131 = vrot.lane.b32.xlu0 %v626, 32
      %v2132 = vpop.permute.xlu0 %2131
      %2197 = vrot.lane.b32.xlu0 %v627, 36
      %v2198 = vpop.permute.xlu0 %2197
      %2199 = vrot.lane.b32.xlu0 %v628, 36
      %v2200 = vpop.permute.xlu0 %2199
      %2201 = vrot.lane.b32.xlu0 %v629, 36
      %v2202 = vpop.permute.xlu0 %2201
      %2203 = vrot.lane.b32.xlu0 %v630, 36
      %v2204 = vpop.permute.xlu0 %2203
      %2205 = vrot.lane.b32.xlu0 %v631, 36
      %v2206 = vpop.permute.xlu0 %2205
      %2207 = vrot.lane.b32.xlu0 %v632, 36
      %v2208 = vpop.permute.xlu0 %2207
      %2209 = vrot.lane.b32.xlu0 %v633, 36
      %v2210 = vpop.permute.xlu0 %2209
      %2211 = vrot.lane.b32.xlu0 %v634, 36
      %v2212 = vpop.permute.xlu0 %2211
      %2213 = vrot.lane.b32.xlu0 %v635, 36
      %v2214 = vpop.permute.xlu0 %2213
      %2215 = vrot.lane.b32.xlu0 %v636, 36
      %v2216 = vpop.permute.xlu0 %2215
      %2217 = vrot.lane.b32.xlu0 %v637, 36
      %v2218 = vpop.permute.xlu0 %2217
      %2219 = vrot.lane.b32.xlu0 %v638, 36
      %v2220 = vpop.permute.xlu0 %2219
      %2221 = vrot.lane.b32.xlu0 %v639, 36
      %v2222 = vpop.permute.xlu0 %2221
      %2223 = vrot.lane.b32.xlu0 %v640, 36
      %v2224 = vpop.permute.xlu0 %2223
      %2225 = vrot.lane.b32.xlu0 %v641, 36
      %v2226 = vpop.permute.xlu0 %2225
      %2227 = vrot.lane.b32.xlu0 %v642, 36
      %v2228 = vpop.permute.xlu0 %2227
      %2229 = vrot.lane.b32.xlu0 %v643, 36
      %v2230 = vpop.permute.xlu0 %2229
      %2231 = vrot.lane.b32.xlu0 %v644, 36
      %v2232 = vpop.permute.xlu0 %2231
      %2233 = vrot.lane.b32.xlu0 %v645, 36
      %v2234 = vpop.permute.xlu0 %2233
      %2235 = vrot.lane.b32.xlu0 %v646, 36
      %v2236 = vpop.permute.xlu0 %2235
      %2237 = vrot.lane.b32.xlu0 %v647, 36
      %v2238 = vpop.permute.xlu0 %2237
      %2239 = vrot.lane.b32.xlu0 %v648, 36
      %v2240 = vpop.permute.xlu0 %2239
      %2241 = vrot.lane.b32.xlu0 %v649, 36
      %v2242 = vpop.permute.xlu0 %2241
      %2243 = vrot.lane.b32.xlu0 %v650, 36
      %v2244 = vpop.permute.xlu0 %2243
      %2245 = vrot.lane.b32.xlu0 %v651, 36
      %v2246 = vpop.permute.xlu0 %2245
      %2247 = vrot.lane.b32.xlu0 %v652, 36
      %v2248 = vpop.permute.xlu0 %2247
      %2249 = vrot.lane.b32.xlu0 %v653, 36
      %v2250 = vpop.permute.xlu0 %2249
      %2251 = vrot.lane.b32.xlu0 %v654, 36
      %v2252 = vpop.permute.xlu0 %2251
      %2253 = vrot.lane.b32.xlu0 %v655, 36
      %v2254 = vpop.permute.xlu0 %2253
      %2255 = vrot.lane.b32.xlu0 %v656, 36
      %v2256 = vpop.permute.xlu0 %2255
      %2257 = vrot.lane.b32.xlu0 %v657, 36
      %v2258 = vpop.permute.xlu0 %2257
      %2259 = vrot.lane.b32.xlu0 %v658, 36
      %v2260 = vpop.permute.xlu0 %2259
      %2325 = vrot.lane.b32.xlu0 %v659, 40
      %v2326 = vpop.permute.xlu0 %2325
      %2327 = vrot.lane.b32.xlu0 %v660, 40
      %v2328 = vpop.permute.xlu0 %2327
      %2329 = vrot.lane.b32.xlu0 %v661, 40
      %v2330 = vpop.permute.xlu0 %2329
      %2331 = vrot.lane.b32.xlu0 %v662, 40
      %v2332 = vpop.permute.xlu0 %2331
      %2333 = vrot.lane.b32.xlu0 %v663, 40
      %v2334 = vpop.permute.xlu0 %2333
      %2335 = vrot.lane.b32.xlu0 %v664, 40
      %v2336 = vpop.permute.xlu0 %2335
      %2337 = vrot.lane.b32.xlu0 %v665, 40
      %v2338 = vpop.permute.xlu0 %2337
      %2339 = vrot.lane.b32.xlu0 %v666, 40
      %v2340 = vpop.permute.xlu0 %2339
      %2341 = vrot.lane.b32.xlu0 %v667, 40
      %v2342 = vpop.permute.xlu0 %2341
      %2343 = vrot.lane.b32.xlu0 %v668, 40
      %v2344 = vpop.permute.xlu0 %2343
      %2345 = vrot.lane.b32.xlu0 %v669, 40
      %v2346 = vpop.permute.xlu0 %2345
      %2347 = vrot.lane.b32.xlu0 %v670, 40
      %v2348 = vpop.permute.xlu0 %2347
      %2349 = vrot.lane.b32.xlu0 %v671, 40
      %v2350 = vpop.permute.xlu0 %2349
      %2351 = vrot.lane.b32.xlu0 %v672, 40
      %v2352 = vpop.permute.xlu0 %2351
      %2353 = vrot.lane.b32.xlu0 %v673, 40
      %v2354 = vpop.permute.xlu0 %2353
      %2355 = vrot.lane.b32.xlu0 %v674, 40
      %v2356 = vpop.permute.xlu0 %2355
      %2357 = vrot.lane.b32.xlu0 %v675, 40
      %v2358 = vpop.permute.xlu0 %2357
      %2359 = vrot.lane.b32.xlu0 %v676, 40
      %v2360 = vpop.permute.xlu0 %2359
      %2361 = vrot.lane.b32.xlu0 %v677, 40
      %v2362 = vpop.permute.xlu0 %2361
      %2363 = vrot.lane.b32.xlu0 %v678, 40
      %v2364 = vpop.permute.xlu0 %2363
      %2365 = vrot.lane.b32.xlu0 %v679, 40
      %v2366 = vpop.permute.xlu0 %2365
      %2367 = vrot.lane.b32.xlu0 %v680, 40
      %v2368 = vpop.permute.xlu0 %2367
      %2369 = vrot.lane.b32.xlu0 %v681, 40
      %v2370 = vpop.permute.xlu0 %2369
      %2371 = vrot.lane.b32.xlu0 %v682, 40
      %v2372 = vpop.permute.xlu0 %2371
      %2373 = vrot.lane.b32.xlu0 %v683, 40
      %v2374 = vpop.permute.xlu0 %2373
      %2375 = vrot.lane.b32.xlu0 %v684, 40
      %v2376 = vpop.permute.xlu0 %2375
      %2377 = vrot.lane.b32.xlu0 %v685, 40
      %v2378 = vpop.permute.xlu0 %2377
      %2379 = vrot.lane.b32.xlu0 %v686, 40
      %v2380 = vpop.permute.xlu0 %2379
      %2381 = vrot.lane.b32.xlu0 %v687, 40
      %v2382 = vpop.permute.xlu0 %2381
      %2383 = vrot.lane.b32.xlu0 %v688, 40
      %v2384 = vpop.permute.xlu0 %2383
      %2385 = vrot.lane.b32.xlu0 %v689, 40
      %v2386 = vpop.permute.xlu0 %2385
      %2387 = vrot.lane.b32.xlu0 %v690, 40
      %v2388 = vpop.permute.xlu0 %2387
      %2453 = vrot.lane.b32.xlu0 %v691, 44
      %v2454 = vpop.permute.xlu0 %2453
      %2455 = vrot.lane.b32.xlu0 %v692, 44
      %v2456 = vpop.permute.xlu0 %2455
      %2457 = vrot.lane.b32.xlu0 %v693, 44
      %v2458 = vpop.permute.xlu0 %2457
      %2459 = vrot.lane.b32.xlu0 %v694, 44
      %v2460 = vpop.permute.xlu0 %2459
      %2461 = vrot.lane.b32.xlu0 %v695, 44
      %v2462 = vpop.permute.xlu0 %2461
      %2463 = vrot.lane.b32.xlu0 %v696, 44
      %v2464 = vpop.permute.xlu0 %2463
      %2465 = vrot.lane.b32.xlu0 %v697, 44
      %v2466 = vpop.permute.xlu0 %2465
      %2467 = vrot.lane.b32.xlu0 %v698, 44
      %v2468 = vpop.permute.xlu0 %2467
      %2469 = vrot.lane.b32.xlu0 %v699, 44
      %v2470 = vpop.permute.xlu0 %2469
      %2471 = vrot.lane.b32.xlu0 %v700, 44
      %v2472 = vpop.permute.xlu0 %2471
      %2473 = vrot.lane.b32.xlu0 %v701, 44
      %v2474 = vpop.permute.xlu0 %2473
      %2475 = vrot.lane.b32.xlu0 %v702, 44
      %v2476 = vpop.permute.xlu0 %2475
      %2477 = vrot.lane.b32.xlu0 %v703, 44
      %v2478 = vpop.permute.xlu0 %2477
      %2479 = vrot.lane.b32.xlu0 %v704, 44
      %v2480 = vpop.permute.xlu0 %2479
      %2481 = vrot.lane.b32.xlu0 %v705, 44
      %v2482 = vpop.permute.xlu0 %2481
      %2483 = vrot.lane.b32.xlu0 %v706, 44
      %v2484 = vpop.permute.xlu0 %2483
      %2485 = vrot.lane.b32.xlu0 %v707, 44
      %v2486 = vpop.permute.xlu0 %2485
      %2487 = vrot.lane.b32.xlu0 %v708, 44
      %v2488 = vpop.permute.xlu0 %2487
      %2489 = vrot.lane.b32.xlu0 %v709, 44
      %v2490 = vpop.permute.xlu0 %2489
      %2491 = vrot.lane.b32.xlu0 %v710, 44
      %v2492 = vpop.permute.xlu0 %2491
      %2493 = vrot.lane.b32.xlu0 %v711, 44
      %v2494 = vpop.permute.xlu0 %2493
      %2495 = vrot.lane.b32.xlu0 %v712, 44
      %v2496 = vpop.permute.xlu0 %2495
      %2497 = vrot.lane.b32.xlu0 %v713, 44
      %v2498 = vpop.permute.xlu0 %2497
      %2499 = vrot.lane.b32.xlu0 %v714, 44
      %v2500 = vpop.permute.xlu0 %2499
      %2501 = vrot.lane.b32.xlu0 %v715, 44
      %v2502 = vpop.permute.xlu0 %2501
      %2503 = vrot.lane.b32.xlu0 %v716, 44
      %v2504 = vpop.permute.xlu0 %2503
      %2505 = vrot.lane.b32.xlu0 %v717, 44
      %v2506 = vpop.permute.xlu0 %2505
      %2507 = vrot.lane.b32.xlu0 %v718, 44
      %v2508 = vpop.permute.xlu0 %2507
      %2509 = vrot.lane.b32.xlu0 %v719, 44
      %v2510 = vpop.permute.xlu0 %2509
      %2511 = vrot.lane.b32.xlu0 %v720, 44
      %v2512 = vpop.permute.xlu0 %2511
      %2513 = vrot.lane.b32.xlu0 %v721, 44
      %v2514 = vpop.permute.xlu0 %2513
      %2515 = vrot.lane.b32.xlu0 %v722, 44
      %v2516 = vpop.permute.xlu0 %2515
      %2581 = vrot.lane.b32.xlu0 %v723, 48
      %v2582 = vpop.permute.xlu0 %2581
      %2583 = vrot.lane.b32.xlu0 %v724, 48
      %v2584 = vpop.permute.xlu0 %2583
      %2585 = vrot.lane.b32.xlu0 %v725, 48
      %v2586 = vpop.permute.xlu0 %2585
      %2587 = vrot.lane.b32.xlu0 %v726, 48
      %v2588 = vpop.permute.xlu0 %2587
      %2589 = vrot.lane.b32.xlu0 %v727, 48
      %v2590 = vpop.permute.xlu0 %2589
      %2591 = vrot.lane.b32.xlu0 %v728, 48
      %v2592 = vpop.permute.xlu0 %2591
      %2593 = vrot.lane.b32.xlu0 %v729, 48
      %v2594 = vpop.permute.xlu0 %2593
      %2595 = vrot.lane.b32.xlu0 %v730, 48
      %v2596 = vpop.permute.xlu0 %2595
      %2597 = vrot.lane.b32.xlu0 %v731, 48
      %v2598 = vpop.permute.xlu0 %2597
      %2599 = vrot.lane.b32.xlu0 %v732, 48
      %v2600 = vpop.permute.xlu0 %2599
      %2601 = vrot.lane.b32.xlu0 %v733, 48
      %v2602 = vpop.permute.xlu0 %2601
      %2603 = vrot.lane.b32.xlu0 %v734, 48
      %v2604 = vpop.permute.xlu0 %2603
      %2605 = vrot.lane.b32.xlu0 %v735, 48
      %v2606 = vpop.permute.xlu0 %2605
      %2607 = vrot.lane.b32.xlu0 %v736, 48
      %v2608 = vpop.permute.xlu0 %2607
      %2609 = vrot.lane.b32.xlu0 %v737, 48
      %v2610 = vpop.permute.xlu0 %2609
      %2611 = vrot.lane.b32.xlu0 %v738, 48
      %v2612 = vpop.permute.xlu0 %2611
      %2613 = vrot.lane.b32.xlu0 %v739, 48
      %v2614 = vpop.permute.xlu0 %2613
      %2615 = vrot.lane.b32.xlu0 %v740, 48
      %v2616 = vpop.permute.xlu0 %2615
      %2617 = vrot.lane.b32.xlu0 %v741, 48
      %v2618 = vpop.permute.xlu0 %2617
      %2619 = vrot.lane.b32.xlu0 %v742, 48
      %v2620 = vpop.permute.xlu0 %2619
      %2621 = vrot.lane.b32.xlu0 %v743, 48
      %v2622 = vpop.permute.xlu0 %2621
      %2623 = vrot.lane.b32.xlu0 %v744, 48
      %v2624 = vpop.permute.xlu0 %2623
      %2625 = vrot.lane.b32.xlu0 %v745, 48
      %v2626 = vpop.permute.xlu0 %2625
      %2627 = vrot.lane.b32.xlu0 %v746, 48
      %v2628 = vpop.permute.xlu0 %2627
      %2629 = vrot.lane.b32.xlu0 %v747, 48
      %v2630 = vpop.permute.xlu0 %2629
      %2631 = vrot.lane.b32.xlu0 %v748, 48
      %v2632 = vpop.permute.xlu0 %2631
      %2633 = vrot.lane.b32.xlu0 %v749, 48
      %v2634 = vpop.permute.xlu0 %2633
      %2635 = vrot.lane.b32.xlu0 %v750, 48
      %v2636 = vpop.permute.xlu0 %2635
      %2637 = vrot.lane.b32.xlu0 %v751, 48
      %v2638 = vpop.permute.xlu0 %2637
      %2639 = vrot.lane.b32.xlu0 %v752, 48
      %v2640 = vpop.permute.xlu0 %2639
      %2641 = vrot.lane.b32.xlu0 %v753, 48
      %v2642 = vpop.permute.xlu0 %2641
      %2643 = vrot.lane.b32.xlu0 %v754, 48
      %v2644 = vpop.permute.xlu0 %2643
      %2709 = vrot.lane.b32.xlu0 %v755, 52
      %v2710 = vpop.permute.xlu0 %2709
      %2711 = vrot.lane.b32.xlu0 %v756, 52
      %v2712 = vpop.permute.xlu0 %2711
      %2713 = vrot.lane.b32.xlu0 %v757, 52
      %v2714 = vpop.permute.xlu0 %2713
      %2715 = vrot.lane.b32.xlu0 %v758, 52
      %v2716 = vpop.permute.xlu0 %2715
      %2717 = vrot.lane.b32.xlu0 %v759, 52
      %v2718 = vpop.permute.xlu0 %2717
      %2719 = vrot.lane.b32.xlu0 %v760, 52
      %v2720 = vpop.permute.xlu0 %2719
      %2721 = vrot.lane.b32.xlu0 %v761, 52
      %v2722 = vpop.permute.xlu0 %2721
      %2723 = vrot.lane.b32.xlu0 %v762, 52
      %v2724 = vpop.permute.xlu0 %2723
      %2725 = vrot.lane.b32.xlu0 %v763, 52
      %v2726 = vpop.permute.xlu0 %2725
      %2727 = vrot.lane.b32.xlu0 %v764, 52
      %v2728 = vpop.permute.xlu0 %2727
      %2729 = vrot.lane.b32.xlu0 %v765, 52
      %v2730 = vpop.permute.xlu0 %2729
      %2731 = vrot.lane.b32.xlu0 %v766, 52
      %v2732 = vpop.permute.xlu0 %2731
      %2733 = vrot.lane.b32.xlu0 %v767, 52
      %v2734 = vpop.permute.xlu0 %2733
      %2735 = vrot.lane.b32.xlu0 %v768, 52
      %v2736 = vpop.permute.xlu0 %2735
      %2737 = vrot.lane.b32.xlu0 %v769, 52
      %v2738 = vpop.permute.xlu0 %2737
      %2739 = vrot.lane.b32.xlu0 %v770, 52
      %v2740 = vpop.permute.xlu0 %2739
      %2741 = vrot.lane.b32.xlu0 %v771, 52
      %v2742 = vpop.permute.xlu0 %2741
      %2743 = vrot.lane.b32.xlu0 %v772, 52
      %v2744 = vpop.permute.xlu0 %2743
      %2745 = vrot.lane.b32.xlu0 %v773, 52
      %v2746 = vpop.permute.xlu0 %2745
      %2747 = vrot.lane.b32.xlu0 %v774, 52
      %v2748 = vpop.permute.xlu0 %2747
      %2749 = vrot.lane.b32.xlu0 %v775, 52
      %v2750 = vpop.permute.xlu0 %2749
      %2751 = vrot.lane.b32.xlu0 %v776, 52
      %v2752 = vpop.permute.xlu0 %2751
      %2753 = vrot.lane.b32.xlu0 %v777, 52
      %v2754 = vpop.permute.xlu0 %2753
      %2755 = vrot.lane.b32.xlu0 %v778, 52
      %v2756 = vpop.permute.xlu0 %2755
      %2757 = vrot.lane.b32.xlu0 %v779, 52
      %v2758 = vpop.permute.xlu0 %2757
      %2759 = vrot.lane.b32.xlu0 %v780, 52
      %v2760 = vpop.permute.xlu0 %2759
      %2761 = vrot.lane.b32.xlu0 %v781, 52
      %v2762 = vpop.permute.xlu0 %2761
      %2763 = vrot.lane.b32.xlu0 %v782, 52
      %v2764 = vpop.permute.xlu0 %2763
      %2765 = vrot.lane.b32.xlu0 %v783, 52
      %v2766 = vpop.permute.xlu0 %2765
      %2767 = vrot.lane.b32.xlu0 %v784, 52
      %v2768 = vpop.permute.xlu0 %2767
      %2769 = vrot.lane.b32.xlu0 %v785, 52
      %v2770 = vpop.permute.xlu0 %2769
      %2771 = vrot.lane.b32.xlu0 %v786, 52
      %v2772 = vpop.permute.xlu0 %2771
      %2837 = vrot.lane.b32.xlu0 %v787, 56
      %v2838 = vpop.permute.xlu0 %2837
      %2839 = vrot.lane.b32.xlu0 %v788, 56
      %v2840 = vpop.permute.xlu0 %2839
      %2841 = vrot.lane.b32.xlu0 %v789, 56
      %v2842 = vpop.permute.xlu0 %2841
      %2843 = vrot.lane.b32.xlu0 %v790, 56
      %v2844 = vpop.permute.xlu0 %2843
      %2845 = vrot.lane.b32.xlu0 %v791, 56
      %v2846 = vpop.permute.xlu0 %2845
      %2847 = vrot.lane.b32.xlu0 %v792, 56
      %v2848 = vpop.permute.xlu0 %2847
      %2849 = vrot.lane.b32.xlu0 %v793, 56
      %v2850 = vpop.permute.xlu0 %2849
      %2851 = vrot.lane.b32.xlu0 %v794, 56
      %v2852 = vpop.permute.xlu0 %2851
      %2853 = vrot.lane.b32.xlu0 %v795, 56
      %v2854 = vpop.permute.xlu0 %2853
      %2855 = vrot.lane.b32.xlu0 %v796, 56
      %v2856 = vpop.permute.xlu0 %2855
      %2857 = vrot.lane.b32.xlu0 %v797, 56
      %v2858 = vpop.permute.xlu0 %2857
      %2859 = vrot.lane.b32.xlu0 %v798, 56
      %v2860 = vpop.permute.xlu0 %2859
      %2861 = vrot.lane.b32.xlu0 %v799, 56
      %v2862 = vpop.permute.xlu0 %2861
      %2863 = vrot.lane.b32.xlu0 %v800, 56
      %v2864 = vpop.permute.xlu0 %2863
      %2865 = vrot.lane.b32.xlu0 %v801, 56
      %v2866 = vpop.permute.xlu0 %2865
      %2867 = vrot.lane.b32.xlu0 %v802, 56
      %v2868 = vpop.permute.xlu0 %2867
      %2869 = vrot.lane.b32.xlu0 %v803, 56
      %v2870 = vpop.permute.xlu0 %2869
      %2871 = vrot.lane.b32.xlu0 %v804, 56
      %v2872 = vpop.permute.xlu0 %2871
      %2873 = vrot.lane.b32.xlu0 %v805, 56
      %v2874 = vpop.permute.xlu0 %2873
      %2875 = vrot.lane.b32.xlu0 %v806, 56
      %v2876 = vpop.permute.xlu0 %2875
      %2877 = vrot.lane.b32.xlu0 %v807, 56
      %v2878 = vpop.permute.xlu0 %2877
      %2879 = vrot.lane.b32.xlu0 %v808, 56
      %v2880 = vpop.permute.xlu0 %2879
      %2881 = vrot.lane.b32.xlu0 %v809, 56
      %v2882 = vpop.permute.xlu0 %2881
      %2883 = vrot.lane.b32.xlu0 %v810, 56
      %v2884 = vpop.permute.xlu0 %2883
      %2885 = vrot.lane.b32.xlu0 %v811, 56
      %v2886 = vpop.permute.xlu0 %2885
      %2887 = vrot.lane.b32.xlu0 %v812, 56
      %v2888 = vpop.permute.xlu0 %2887
      %2889 = vrot.lane.b32.xlu0 %v813, 56
      %v2890 = vpop.permute.xlu0 %2889
      %2891 = vrot.lane.b32.xlu0 %v814, 56
      %v2892 = vpop.permute.xlu0 %2891
      %2893 = vrot.lane.b32.xlu0 %v815, 56
      %v2894 = vpop.permute.xlu0 %2893
      %2895 = vrot.lane.b32.xlu0 %v816, 56
      %v2896 = vpop.permute.xlu0 %2895
      %2897 = vrot.lane.b32.xlu0 %v817, 56
      %v2898 = vpop.permute.xlu0 %2897
      %2899 = vrot.lane.b32.xlu0 %v818, 56
      %v2900 = vpop.permute.xlu0 %2899
      %2965 = vrot.lane.b32.xlu0 %v820, 60
      %v2966 = vpop.permute.xlu0 %2965
      %2967 = vrot.lane.b32.xlu0 %v821, 60
      %v2968 = vpop.permute.xlu0 %2967
      %2969 = vrot.lane.b32.xlu0 %v822, 60
      %v2970 = vpop.permute.xlu0 %2969
      %2971 = vrot.lane.b32.xlu0 %v823, 60
      %v2972 = vpop.permute.xlu0 %2971
      %2973 = vrot.lane.b32.xlu0 %v824, 60
      %v2974 = vpop.permute.xlu0 %2973
      %2975 = vrot.lane.b32.xlu0 %v825, 60
      %v2976 = vpop.permute.xlu0 %2975
      %2977 = vrot.lane.b32.xlu0 %v826, 60
      %v2978 = vpop.permute.xlu0 %2977
      %2979 = vrot.lane.b32.xlu0 %v827, 60
      %v2980 = vpop.permute.xlu0 %2979
      %2981 = vrot.lane.b32.xlu0 %v828, 60
      %v2982 = vpop.permute.xlu0 %2981
      %2983 = vrot.lane.b32.xlu0 %v829, 60
      %v2984 = vpop.permute.xlu0 %2983
      %2985 = vrot.lane.b32.xlu0 %v830, 60
      %v2986 = vpop.permute.xlu0 %2985
      %2987 = vrot.lane.b32.xlu0 %v831, 60
      %v2988 = vpop.permute.xlu0 %2987
      %2989 = vrot.lane.b32.xlu0 %v832, 60
      %v2990 = vpop.permute.xlu0 %2989
      %2991 = vrot.lane.b32.xlu0 %v833, 60
      %v2992 = vpop.permute.xlu0 %2991
      %2993 = vrot.lane.b32.xlu0 %v834, 60
      %v2994 = vpop.permute.xlu0 %2993
      %2995 = vrot.lane.b32.xlu0 %v835, 60
      %v2996 = vpop.permute.xlu0 %2995
      %2997 = vrot.lane.b32.xlu0 %v836, 60
      %v2998 = vpop.permute.xlu0 %2997
      %2999 = vrot.lane.b32.xlu0 %v837, 60
      %v3000 = vpop.permute.xlu0 %2999
      %3001 = vrot.lane.b32.xlu0 %v838, 60
      %v3002 = vpop.permute.xlu0 %3001
      %3003 = vrot.lane.b32.xlu0 %v839, 60
      %v3004 = vpop.permute.xlu0 %3003
      %3005 = vrot.lane.b32.xlu0 %v840, 60
      %v3006 = vpop.permute.xlu0 %3005
      %3007 = vrot.lane.b32.xlu0 %v841, 60
      %v3008 = vpop.permute.xlu0 %3007
      %3009 = vrot.lane.b32.xlu0 %v842, 60
      %v3010 = vpop.permute.xlu0 %3009
      %3011 = vrot.lane.b32.xlu0 %v843, 60
      %v3012 = vpop.permute.xlu0 %3011
      %3013 = vrot.lane.b32.xlu0 %v844, 60
      %v3014 = vpop.permute.xlu0 %3013
      %3015 = vrot.lane.b32.xlu0 %v845, 60
      %v3016 = vpop.permute.xlu0 %3015
      %3017 = vrot.lane.b32.xlu0 %v846, 60
      %v3018 = vpop.permute.xlu0 %3017
      %3019 = vrot.lane.b32.xlu0 %v847, 60
      %v3020 = vpop.permute.xlu0 %3019
      %3021 = vrot.lane.b32.xlu0 %v848, 60
      %v3022 = vpop.permute.xlu0 %3021
      %3023 = vrot.lane.b32.xlu0 %v849, 60
      %v3024 = vpop.permute.xlu0 %3023
      %3025 = vrot.lane.b32.xlu0 %v850, 60
      %v3026 = vpop.permute.xlu0 %3025
      %3027 = vrot.lane.b32.xlu0 %v851, 60
      %v3028 = vpop.permute.xlu0 %3027
      %v3061 = vsel %vm203, %v338, %v1174
      %v3062 = vsel %vm203, %v339, %v1176
      %v3063 = vsel %vm203, %v340, %v1178
      %v3064 = vsel %vm203, %v341, %v1180
      %v3065 = vsel %vm203, %v342, %v1182
      %v3066 = vsel %vm203, %v343, %v1184
      %v3067 = vsel %vm203, %v344, %v1186
      %v3068 = vsel %vm203, %v345, %v1188
      %v3069 = vsel %vm203, %v346, %v1190
      %v3070 = vsel %vm203, %v347, %v1192
      %v3071 = vsel %vm203, %v348, %v1194
      %v3072 = vsel %vm203, %v349, %v1196
      %v3073 = vsel %vm203, %v350, %v1198
      %v3074 = vsel %vm203, %v351, %v1200
      %v3075 = vsel %vm203, %v352, %v1202
      %v3076 = vsel %vm203, %v353, %v1204
      %v3077 = vsel %vm203, %v354, %v1206
      %v3078 = vsel %vm203, %v355, %v1208
      %v3079 = vsel %vm203, %v356, %v1210
      %v3080 = vsel %vm203, %v357, %v1212
      %v3081 = vsel %vm203, %v358, %v1214
      %v3082 = vsel %vm203, %v359, %v1216
      %v3083 = vsel %vm203, %v360, %v1218
      %v3084 = vsel %vm203, %v361, %v1220
      %v3085 = vsel %vm203, %v362, %v1222
      %v3086 = vsel %vm203, %v363, %v1224
      %v3087 = vsel %vm203, %v364, %v1226
      %v3088 = vsel %vm203, %v365, %v1228
      %v3089 = vsel %vm203, %v366, %v1230
      %v3090 = vsel %vm203, %v367, %v1232
      %v3091 = vsel %vm203, %v368, %v1234
      %v3092 = vsel %vm203, %v369, %v1236
      %vm3093 = vcmask 64512
      %v3094 = vsel %vm3093, %v3061, %v1302
      %v3095 = vsel %vm3093, %v3062, %v1304
      %v3096 = vsel %vm3093, %v3063, %v1306
      %v3097 = vsel %vm3093, %v3064, %v1308
      %v3098 = vsel %vm3093, %v3065, %v1310
      %v3099 = vsel %vm3093, %v3066, %v1312
      %v3100 = vsel %vm3093, %v3067, %v1314
      %v3101 = vsel %vm3093, %v3068, %v1316
      %v3102 = vsel %vm3093, %v3069, %v1318
      %v3103 = vsel %vm3093, %v3070, %v1320
      %v3104 = vsel %vm3093, %v3071, %v1322
      %v3105 = vsel %vm3093, %v3072, %v1324
      %v3106 = vsel %vm3093, %v3073, %v1326
      %v3107 = vsel %vm3093, %v3074, %v1328
      %v3108 = vsel %vm3093, %v3075, %v1330
      %v3109 = vsel %vm3093, %v3076, %v1332
      %v3110 = vsel %vm3093, %v3077, %v1334
      %v3111 = vsel %vm3093, %v3078, %v1336
      %v3112 = vsel %vm3093, %v3079, %v1338
      %v3113 = vsel %vm3093, %v3080, %v1340
      %v3114 = vsel %vm3093, %v3081, %v1342
      %v3115 = vsel %vm3093, %v3082, %v1344
      %v3116 = vsel %vm3093, %v3083, %v1346
      %v3117 = vsel %vm3093, %v3084, %v1348
      %v3118 = vsel %vm3093, %v3085, %v1350
      %v3119 = vsel %vm3093, %v3086, %v1352
      %v3120 = vsel %vm3093, %v3087, %v1354
      %v3121 = vsel %vm3093, %v3088, %v1356
      %v3122 = vsel %vm3093, %v3089, %v1358
      %v3123 = vsel %vm3093, %v3090, %v1360
      %v3124 = vsel %vm3093, %v3091, %v1362
      %v3125 = vsel %vm3093, %v3092, %v1364
      %vm3126 = vcmask 97280
      %v3127 = vsel %vm3126, %v3094, %v1430
      %v3128 = vsel %vm3126, %v3095, %v1432
      %v3129 = vsel %vm3126, %v3096, %v1434
      %v3130 = vsel %vm3126, %v3097, %v1436
      %v3131 = vsel %vm3126, %v3098, %v1438
      %v3132 = vsel %vm3126, %v3099, %v1440
      %v3133 = vsel %vm3126, %v3100, %v1442
      %v3134 = vsel %vm3126, %v3101, %v1444
      %v3135 = vsel %vm3126, %v3102, %v1446
      %v3136 = vsel %vm3126, %v3103, %v1448
      %v3137 = vsel %vm3126, %v3104, %v1450
      %v3138 = vsel %vm3126, %v3105, %v1452
      %v3139 = vsel %vm3126, %v3106, %v1454
      %v3140 = vsel %vm3126, %v3107, %v1456
      %v3141 = vsel %vm3126, %v3108, %v1458
      %v3142 = vsel %vm3126, %v3109, %v1460
      %v3143 = vsel %vm3126, %v3110, %v1462
      %v3144 = vsel %vm3126, %v3111, %v1464
      %v3145 = vsel %vm3126, %v3112, %v1466
      %v3146 = vsel %vm3126, %v3113, %v1468
      %v3147 = vsel %vm3126, %v3114, %v1470
      %v3148 = vsel %vm3126, %v3115, %v1472
      %v3149 = vsel %vm3126, %v3116, %v1474
      %v3150 = vsel %vm3126, %v3117, %v1476
      %v3151 = vsel %vm3126, %v3118, %v1478
      %v3152 = vsel %vm3126, %v3119, %v1480
      %v3153 = vsel %vm3126, %v3120, %v1482
      %v3154 = vsel %vm3126, %v3121, %v1484
      %v3155 = vsel %vm3126, %v3122, %v1486
      %v3156 = vsel %vm3126, %v3123, %v1488
      %v3157 = vsel %vm3126, %v3124, %v1490
      %v3158 = vsel %vm3126, %v3125, %v1492
      %vm3159 = vcmask 130048
      %v3160 = vsel %vm3159, %v3127, %v1558
      %v3161 = vsel %vm3159, %v3128, %v1560
      %v3162 = vsel %vm3159, %v3129, %v1562
      %v3163 = vsel %vm3159, %v3130, %v1564
      %v3164 = vsel %vm3159, %v3131, %v1566
      %v3165 = vsel %vm3159, %v3132, %v1568
      %v3166 = vsel %vm3159, %v3133, %v1570
      %v3167 = vsel %vm3159, %v3134, %v1572
      %v3168 = vsel %vm3159, %v3135, %v1574
      %v3169 = vsel %vm3159, %v3136, %v1576
      %v3170 = vsel %vm3159, %v3137, %v1578
      %v3171 = vsel %vm3159, %v3138, %v1580
      %v3172 = vsel %vm3159, %v3139, %v1582
      %v3173 = vsel %vm3159, %v3140, %v1584
      %v3174 = vsel %vm3159, %v3141, %v1586
      %v3175 = vsel %vm3159, %v3142, %v1588
      %v3176 = vsel %vm3159, %v3143, %v1590
      %v3177 = vsel %vm3159, %v3144, %v1592
      %v3178 = vsel %vm3159, %v3145, %v1594
      %v3179 = vsel %vm3159, %v3146, %v1596
      %v3180 = vsel %vm3159, %v3147, %v1598
      %v3181 = vsel %vm3159, %v3148, %v1600
      %v3182 = vsel %vm3159, %v3149, %v1602
      %v3183 = vsel %vm3159, %v3150, %v1604
      %v3184 = vsel %vm3159, %v3151, %v1606
      %v3185 = vsel %vm3159, %v3152, %v1608
      %v3186 = vsel %vm3159, %v3153, %v1610
      %v3187 = vsel %vm3159, %v3154, %v1612
      %v3188 = vsel %vm3159, %v3155, %v1614
      %v3189 = vsel %vm3159, %v3156, %v1616
      %v3190 = vsel %vm3159, %v3157, %v1618
      %v3191 = vsel %vm3159, %v3158, %v1620
      %vm3192 = vcmask 162816
      %v3193 = vsel %vm3192, %v3160, %v1686
      %v3194 = vsel %vm3192, %v3161, %v1688
      %v3195 = vsel %vm3192, %v3162, %v1690
      %v3196 = vsel %vm3192, %v3163, %v1692
      %v3197 = vsel %vm3192, %v3164, %v1694
      %v3198 = vsel %vm3192, %v3165, %v1696
      %v3199 = vsel %vm3192, %v3166, %v1698
      %v3200 = vsel %vm3192, %v3167, %v1700
      %v3201 = vsel %vm3192, %v3168, %v1702
      %v3202 = vsel %vm3192, %v3169, %v1704
      %v3203 = vsel %vm3192, %v3170, %v1706
      %v3204 = vsel %vm3192, %v3171, %v1708
      %v3205 = vsel %vm3192, %v3172, %v1710
      %v3206 = vsel %vm3192, %v3173, %v1712
      %v3207 = vsel %vm3192, %v3174, %v1714
      %v3208 = vsel %vm3192, %v3175, %v1716
      %v3209 = vsel %vm3192, %v3176, %v1718
      %v3210 = vsel %vm3192, %v3177, %v1720
      %v3211 = vsel %vm3192, %v3178, %v1722
      %v3212 = vsel %vm3192, %v3179, %v1724
      %v3213 = vsel %vm3192, %v3180, %v1726
      %v3214 = vsel %vm3192, %v3181, %v1728
      %v3215 = vsel %vm3192, %v3182, %v1730
      %v3216 = vsel %vm3192, %v3183, %v1732
      %v3217 = vsel %vm3192, %v3184, %v1734
      %v3218 = vsel %vm3192, %v3185, %v1736
      %v3219 = vsel %vm3192, %v3186, %v1738
      %v3220 = vsel %vm3192, %v3187, %v1740
      %v3221 = vsel %vm3192, %v3188, %v1742
      %v3222 = vsel %vm3192, %v3189, %v1744
      %v3223 = vsel %vm3192, %v3190, %v1746
      %v3224 = vsel %vm3192, %v3191, %v1748
      %vm3225 = vcmask 195584
      %v3226 = vsel %vm3225, %v3193, %v1814
      %v3227 = vsel %vm3225, %v3194, %v1816
      %v3228 = vsel %vm3225, %v3195, %v1818
      %v3229 = vsel %vm3225, %v3196, %v1820
      %v3230 = vsel %vm3225, %v3197, %v1822
      %v3231 = vsel %vm3225, %v3198, %v1824
      %v3232 = vsel %vm3225, %v3199, %v1826
      %v3233 = vsel %vm3225, %v3200, %v1828
      %v3234 = vsel %vm3225, %v3201, %v1830
      %v3235 = vsel %vm3225, %v3202, %v1832
      %v3236 = vsel %vm3225, %v3203, %v1834
      %v3237 = vsel %vm3225, %v3204, %v1836
      %v3238 = vsel %vm3225, %v3205, %v1838
      %v3239 = vsel %vm3225, %v3206, %v1840
      %v3240 = vsel %vm3225, %v3207, %v1842
      %v3241 = vsel %vm3225, %v3208, %v1844
      %v3242 = vsel %vm3225, %v3209, %v1846
      %v3243 = vsel %vm3225, %v3210, %v1848
      %v3244 = vsel %vm3225, %v3211, %v1850
      %v3245 = vsel %vm3225, %v3212, %v1852
      %v3246 = vsel %vm3225, %v3213, %v1854
      %v3247 = vsel %vm3225, %v3214, %v1856
      %v3248 = vsel %vm3225, %v3215, %v1858
      %v3249 = vsel %vm3225, %v3216, %v1860
      %v3250 = vsel %vm3225, %v3217, %v1862
      %v3251 = vsel %vm3225, %v3218, %v1864
      %v3252 = vsel %vm3225, %v3219, %v1866
      %v3253 = vsel %vm3225, %v3220, %v1868
      %v3254 = vsel %vm3225, %v3221, %v1870
      %v3255 = vsel %vm3225, %v3222, %v1872
      %v3256 = vsel %vm3225, %v3223, %v1874
      %v3257 = vsel %vm3225, %v3224, %v1876
      %vm3258 = vcmask 228352
      %v3259 = vsel %vm3258, %v3226, %v1942
      %v3260 = vsel %vm3258, %v3227, %v1944
      %v3261 = vsel %vm3258, %v3228, %v1946
      %v3262 = vsel %vm3258, %v3229, %v1948
      %v3263 = vsel %vm3258, %v3230, %v1950
      %v3264 = vsel %vm3258, %v3231, %v1952
      %v3265 = vsel %vm3258, %v3232, %v1954
      %v3266 = vsel %vm3258, %v3233, %v1956
      %v3267 = vsel %vm3258, %v3234, %v1958
      %v3268 = vsel %vm3258, %v3235, %v1960
      %v3269 = vsel %vm3258, %v3236, %v1962
      %v3270 = vsel %vm3258, %v3237, %v1964
      %v3271 = vsel %vm3258, %v3238, %v1966
      %v3272 = vsel %vm3258, %v3239, %v1968
      %v3273 = vsel %vm3258, %v3240, %v1970
      %v3274 = vsel %vm3258, %v3241, %v1972
      %v3275 = vsel %vm3258, %v3242, %v1974
      %v3276 = vsel %vm3258, %v3243, %v1976
      %v3277 = vsel %vm3258, %v3244, %v1978
      %v3278 = vsel %vm3258, %v3245, %v1980
      %v3279 = vsel %vm3258, %v3246, %v1982
      %v3280 = vsel %vm3258, %v3247, %v1984
      %v3281 = vsel %vm3258, %v3248, %v1986
      %v3282 = vsel %vm3258, %v3249, %v1988
      %v3283 = vsel %vm3258, %v3250, %v1990
      %v3284 = vsel %vm3258, %v3251, %v1992
      %v3285 = vsel %vm3258, %v3252, %v1994
      %v3286 = vsel %vm3258, %v3253, %v1996
      %v3287 = vsel %vm3258, %v3254, %v1998
      %v3288 = vsel %vm3258, %v3255, %v2000
      %v3289 = vsel %vm3258, %v3256, %v2002
      %v3290 = vsel %vm3258, %v3257, %v2004
      %vm3291 = vcmask 261120
      %v3292 = vsel %vm3291, %v3259, %v2070
      %v3293 = vsel %vm3291, %v3260, %v2072
      %v3294 = vsel %vm3291, %v3261, %v2074
      %v3295 = vsel %vm3291, %v3262, %v2076
      %v3296 = vsel %vm3291, %v3263, %v2078
      %v3297 = vsel %vm3291, %v3264, %v2080
      %v3298 = vsel %vm3291, %v3265, %v2082
      %v3299 = vsel %vm3291, %v3266, %v2084
      %v3300 = vsel %vm3291, %v3267, %v2086
      %v3301 = vsel %vm3291, %v3268, %v2088
      %v3302 = vsel %vm3291, %v3269, %v2090
      %v3303 = vsel %vm3291, %v3270, %v2092
      %v3304 = vsel %vm3291, %v3271, %v2094
      %v3305 = vsel %vm3291, %v3272, %v2096
      %v3306 = vsel %vm3291, %v3273, %v2098
      %v3307 = vsel %vm3291, %v3274, %v2100
      %v3308 = vsel %vm3291, %v3275, %v2102
      %v3309 = vsel %vm3291, %v3276, %v2104
      %v3310 = vsel %vm3291, %v3277, %v2106
      %v3311 = vsel %vm3291, %v3278, %v2108
      %v3312 = vsel %vm3291, %v3279, %v2110
      %v3313 = vsel %vm3291, %v3280, %v2112
      %v3314 = vsel %vm3291, %v3281, %v2114
      %v3315 = vsel %vm3291, %v3282, %v2116
      %v3316 = vsel %vm3291, %v3283, %v2118
      %v3317 = vsel %vm3291, %v3284, %v2120
      %v3318 = vsel %vm3291, %v3285, %v2122
      %v3319 = vsel %vm3291, %v3286, %v2124
      %v3320 = vsel %vm3291, %v3287, %v2126
      %v3321 = vsel %vm3291, %v3288, %v2128
      %v3322 = vsel %vm3291, %v3289, %v2130
      %v3323 = vsel %vm3291, %v3290, %v2132
      %vm3324 = vcmask 293888
      %v3325 = vsel %vm3324, %v3292, %v2198
      %v3326 = vsel %vm3324, %v3293, %v2200
      %v3327 = vsel %vm3324, %v3294, %v2202
      %v3328 = vsel %vm3324, %v3295, %v2204
      %v3329 = vsel %vm3324, %v3296, %v2206
      %v3330 = vsel %vm3324, %v3297, %v2208
      %v3331 = vsel %vm3324, %v3298, %v2210
      %v3332 = vsel %vm3324, %v3299, %v2212
      %v3333 = vsel %vm3324, %v3300, %v2214
      %v3334 = vsel %vm3324, %v3301, %v2216
      %v3335 = vsel %vm3324, %v3302, %v2218
      %v3336 = vsel %vm3324, %v3303, %v2220
      %v3337 = vsel %vm3324, %v3304, %v2222
      %v3338 = vsel %vm3324, %v3305, %v2224
      %v3339 = vsel %vm3324, %v3306, %v2226
      %v3340 = vsel %vm3324, %v3307, %v2228
      %v3341 = vsel %vm3324, %v3308, %v2230
      %v3342 = vsel %vm3324, %v3309, %v2232
      %v3343 = vsel %vm3324, %v3310, %v2234
      %v3344 = vsel %vm3324, %v3311, %v2236
      %v3345 = vsel %vm3324, %v3312, %v2238
      %v3346 = vsel %vm3324, %v3313, %v2240
      %v3347 = vsel %vm3324, %v3314, %v2242
      %v3348 = vsel %vm3324, %v3315, %v2244
      %v3349 = vsel %vm3324, %v3316, %v2246
      %v3350 = vsel %vm3324, %v3317, %v2248
      %v3351 = vsel %vm3324, %v3318, %v2250
      %v3352 = vsel %vm3324, %v3319, %v2252
      %v3353 = vsel %vm3324, %v3320, %v2254
      %v3354 = vsel %vm3324, %v3321, %v2256
      %v3355 = vsel %vm3324, %v3322, %v2258
      %v3356 = vsel %vm3324, %v3323, %v2260
      %vm3357 = vcmask 326656
      %v3358 = vsel %vm3357, %v3325, %v2326
      %v3359 = vsel %vm3357, %v3326, %v2328
      %v3360 = vsel %vm3357, %v3327, %v2330
      %v3361 = vsel %vm3357, %v3328, %v2332
      %v3362 = vsel %vm3357, %v3329, %v2334
      %v3363 = vsel %vm3357, %v3330, %v2336
      %v3364 = vsel %vm3357, %v3331, %v2338
      %v3365 = vsel %vm3357, %v3332, %v2340
      %v3366 = vsel %vm3357, %v3333, %v2342
      %v3367 = vsel %vm3357, %v3334, %v2344
      %v3368 = vsel %vm3357, %v3335, %v2346
      %v3369 = vsel %vm3357, %v3336, %v2348
      %v3370 = vsel %vm3357, %v3337, %v2350
      %v3371 = vsel %vm3357, %v3338, %v2352
      %v3372 = vsel %vm3357, %v3339, %v2354
      %v3373 = vsel %vm3357, %v3340, %v2356
      %v3374 = vsel %vm3357, %v3341, %v2358
      %v3375 = vsel %vm3357, %v3342, %v2360
      %v3376 = vsel %vm3357, %v3343, %v2362
      %v3377 = vsel %vm3357, %v3344, %v2364
      %v3378 = vsel %vm3357, %v3345, %v2366
      %v3379 = vsel %vm3357, %v3346, %v2368
      %v3380 = vsel %vm3357, %v3347, %v2370
      %v3381 = vsel %vm3357, %v3348, %v2372
      %v3382 = vsel %vm3357, %v3349, %v2374
      %v3383 = vsel %vm3357, %v3350, %v2376
      %v3384 = vsel %vm3357, %v3351, %v2378
      %v3385 = vsel %vm3357, %v3352, %v2380
      %v3386 = vsel %vm3357, %v3353, %v2382
      %v3387 = vsel %vm3357, %v3354, %v2384
      %v3388 = vsel %vm3357, %v3355, %v2386
      %v3389 = vsel %vm3357, %v3356, %v2388
      %vm3390 = vcmask 359424
      %v3391 = vsel %vm3390, %v3358, %v2454
      %v3392 = vsel %vm3390, %v3359, %v2456
      %v3393 = vsel %vm3390, %v3360, %v2458
      %v3394 = vsel %vm3390, %v3361, %v2460
      %v3395 = vsel %vm3390, %v3362, %v2462
      %v3396 = vsel %vm3390, %v3363, %v2464
      %v3397 = vsel %vm3390, %v3364, %v2466
      %v3398 = vsel %vm3390, %v3365, %v2468
      %v3399 = vsel %vm3390, %v3366, %v2470
      %v3400 = vsel %vm3390, %v3367, %v2472
      %v3401 = vsel %vm3390, %v3368, %v2474
      %v3402 = vsel %vm3390, %v3369, %v2476
      %v3403 = vsel %vm3390, %v3370, %v2478
      %v3404 = vsel %vm3390, %v3371, %v2480
      %v3405 = vsel %vm3390, %v3372, %v2482
      %v3406 = vsel %vm3390, %v3373, %v2484
      %v3407 = vsel %vm3390, %v3374, %v2486
      %v3408 = vsel %vm3390, %v3375, %v2488
      %v3409 = vsel %vm3390, %v3376, %v2490
      %v3410 = vsel %vm3390, %v3377, %v2492
      %v3411 = vsel %vm3390, %v3378, %v2494
      %v3412 = vsel %vm3390, %v3379, %v2496
      %v3413 = vsel %vm3390, %v3380, %v2498
      %v3414 = vsel %vm3390, %v3381, %v2500
      %v3415 = vsel %vm3390, %v3382, %v2502
      %v3416 = vsel %vm3390, %v3383, %v2504
      %v3417 = vsel %vm3390, %v3384, %v2506
      %v3418 = vsel %vm3390, %v3385, %v2508
      %v3419 = vsel %vm3390, %v3386, %v2510
      %v3420 = vsel %vm3390, %v3387, %v2512
      %v3421 = vsel %vm3390, %v3388, %v2514
      %v3422 = vsel %vm3390, %v3389, %v2516
      %vm3423 = vcmask 392192
      %v3424 = vsel %vm3423, %v3391, %v2582
      %v3425 = vsel %vm3423, %v3392, %v2584
      %v3426 = vsel %vm3423, %v3393, %v2586
      %v3427 = vsel %vm3423, %v3394, %v2588
      %v3428 = vsel %vm3423, %v3395, %v2590
      %v3429 = vsel %vm3423, %v3396, %v2592
      %v3430 = vsel %vm3423, %v3397, %v2594
      %v3431 = vsel %vm3423, %v3398, %v2596
      %v3432 = vsel %vm3423, %v3399, %v2598
      %v3433 = vsel %vm3423, %v3400, %v2600
      %v3434 = vsel %vm3423, %v3401, %v2602
      %v3435 = vsel %vm3423, %v3402, %v2604
      %v3436 = vsel %vm3423, %v3403, %v2606
      %v3437 = vsel %vm3423, %v3404, %v2608
      %v3438 = vsel %vm3423, %v3405, %v2610
      %v3439 = vsel %vm3423, %v3406, %v2612
      %v3440 = vsel %vm3423, %v3407, %v2614
      %v3441 = vsel %vm3423, %v3408, %v2616
      %v3442 = vsel %vm3423, %v3409, %v2618
      %v3443 = vsel %vm3423, %v3410, %v2620
      %v3444 = vsel %vm3423, %v3411, %v2622
      %v3445 = vsel %vm3423, %v3412, %v2624
      %v3446 = vsel %vm3423, %v3413, %v2626
      %v3447 = vsel %vm3423, %v3414, %v2628
      %v3448 = vsel %vm3423, %v3415, %v2630
      %v3449 = vsel %vm3423, %v3416, %v2632
      %v3450 = vsel %vm3423, %v3417, %v2634
      %v3451 = vsel %vm3423, %v3418, %v2636
      %v3452 = vsel %vm3423, %v3419, %v2638
      %v3453 = vsel %vm3423, %v3420, %v2640
      %v3454 = vsel %vm3423, %v3421, %v2642
      %v3455 = vsel %vm3423, %v3422, %v2644
      %vm3456 = vcmask 424960
      %v3457 = vsel %vm3456, %v3424, %v2710
      %v3458 = vsel %vm3456, %v3425, %v2712
      %v3459 = vsel %vm3456, %v3426, %v2714
      %v3460 = vsel %vm3456, %v3427, %v2716
      %v3461 = vsel %vm3456, %v3428, %v2718
      %v3462 = vsel %vm3456, %v3429, %v2720
      %v3463 = vsel %vm3456, %v3430, %v2722
      %v3464 = vsel %vm3456, %v3431, %v2724
      %v3465 = vsel %vm3456, %v3432, %v2726
      %v3466 = vsel %vm3456, %v3433, %v2728
      %v3467 = vsel %vm3456, %v3434, %v2730
      %v3468 = vsel %vm3456, %v3435, %v2732
      %v3469 = vsel %vm3456, %v3436, %v2734
      %v3470 = vsel %vm3456, %v3437, %v2736
      %v3471 = vsel %vm3456, %v3438, %v2738
      %v3472 = vsel %vm3456, %v3439, %v2740
      %v3473 = vsel %vm3456, %v3440, %v2742
      %v3474 = vsel %vm3456, %v3441, %v2744
      %v3475 = vsel %vm3456, %v3442, %v2746
      %v3476 = vsel %vm3456, %v3443, %v2748
      %v3477 = vsel %vm3456, %v3444, %v2750
      %v3478 = vsel %vm3456, %v3445, %v2752
      %v3479 = vsel %vm3456, %v3446, %v2754
      %v3480 = vsel %vm3456, %v3447, %v2756
      %v3481 = vsel %vm3456, %v3448, %v2758
      %v3482 = vsel %vm3456, %v3449, %v2760
      %v3483 = vsel %vm3456, %v3450, %v2762
      %v3484 = vsel %vm3456, %v3451, %v2764
      %v3485 = vsel %vm3456, %v3452, %v2766
      %v3486 = vsel %vm3456, %v3453, %v2768
      %v3487 = vsel %vm3456, %v3454, %v2770
      %v3488 = vsel %vm3456, %v3455, %v2772
      %vm3489 = vcmask 457728
      %v3490 = vsel %vm3489, %v3457, %v2838
      %v3491 = vsel %vm3489, %v3458, %v2840
      %v3492 = vsel %vm3489, %v3459, %v2842
      %v3493 = vsel %vm3489, %v3460, %v2844
      %v3494 = vsel %vm3489, %v3461, %v2846
      %v3495 = vsel %vm3489, %v3462, %v2848
      %v3496 = vsel %vm3489, %v3463, %v2850
      %v3497 = vsel %vm3489, %v3464, %v2852
      %v3498 = vsel %vm3489, %v3465, %v2854
      %v3499 = vsel %vm3489, %v3466, %v2856
      %v3500 = vsel %vm3489, %v3467, %v2858
      %v3501 = vsel %vm3489, %v3468, %v2860
      %v3502 = vsel %vm3489, %v3469, %v2862
      %v3503 = vsel %vm3489, %v3470, %v2864
      %v3504 = vsel %vm3489, %v3471, %v2866
      %v3505 = vsel %vm3489, %v3472, %v2868
      %v3506 = vsel %vm3489, %v3473, %v2870
      %v3507 = vsel %vm3489, %v3474, %v2872
      %v3508 = vsel %vm3489, %v3475, %v2874
      %v3509 = vsel %vm3489, %v3476, %v2876
      %v3510 = vsel %vm3489, %v3477, %v2878
      %v3511 = vsel %vm3489, %v3478, %v2880
      %v3512 = vsel %vm3489, %v3479, %v2882
      %v3513 = vsel %vm3489, %v3480, %v2884
      %v3514 = vsel %vm3489, %v3481, %v2886
      %v3515 = vsel %vm3489, %v3482, %v2888
      %v3516 = vsel %vm3489, %v3483, %v2890
      %v3517 = vsel %vm3489, %v3484, %v2892
      %v3518 = vsel %vm3489, %v3485, %v2894
      %v3519 = vsel %vm3489, %v3486, %v2896
      %v3520 = vsel %vm3489, %v3487, %v2898
      %v3521 = vsel %vm3489, %v3488, %v2900
      %vm3522 = vcmask 490496
      %v3523 = vsel %vm3522, %v3490, %v2966
      %v3524 = vsel %vm3522, %v3491, %v2968
      %v3525 = vsel %vm3522, %v3492, %v2970
      %v3526 = vsel %vm3522, %v3493, %v2972
      %v3527 = vsel %vm3522, %v3494, %v2974
      %v3528 = vsel %vm3522, %v3495, %v2976
      %v3529 = vsel %vm3522, %v3496, %v2978
      %v3530 = vsel %vm3522, %v3497, %v2980
      %v3531 = vsel %vm3522, %v3498, %v2982
      %v3532 = vsel %vm3522, %v3499, %v2984
      %v3533 = vsel %vm3522, %v3500, %v2986
      %v3534 = vsel %vm3522, %v3501, %v2988
      %v3535 = vsel %vm3522, %v3502, %v2990
      %v3536 = vsel %vm3522, %v3503, %v2992
      %v3537 = vsel %vm3522, %v3504, %v2994
      %v3538 = vsel %vm3522, %v3505, %v2996
      %v3539 = vsel %vm3522, %v3506, %v2998
      %v3540 = vsel %vm3522, %v3507, %v3000
      %v3541 = vsel %vm3522, %v3508, %v3002
      %v3542 = vsel %vm3522, %v3509, %v3004
      %v3543 = vsel %vm3522, %v3510, %v3006
      %v3544 = vsel %vm3522, %v3511, %v3008
      %v3545 = vsel %vm3522, %v3512, %v3010
      %v3546 = vsel %vm3522, %v3513, %v3012
      %v3547 = vsel %vm3522, %v3514, %v3014
      %v3548 = vsel %vm3522, %v3515, %v3016
      %v3549 = vsel %vm3522, %v3516, %v3018
      %v3550 = vsel %vm3522, %v3517, %v3020
      %v3551 = vsel %vm3522, %v3518, %v3022
      %v3552 = vsel %vm3522, %v3519, %v3024
      %v3553 = vsel %vm3522, %v3520, %v3026
      %v3554 = vsel %vm3522, %v3521, %v3028
      %3587 = vrot.lane.b32.xlu0 %v884, 4
      %v3588 = vpop.permute.xlu0 %3587
      %3589 = vrot.lane.b32.xlu0 %v885, 4
      %v3590 = vpop.permute.xlu0 %3589
      %3591 = vrot.lane.b32.xlu0 %v886, 4
      %v3592 = vpop.permute.xlu0 %3591
      %3593 = vrot.lane.b32.xlu0 %v887, 4
      %v3594 = vpop.permute.xlu0 %3593
      %3595 = vrot.lane.b32.xlu0 %v888, 4
      %v3596 = vpop.permute.xlu0 %3595
      %3597 = vrot.lane.b32.xlu0 %v889, 4
      %v3598 = vpop.permute.xlu0 %3597
      %3599 = vrot.lane.b32.xlu0 %v890, 4
      %v3600 = vpop.permute.xlu0 %3599
      %3601 = vrot.lane.b32.xlu0 %v891, 4
      %v3602 = vpop.permute.xlu0 %3601
      %3603 = vrot.lane.b32.xlu0 %v892, 4
      %v3604 = vpop.permute.xlu0 %3603
      %3605 = vrot.lane.b32.xlu0 %v893, 4
      %v3606 = vpop.permute.xlu0 %3605
      %3607 = vrot.lane.b32.xlu0 %v894, 4
      %v3608 = vpop.permute.xlu0 %3607
      %3609 = vrot.lane.b32.xlu0 %v895, 4
      %v3610 = vpop.permute.xlu0 %3609
      %3611 = vrot.lane.b32.xlu0 %v896, 4
      %v3612 = vpop.permute.xlu0 %3611
      %3613 = vrot.lane.b32.xlu0 %v897, 4
      %v3614 = vpop.permute.xlu0 %3613
      %3615 = vrot.lane.b32.xlu0 %v898, 4
      %v3616 = vpop.permute.xlu0 %3615
      %3617 = vrot.lane.b32.xlu0 %v899, 4
      %v3618 = vpop.permute.xlu0 %3617
      %3619 = vrot.lane.b32.xlu0 %v900, 4
      %v3620 = vpop.permute.xlu0 %3619
      %3621 = vrot.lane.b32.xlu0 %v901, 4
      %v3622 = vpop.permute.xlu0 %3621
      %3623 = vrot.lane.b32.xlu0 %v902, 4
      %v3624 = vpop.permute.xlu0 %3623
      %3625 = vrot.lane.b32.xlu0 %v903, 4
      %v3626 = vpop.permute.xlu0 %3625
      %3627 = vrot.lane.b32.xlu0 %v904, 4
      %v3628 = vpop.permute.xlu0 %3627
      %3629 = vrot.lane.b32.xlu0 %v905, 4
      %v3630 = vpop.permute.xlu0 %3629
      %3631 = vrot.lane.b32.xlu0 %v906, 4
      %v3632 = vpop.permute.xlu0 %3631
      %3633 = vrot.lane.b32.xlu0 %v907, 4
      %v3634 = vpop.permute.xlu0 %3633
      %3635 = vrot.lane.b32.xlu0 %v908, 4
      %v3636 = vpop.permute.xlu0 %3635
      %3637 = vrot.lane.b32.xlu0 %v909, 4
      %v3638 = vpop.permute.xlu0 %3637
      %3639 = vrot.lane.b32.xlu0 %v910, 4
      %v3640 = vpop.permute.xlu0 %3639
      %3641 = vrot.lane.b32.xlu0 %v911, 4
      %v3642 = vpop.permute.xlu0 %3641
      %3643 = vrot.lane.b32.xlu0 %v912, 4
      %v3644 = vpop.permute.xlu0 %3643
      %3645 = vrot.lane.b32.xlu0 %v913, 4
      %v3646 = vpop.permute.xlu0 %3645
      %3647 = vrot.lane.b32.xlu0 %v914, 4
      %v3648 = vpop.permute.xlu0 %3647
      %3649 = vrot.lane.b32.xlu0 %v915, 4
      %v3650 = vpop.permute.xlu0 %3649
      %3715 = vrot.lane.b32.xlu0 %v916, 8
      %v3716 = vpop.permute.xlu0 %3715
      %3717 = vrot.lane.b32.xlu0 %v917, 8
      %v3718 = vpop.permute.xlu0 %3717
      %3719 = vrot.lane.b32.xlu0 %v918, 8
      %v3720 = vpop.permute.xlu0 %3719
      %3721 = vrot.lane.b32.xlu0 %v919, 8
      %v3722 = vpop.permute.xlu0 %3721
      %3723 = vrot.lane.b32.xlu0 %v920, 8
      %v3724 = vpop.permute.xlu0 %3723
      %3725 = vrot.lane.b32.xlu0 %v921, 8
      %v3726 = vpop.permute.xlu0 %3725
      %3727 = vrot.lane.b32.xlu0 %v922, 8
      %v3728 = vpop.permute.xlu0 %3727
      %3729 = vrot.lane.b32.xlu0 %v923, 8
      %v3730 = vpop.permute.xlu0 %3729
      %3731 = vrot.lane.b32.xlu0 %v924, 8
      %v3732 = vpop.permute.xlu0 %3731
      %3733 = vrot.lane.b32.xlu0 %v925, 8
      %v3734 = vpop.permute.xlu0 %3733
      %3735 = vrot.lane.b32.xlu0 %v926, 8
      %v3736 = vpop.permute.xlu0 %3735
      %3737 = vrot.lane.b32.xlu0 %v927, 8
      %v3738 = vpop.permute.xlu0 %3737
      %3739 = vrot.lane.b32.xlu0 %v928, 8
      %v3740 = vpop.permute.xlu0 %3739
      %3741 = vrot.lane.b32.xlu0 %v929, 8
      %v3742 = vpop.permute.xlu0 %3741
      %3743 = vrot.lane.b32.xlu0 %v930, 8
      %v3744 = vpop.permute.xlu0 %3743
      %3745 = vrot.lane.b32.xlu0 %v931, 8
      %v3746 = vpop.permute.xlu0 %3745
      %3747 = vrot.lane.b32.xlu0 %v932, 8
      %v3748 = vpop.permute.xlu0 %3747
      %3749 = vrot.lane.b32.xlu0 %v933, 8
      %v3750 = vpop.permute.xlu0 %3749
      %3751 = vrot.lane.b32.xlu0 %v934, 8
      %v3752 = vpop.permute.xlu0 %3751
      %3753 = vrot.lane.b32.xlu0 %v935, 8
      %v3754 = vpop.permute.xlu0 %3753
      %3755 = vrot.lane.b32.xlu0 %v936, 8
      %v3756 = vpop.permute.xlu0 %3755
      %3757 = vrot.lane.b32.xlu0 %v937, 8
      %v3758 = vpop.permute.xlu0 %3757
      %3759 = vrot.lane.b32.xlu0 %v938, 8
      %v3760 = vpop.permute.xlu0 %3759
      %3761 = vrot.lane.b32.xlu0 %v939, 8
      %v3762 = vpop.permute.xlu0 %3761
      %3763 = vrot.lane.b32.xlu0 %v940, 8
      %v3764 = vpop.permute.xlu0 %3763
      %3765 = vrot.lane.b32.xlu0 %v941, 8
      %v3766 = vpop.permute.xlu0 %3765
      %3767 = vrot.lane.b32.xlu0 %v942, 8
      %v3768 = vpop.permute.xlu0 %3767
      %3769 = vrot.lane.b32.xlu0 %v943, 8
      %v3770 = vpop.permute.xlu0 %3769
      %3771 = vrot.lane.b32.xlu0 %v944, 8
      %v3772 = vpop.permute.xlu0 %3771
      %3773 = vrot.lane.b32.xlu0 %v945, 8
      %v3774 = vpop.permute.xlu0 %3773
      %3775 = vrot.lane.b32.xlu0 %v946, 8
      %v3776 = vpop.permute.xlu0 %3775
      %3777 = vrot.lane.b32.xlu0 %v947, 8
      %v3778 = vpop.permute.xlu0 %3777
      %3843 = vrot.lane.b32.xlu0 %v948, 12
      %v3844 = vpop.permute.xlu0 %3843
      %3845 = vrot.lane.b32.xlu0 %v949, 12
      %v3846 = vpop.permute.xlu0 %3845
      %3847 = vrot.lane.b32.xlu0 %v950, 12
      %v3848 = vpop.permute.xlu0 %3847
      %3849 = vrot.lane.b32.xlu0 %v951, 12
      %v3850 = vpop.permute.xlu0 %3849
      %3851 = vrot.lane.b32.xlu0 %v952, 12
      %v3852 = vpop.permute.xlu0 %3851
      %3853 = vrot.lane.b32.xlu0 %v953, 12
      %v3854 = vpop.permute.xlu0 %3853
      %3855 = vrot.lane.b32.xlu0 %v954, 12
      %v3856 = vpop.permute.xlu0 %3855
      %3857 = vrot.lane.b32.xlu0 %v955, 12
      %v3858 = vpop.permute.xlu0 %3857
      %3859 = vrot.lane.b32.xlu0 %v956, 12
      %v3860 = vpop.permute.xlu0 %3859
      %3861 = vrot.lane.b32.xlu0 %v957, 12
      %v3862 = vpop.permute.xlu0 %3861
      %3863 = vrot.lane.b32.xlu0 %v958, 12
      %v3864 = vpop.permute.xlu0 %3863
      %3865 = vrot.lane.b32.xlu0 %v959, 12
      %v3866 = vpop.permute.xlu0 %3865
      %3867 = vrot.lane.b32.xlu0 %v960, 12
      %v3868 = vpop.permute.xlu0 %3867
      %3869 = vrot.lane.b32.xlu0 %v961, 12
      %v3870 = vpop.permute.xlu0 %3869
      %3871 = vrot.lane.b32.xlu0 %v962, 12
      %v3872 = vpop.permute.xlu0 %3871
      %3873 = vrot.lane.b32.xlu0 %v963, 12
      %v3874 = vpop.permute.xlu0 %3873
      %3875 = vrot.lane.b32.xlu0 %v964, 12
      %v3876 = vpop.permute.xlu0 %3875
      %3877 = vrot.lane.b32.xlu0 %v965, 12
      %v3878 = vpop.permute.xlu0 %3877
      %3879 = vrot.lane.b32.xlu0 %v966, 12
      %v3880 = vpop.permute.xlu0 %3879
      %3881 = vrot.lane.b32.xlu0 %v967, 12
      %v3882 = vpop.permute.xlu0 %3881
      %3883 = vrot.lane.b32.xlu0 %v968, 12
      %v3884 = vpop.permute.xlu0 %3883
      %3885 = vrot.lane.b32.xlu0 %v969, 12
      %v3886 = vpop.permute.xlu0 %3885
      %3887 = vrot.lane.b32.xlu0 %v970, 12
      %v3888 = vpop.permute.xlu0 %3887
      %3889 = vrot.lane.b32.xlu0 %v971, 12
      %v3890 = vpop.permute.xlu0 %3889
      %3891 = vrot.lane.b32.xlu0 %v972, 12
      %v3892 = vpop.permute.xlu0 %3891
      %3893 = vrot.lane.b32.xlu0 %v973, 12
      %v3894 = vpop.permute.xlu0 %3893
      %3895 = vrot.lane.b32.xlu0 %v974, 12
      %v3896 = vpop.permute.xlu0 %3895
      %3897 = vrot.lane.b32.xlu0 %v975, 12
      %v3898 = vpop.permute.xlu0 %3897
      %3899 = vrot.lane.b32.xlu0 %v976, 12
      %v3900 = vpop.permute.xlu0 %3899
      %3901 = vrot.lane.b32.xlu0 %v977, 12
      %v3902 = vpop.permute.xlu0 %3901
      %3903 = vrot.lane.b32.xlu0 %v978, 12
      %v3904 = vpop.permute.xlu0 %3903
      %3905 = vrot.lane.b32.xlu0 %v979, 12
      %v3906 = vpop.permute.xlu0 %3905
      %3971 = vrot.lane.b32.xlu0 %v981, 16
      %v3972 = vpop.permute.xlu0 %3971
      %3973 = vrot.lane.b32.xlu0 %v982, 16
      %v3974 = vpop.permute.xlu0 %3973
      %3975 = vrot.lane.b32.xlu0 %v983, 16
      %v3976 = vpop.permute.xlu0 %3975
      %3977 = vrot.lane.b32.xlu0 %v984, 16
      %v3978 = vpop.permute.xlu0 %3977
      %3979 = vrot.lane.b32.xlu0 %v985, 16
      %v3980 = vpop.permute.xlu0 %3979
      %3981 = vrot.lane.b32.xlu0 %v986, 16
      %v3982 = vpop.permute.xlu0 %3981
      %3983 = vrot.lane.b32.xlu0 %v987, 16
      %v3984 = vpop.permute.xlu0 %3983
      %3985 = vrot.lane.b32.xlu0 %v988, 16
      %v3986 = vpop.permute.xlu0 %3985
      %3987 = vrot.lane.b32.xlu0 %v989, 16
      %v3988 = vpop.permute.xlu0 %3987
      %3989 = vrot.lane.b32.xlu0 %v990, 16
      %v3990 = vpop.permute.xlu0 %3989
      %3991 = vrot.lane.b32.xlu0 %v991, 16
      %v3992 = vpop.permute.xlu0 %3991
      %3993 = vrot.lane.b32.xlu0 %v992, 16
      %v3994 = vpop.permute.xlu0 %3993
      %3995 = vrot.lane.b32.xlu0 %v993, 16
      %v3996 = vpop.permute.xlu0 %3995
      %3997 = vrot.lane.b32.xlu0 %v994, 16
      %v3998 = vpop.permute.xlu0 %3997
      %3999 = vrot.lane.b32.xlu0 %v995, 16
      %v4000 = vpop.permute.xlu0 %3999
      %4001 = vrot.lane.b32.xlu0 %v996, 16
      %v4002 = vpop.permute.xlu0 %4001
      %4003 = vrot.lane.b32.xlu0 %v997, 16
      %v4004 = vpop.permute.xlu0 %4003
      %4005 = vrot.lane.b32.xlu0 %v998, 16
      %v4006 = vpop.permute.xlu0 %4005
      %4007 = vrot.lane.b32.xlu0 %v999, 16
      %v4008 = vpop.permute.xlu0 %4007
      %4009 = vrot.lane.b32.xlu0 %v1000, 16
      %v4010 = vpop.permute.xlu0 %4009
      %4011 = vrot.lane.b32.xlu0 %v1001, 16
      %v4012 = vpop.permute.xlu0 %4011
      %4013 = vrot.lane.b32.xlu0 %v1002, 16
      %v4014 = vpop.permute.xlu0 %4013
      %4015 = vrot.lane.b32.xlu0 %v1003, 16
      %v4016 = vpop.permute.xlu0 %4015
      %4017 = vrot.lane.b32.xlu0 %v1004, 16
      %v4018 = vpop.permute.xlu0 %4017
      %4019 = vrot.lane.b32.xlu0 %v1005, 16
      %v4020 = vpop.permute.xlu0 %4019
      %4021 = vrot.lane.b32.xlu0 %v1006, 16
      %v4022 = vpop.permute.xlu0 %4021
      %4023 = vrot.lane.b32.xlu0 %v1007, 16
      %v4024 = vpop.permute.xlu0 %4023
      %4025 = vrot.lane.b32.xlu0 %v1008, 16
      %v4026 = vpop.permute.xlu0 %4025
      %4027 = vrot.lane.b32.xlu0 %v1009, 16
      %v4028 = vpop.permute.xlu0 %4027
      %4029 = vrot.lane.b32.xlu0 %v1010, 16
      %v4030 = vpop.permute.xlu0 %4029
      %4031 = vrot.lane.b32.xlu0 %v1011, 16
      %v4032 = vpop.permute.xlu0 %4031
      %4033 = vrot.lane.b32.xlu0 %v1012, 16
      %v4034 = vpop.permute.xlu0 %4033
      %4099 = vrot.lane.b32.xlu0 %v1013, 20
      %v4100 = vpop.permute.xlu0 %4099
      %4101 = vrot.lane.b32.xlu0 %v1014, 20
      %v4102 = vpop.permute.xlu0 %4101
      %4103 = vrot.lane.b32.xlu0 %v1015, 20
      %v4104 = vpop.permute.xlu0 %4103
      %4105 = vrot.lane.b32.xlu0 %v1016, 20
      %v4106 = vpop.permute.xlu0 %4105
      %4107 = vrot.lane.b32.xlu0 %v1017, 20
      %v4108 = vpop.permute.xlu0 %4107
      %4109 = vrot.lane.b32.xlu0 %v1018, 20
      %v4110 = vpop.permute.xlu0 %4109
      %4111 = vrot.lane.b32.xlu0 %v1019, 20
      %v4112 = vpop.permute.xlu0 %4111
      %4113 = vrot.lane.b32.xlu0 %v1020, 20
      %v4114 = vpop.permute.xlu0 %4113
      %4115 = vrot.lane.b32.xlu0 %v1021, 20
      %v4116 = vpop.permute.xlu0 %4115
      %4117 = vrot.lane.b32.xlu0 %v1022, 20
      %v4118 = vpop.permute.xlu0 %4117
      %4119 = vrot.lane.b32.xlu0 %v1023, 20
      %v4120 = vpop.permute.xlu0 %4119
      %4121 = vrot.lane.b32.xlu0 %v1024, 20
      %v4122 = vpop.permute.xlu0 %4121
      %4123 = vrot.lane.b32.xlu0 %v1025, 20
      %v4124 = vpop.permute.xlu0 %4123
      %4125 = vrot.lane.b32.xlu0 %v1026, 20
      %v4126 = vpop.permute.xlu0 %4125
      %4127 = vrot.lane.b32.xlu0 %v1027, 20
      %v4128 = vpop.permute.xlu0 %4127
      %4129 = vrot.lane.b32.xlu0 %v1028, 20
      %v4130 = vpop.permute.xlu0 %4129
      %4131 = vrot.lane.b32.xlu0 %v1029, 20
      %v4132 = vpop.permute.xlu0 %4131
      %4133 = vrot.lane.b32.xlu0 %v1030, 20
      %v4134 = vpop.permute.xlu0 %4133
      %4135 = vrot.lane.b32.xlu0 %v1031, 20
      %v4136 = vpop.permute.xlu0 %4135
      %4137 = vrot.lane.b32.xlu0 %v1032, 20
      %v4138 = vpop.permute.xlu0 %4137
      %4139 = vrot.lane.b32.xlu0 %v1033, 20
      %v4140 = vpop.permute.xlu0 %4139
      %4141 = vrot.lane.b32.xlu0 %v1034, 20
      %v4142 = vpop.permute.xlu0 %4141
      %4143 = vrot.lane.b32.xlu0 %v1035, 20
      %v4144 = vpop.permute.xlu0 %4143
      %4145 = vrot.lane.b32.xlu0 %v1036, 20
      %v4146 = vpop.permute.xlu0 %4145
      %4147 = vrot.lane.b32.xlu0 %v1037, 20
      %v4148 = vpop.permute.xlu0 %4147
      %4149 = vrot.lane.b32.xlu0 %v1038, 20
      %v4150 = vpop.permute.xlu0 %4149
      %4151 = vrot.lane.b32.xlu0 %v1039, 20
      %v4152 = vpop.permute.xlu0 %4151
      %4153 = vrot.lane.b32.xlu0 %v1040, 20
      %v4154 = vpop.permute.xlu0 %4153
      %4155 = vrot.lane.b32.xlu0 %v1041, 20
      %v4156 = vpop.permute.xlu0 %4155
      %4157 = vrot.lane.b32.xlu0 %v1042, 20
      %v4158 = vpop.permute.xlu0 %4157
      %4159 = vrot.lane.b32.xlu0 %v1043, 20
      %v4160 = vpop.permute.xlu0 %4159
      %4161 = vrot.lane.b32.xlu0 %v1044, 20
      %v4162 = vpop.permute.xlu0 %4161
      %4227 = vrot.lane.b32.xlu0 %v1045, 24
      %v4228 = vpop.permute.xlu0 %4227
      %4229 = vrot.lane.b32.xlu0 %v1046, 24
      %v4230 = vpop.permute.xlu0 %4229
      %4231 = vrot.lane.b32.xlu0 %v1047, 24
      %v4232 = vpop.permute.xlu0 %4231
      %4233 = vrot.lane.b32.xlu0 %v1048, 24
      %v4234 = vpop.permute.xlu0 %4233
      %4235 = vrot.lane.b32.xlu0 %v1049, 24
      %v4236 = vpop.permute.xlu0 %4235
      %4237 = vrot.lane.b32.xlu0 %v1050, 24
      %v4238 = vpop.permute.xlu0 %4237
      %4239 = vrot.lane.b32.xlu0 %v1051, 24
      %v4240 = vpop.permute.xlu0 %4239
      %4241 = vrot.lane.b32.xlu0 %v1052, 24
      %v4242 = vpop.permute.xlu0 %4241
      %4243 = vrot.lane.b32.xlu0 %v1053, 24
      %v4244 = vpop.permute.xlu0 %4243
      %4245 = vrot.lane.b32.xlu0 %v1054, 24
      %v4246 = vpop.permute.xlu0 %4245
      %4247 = vrot.lane.b32.xlu0 %v1055, 24
      %v4248 = vpop.permute.xlu0 %4247
      %4249 = vrot.lane.b32.xlu0 %v1056, 24
      %v4250 = vpop.permute.xlu0 %4249
      %4251 = vrot.lane.b32.xlu0 %v1057, 24
      %v4252 = vpop.permute.xlu0 %4251
      %4253 = vrot.lane.b32.xlu0 %v1058, 24
      %v4254 = vpop.permute.xlu0 %4253
      %4255 = vrot.lane.b32.xlu0 %v1059, 24
      %v4256 = vpop.permute.xlu0 %4255
      %4257 = vrot.lane.b32.xlu0 %v1060, 24
      %v4258 = vpop.permute.xlu0 %4257
      %4259 = vrot.lane.b32.xlu0 %v1061, 24
      %v4260 = vpop.permute.xlu0 %4259
      %4261 = vrot.lane.b32.xlu0 %v1062, 24
      %v4262 = vpop.permute.xlu0 %4261
      %4263 = vrot.lane.b32.xlu0 %v1063, 24
      %v4264 = vpop.permute.xlu0 %4263
      %4265 = vrot.lane.b32.xlu0 %v1064, 24
      %v4266 = vpop.permute.xlu0 %4265
      %4267 = vrot.lane.b32.xlu0 %v1065, 24
      %v4268 = vpop.permute.xlu0 %4267
      %4269 = vrot.lane.b32.xlu0 %v1066, 24
      %v4270 = vpop.permute.xlu0 %4269
      %4271 = vrot.lane.b32.xlu0 %v1067, 24
      %v4272 = vpop.permute.xlu0 %4271
      %4273 = vrot.lane.b32.xlu0 %v1068, 24
      %v4274 = vpop.permute.xlu0 %4273
      %4275 = vrot.lane.b32.xlu0 %v1069, 24
      %v4276 = vpop.permute.xlu0 %4275
      %4277 = vrot.lane.b32.xlu0 %v1070, 24
      %v4278 = vpop.permute.xlu0 %4277
      %4279 = vrot.lane.b32.xlu0 %v1071, 24
      %v4280 = vpop.permute.xlu0 %4279
      %4281 = vrot.lane.b32.xlu0 %v1072, 24
      %v4282 = vpop.permute.xlu0 %4281
      %4283 = vrot.lane.b32.xlu0 %v1073, 24
      %v4284 = vpop.permute.xlu0 %4283
      %4285 = vrot.lane.b32.xlu0 %v1074, 24
      %v4286 = vpop.permute.xlu0 %4285
      %4287 = vrot.lane.b32.xlu0 %v1075, 24
      %v4288 = vpop.permute.xlu0 %4287
      %4289 = vrot.lane.b32.xlu0 %v1076, 24
      %v4290 = vpop.permute.xlu0 %4289
      %4355 = vrot.lane.b32.xlu0 %v1077, 28
      %v4356 = vpop.permute.xlu0 %4355
      %4357 = vrot.lane.b32.xlu0 %v1078, 28
      %v4358 = vpop.permute.xlu0 %4357
      %4359 = vrot.lane.b32.xlu0 %v1079, 28
      %v4360 = vpop.permute.xlu0 %4359
      %4361 = vrot.lane.b32.xlu0 %v1080, 28
      %v4362 = vpop.permute.xlu0 %4361
      %4363 = vrot.lane.b32.xlu0 %v1081, 28
      %v4364 = vpop.permute.xlu0 %4363
      %4365 = vrot.lane.b32.xlu0 %v1082, 28
      %v4366 = vpop.permute.xlu0 %4365
      %4367 = vrot.lane.b32.xlu0 %v1083, 28
      %v4368 = vpop.permute.xlu0 %4367
      %4369 = vrot.lane.b32.xlu0 %v1084, 28
      %v4370 = vpop.permute.xlu0 %4369
      %4371 = vrot.lane.b32.xlu0 %v1085, 28
      %v4372 = vpop.permute.xlu0 %4371
      %4373 = vrot.lane.b32.xlu0 %v1086, 28
      %v4374 = vpop.permute.xlu0 %4373
      %4375 = vrot.lane.b32.xlu0 %v1087, 28
      %v4376 = vpop.permute.xlu0 %4375
      %4377 = vrot.lane.b32.xlu0 %v1088, 28
      %v4378 = vpop.permute.xlu0 %4377
      %4379 = vrot.lane.b32.xlu0 %v1089, 28
      %v4380 = vpop.permute.xlu0 %4379
      %4381 = vrot.lane.b32.xlu0 %v1090, 28
      %v4382 = vpop.permute.xlu0 %4381
      %4383 = vrot.lane.b32.xlu0 %v1091, 28
      %v4384 = vpop.permute.xlu0 %4383
      %4385 = vrot.lane.b32.xlu0 %v1092, 28
      %v4386 = vpop.permute.xlu0 %4385
      %4387 = vrot.lane.b32.xlu0 %v1093, 28
      %v4388 = vpop.permute.xlu0 %4387
      %4389 = vrot.lane.b32.xlu0 %v1094, 28
      %v4390 = vpop.permute.xlu0 %4389
      %4391 = vrot.lane.b32.xlu0 %v1095, 28
      %v4392 = vpop.permute.xlu0 %4391
      %4393 = vrot.lane.b32.xlu0 %v1096, 28
      %v4394 = vpop.permute.xlu0 %4393
      %4395 = vrot.lane.b32.xlu0 %v1097, 28
      %v4396 = vpop.permute.xlu0 %4395
      %4397 = vrot.lane.b32.xlu0 %v1098, 28
      %v4398 = vpop.permute.xlu0 %4397
      %4399 = vrot.lane.b32.xlu0 %v1099, 28
      %v4400 = vpop.permute.xlu0 %4399
      %4401 = vrot.lane.b32.xlu0 %v1100, 28
      %v4402 = vpop.permute.xlu0 %4401
      %4403 = vrot.lane.b32.xlu0 %v1101, 28
      %v4404 = vpop.permute.xlu0 %4403
      %4405 = vrot.lane.b32.xlu0 %v1102, 28
      %v4406 = vpop.permute.xlu0 %4405
      %4407 = vrot.lane.b32.xlu0 %v1103, 28
      %v4408 = vpop.permute.xlu0 %4407
      %4409 = vrot.lane.b32.xlu0 %v1104, 28
      %v4410 = vpop.permute.xlu0 %4409
      %4411 = vrot.lane.b32.xlu0 %v1105, 28
      %v4412 = vpop.permute.xlu0 %4411
      %4413 = vrot.lane.b32.xlu0 %v1106, 28
      %v4414 = vpop.permute.xlu0 %4413
      %4415 = vrot.lane.b32.xlu0 %v1107, 28
      %v4416 = vpop.permute.xlu0 %4415
      %4417 = vrot.lane.b32.xlu0 %v1108, 28
      %v4418 = vpop.permute.xlu0 %4417
      %4483 = vrot.lane.b32.xlu0 %v1109, 32
      %v4484 = vpop.permute.xlu0 %4483
      %4485 = vrot.lane.b32.xlu0 %v1110, 32
      %v4486 = vpop.permute.xlu0 %4485
      %4487 = vrot.lane.b32.xlu0 %v1111, 32
      %v4488 = vpop.permute.xlu0 %4487
      %4489 = vrot.lane.b32.xlu0 %v1112, 32
      %v4490 = vpop.permute.xlu0 %4489
      %4491 = vrot.lane.b32.xlu0 %v1113, 32
      %v4492 = vpop.permute.xlu0 %4491
      %4493 = vrot.lane.b32.xlu0 %v1114, 32
      %v4494 = vpop.permute.xlu0 %4493
      %4495 = vrot.lane.b32.xlu0 %v1115, 32
      %v4496 = vpop.permute.xlu0 %4495
      %4497 = vrot.lane.b32.xlu0 %v1116, 32
      %v4498 = vpop.permute.xlu0 %4497
      %4499 = vrot.lane.b32.xlu0 %v1117, 32
      %v4500 = vpop.permute.xlu0 %4499
      %4501 = vrot.lane.b32.xlu0 %v1118, 32
      %v4502 = vpop.permute.xlu0 %4501
      %4503 = vrot.lane.b32.xlu0 %v1119, 32
      %v4504 = vpop.permute.xlu0 %4503
      %4505 = vrot.lane.b32.xlu0 %v1120, 32
      %v4506 = vpop.permute.xlu0 %4505
      %4507 = vrot.lane.b32.xlu0 %v1121, 32
      %v4508 = vpop.permute.xlu0 %4507
      %4509 = vrot.lane.b32.xlu0 %v1122, 32
      %v4510 = vpop.permute.xlu0 %4509
      %4511 = vrot.lane.b32.xlu0 %v1123, 32
      %v4512 = vpop.permute.xlu0 %4511
      %4513 = vrot.lane.b32.xlu0 %v1124, 32
      %v4514 = vpop.permute.xlu0 %4513
      %4515 = vrot.lane.b32.xlu0 %v1125, 32
      %v4516 = vpop.permute.xlu0 %4515
      %4517 = vrot.lane.b32.xlu0 %v1126, 32
      %v4518 = vpop.permute.xlu0 %4517
      %4519 = vrot.lane.b32.xlu0 %v1127, 32
      %v4520 = vpop.permute.xlu0 %4519
      %4521 = vrot.lane.b32.xlu0 %v1128, 32
      %v4522 = vpop.permute.xlu0 %4521
      %4523 = vrot.lane.b32.xlu0 %v1129, 32
      %v4524 = vpop.permute.xlu0 %4523
      %4525 = vrot.lane.b32.xlu0 %v1130, 32
      %v4526 = vpop.permute.xlu0 %4525
      %4527 = vrot.lane.b32.xlu0 %v1131, 32
      %v4528 = vpop.permute.xlu0 %4527
      %4529 = vrot.lane.b32.xlu0 %v1132, 32
      %v4530 = vpop.permute.xlu0 %4529
      %4531 = vrot.lane.b32.xlu0 %v1133, 32
      %v4532 = vpop.permute.xlu0 %4531
      %4533 = vrot.lane.b32.xlu0 %v1134, 32
      %v4534 = vpop.permute.xlu0 %4533
      %4535 = vrot.lane.b32.xlu0 %v1135, 32
      %v4536 = vpop.permute.xlu0 %4535
      %4537 = vrot.lane.b32.xlu0 %v1136, 32
      %v4538 = vpop.permute.xlu0 %4537
      %4539 = vrot.lane.b32.xlu0 %v1137, 32
      %v4540 = vpop.permute.xlu0 %4539
      %4541 = vrot.lane.b32.xlu0 %v1138, 32
      %v4542 = vpop.permute.xlu0 %4541
      %4543 = vrot.lane.b32.xlu0 %v1139, 32
      %v4544 = vpop.permute.xlu0 %4543
      %4545 = vrot.lane.b32.xlu0 %v1140, 32
      %v4546 = vpop.permute.xlu0 %4545
      %v4579 = vsel %vm203, %v852, %v3588
      %v4580 = vsel %vm203, %v853, %v3590
      %v4581 = vsel %vm203, %v854, %v3592
      %v4582 = vsel %vm203, %v855, %v3594
      %v4583 = vsel %vm203, %v856, %v3596
      %v4584 = vsel %vm203, %v857, %v3598
      %v4585 = vsel %vm203, %v858, %v3600
      %v4586 = vsel %vm203, %v859, %v3602
      %v4587 = vsel %vm203, %v860, %v3604
      %v4588 = vsel %vm203, %v861, %v3606
      %v4589 = vsel %vm203, %v862, %v3608
      %v4590 = vsel %vm203, %v863, %v3610
      %v4591 = vsel %vm203, %v864, %v3612
      %v4592 = vsel %vm203, %v865, %v3614
      %v4593 = vsel %vm203, %v866, %v3616
      %v4594 = vsel %vm203, %v867, %v3618
      %v4595 = vsel %vm203, %v868, %v3620
      %v4596 = vsel %vm203, %v869, %v3622
      %v4597 = vsel %vm203, %v870, %v3624
      %v4598 = vsel %vm203, %v871, %v3626
      %v4599 = vsel %vm203, %v872, %v3628
      %v4600 = vsel %vm203, %v873, %v3630
      %v4601 = vsel %vm203, %v874, %v3632
      %v4602 = vsel %vm203, %v875, %v3634
      %v4603 = vsel %vm203, %v876, %v3636
      %v4604 = vsel %vm203, %v877, %v3638
      %v4605 = vsel %vm203, %v878, %v3640
      %v4606 = vsel %vm203, %v879, %v3642
      %v4607 = vsel %vm203, %v880, %v3644
      %v4608 = vsel %vm203, %v881, %v3646
      %v4609 = vsel %vm203, %v882, %v3648
      %v4610 = vsel %vm203, %v883, %v3650
      %v4611 = vsel %vm3093, %v4579, %v3716
      %v4612 = vsel %vm3093, %v4580, %v3718
      %v4613 = vsel %vm3093, %v4581, %v3720
      %v4614 = vsel %vm3093, %v4582, %v3722
      %v4615 = vsel %vm3093, %v4583, %v3724
      %v4616 = vsel %vm3093, %v4584, %v3726
      %v4617 = vsel %vm3093, %v4585, %v3728
      %v4618 = vsel %vm3093, %v4586, %v3730
      %v4619 = vsel %vm3093, %v4587, %v3732
      %v4620 = vsel %vm3093, %v4588, %v3734
      %v4621 = vsel %vm3093, %v4589, %v3736
      %v4622 = vsel %vm3093, %v4590, %v3738
      %v4623 = vsel %vm3093, %v4591, %v3740
      %v4624 = vsel %vm3093, %v4592, %v3742
      %v4625 = vsel %vm3093, %v4593, %v3744
      %v4626 = vsel %vm3093, %v4594, %v3746
      %v4627 = vsel %vm3093, %v4595, %v3748
      %v4628 = vsel %vm3093, %v4596, %v3750
      %v4629 = vsel %vm3093, %v4597, %v3752
      %v4630 = vsel %vm3093, %v4598, %v3754
      %v4631 = vsel %vm3093, %v4599, %v3756
      %v4632 = vsel %vm3093, %v4600, %v3758
      %v4633 = vsel %vm3093, %v4601, %v3760
      %v4634 = vsel %vm3093, %v4602, %v3762
      %v4635 = vsel %vm3093, %v4603, %v3764
      %v4636 = vsel %vm3093, %v4604, %v3766
      %v4637 = vsel %vm3093, %v4605, %v3768
      %v4638 = vsel %vm3093, %v4606, %v3770
      %v4639 = vsel %vm3093, %v4607, %v3772
      %v4640 = vsel %vm3093, %v4608, %v3774
      %v4641 = vsel %vm3093, %v4609, %v3776
      %v4642 = vsel %vm3093, %v4610, %v3778
      %v4643 = vsel %vm3126, %v4611, %v3844
      %v4644 = vsel %vm3126, %v4612, %v3846
      %v4645 = vsel %vm3126, %v4613, %v3848
      %v4646 = vsel %vm3126, %v4614, %v3850
      %v4647 = vsel %vm3126, %v4615, %v3852
      %v4648 = vsel %vm3126, %v4616, %v3854
      %v4649 = vsel %vm3126, %v4617, %v3856
      %v4650 = vsel %vm3126, %v4618, %v3858
      %v4651 = vsel %vm3126, %v4619, %v3860
      %v4652 = vsel %vm3126, %v4620, %v3862
      %v4653 = vsel %vm3126, %v4621, %v3864
      %v4654 = vsel %vm3126, %v4622, %v3866
      %v4655 = vsel %vm3126, %v4623, %v3868
      %v4656 = vsel %vm3126, %v4624, %v3870
      %v4657 = vsel %vm3126, %v4625, %v3872
      %v4658 = vsel %vm3126, %v4626, %v3874
      %v4659 = vsel %vm3126, %v4627, %v3876
      %v4660 = vsel %vm3126, %v4628, %v3878
      %v4661 = vsel %vm3126, %v4629, %v3880
      %v4662 = vsel %vm3126, %v4630, %v3882
      %v4663 = vsel %vm3126, %v4631, %v3884
      %v4664 = vsel %vm3126, %v4632, %v3886
      %v4665 = vsel %vm3126, %v4633, %v3888
      %v4666 = vsel %vm3126, %v4634, %v3890
      %v4667 = vsel %vm3126, %v4635, %v3892
      %v4668 = vsel %vm3126, %v4636, %v3894
      %v4669 = vsel %vm3126, %v4637, %v3896
      %v4670 = vsel %vm3126, %v4638, %v3898
      %v4671 = vsel %vm3126, %v4639, %v3900
      %v4672 = vsel %vm3126, %v4640, %v3902
      %v4673 = vsel %vm3126, %v4641, %v3904
      %v4674 = vsel %vm3126, %v4642, %v3906
      %v4675 = vsel %vm3159, %v4643, %v3972
      %v4676 = vsel %vm3159, %v4644, %v3974
      %v4677 = vsel %vm3159, %v4645, %v3976
      %v4678 = vsel %vm3159, %v4646, %v3978
      %v4679 = vsel %vm3159, %v4647, %v3980
      %v4680 = vsel %vm3159, %v4648, %v3982
      %v4681 = vsel %vm3159, %v4649, %v3984
      %v4682 = vsel %vm3159, %v4650, %v3986
      %v4683 = vsel %vm3159, %v4651, %v3988
      %v4684 = vsel %vm3159, %v4652, %v3990
      %v4685 = vsel %vm3159, %v4653, %v3992
      %v4686 = vsel %vm3159, %v4654, %v3994
      %v4687 = vsel %vm3159, %v4655, %v3996
      %v4688 = vsel %vm3159, %v4656, %v3998
      %v4689 = vsel %vm3159, %v4657, %v4000
      %v4690 = vsel %vm3159, %v4658, %v4002
      %v4691 = vsel %vm3159, %v4659, %v4004
      %v4692 = vsel %vm3159, %v4660, %v4006
      %v4693 = vsel %vm3159, %v4661, %v4008
      %v4694 = vsel %vm3159, %v4662, %v4010
      %v4695 = vsel %vm3159, %v4663, %v4012
      %v4696 = vsel %vm3159, %v4664, %v4014
      %v4697 = vsel %vm3159, %v4665, %v4016
      %v4698 = vsel %vm3159, %v4666, %v4018
      %v4699 = vsel %vm3159, %v4667, %v4020
      %v4700 = vsel %vm3159, %v4668, %v4022
      %v4701 = vsel %vm3159, %v4669, %v4024
      %v4702 = vsel %vm3159, %v4670, %v4026
      %v4703 = vsel %vm3159, %v4671, %v4028
      %v4704 = vsel %vm3159, %v4672, %v4030
      %v4705 = vsel %vm3159, %v4673, %v4032
      %v4706 = vsel %vm3159, %v4674, %v4034
      %v4707 = vsel %vm3192, %v4675, %v4100
      %v4708 = vsel %vm3192, %v4676, %v4102
      %v4709 = vsel %vm3192, %v4677, %v4104
      %v4710 = vsel %vm3192, %v4678, %v4106
      %v4711 = vsel %vm3192, %v4679, %v4108
      %v4712 = vsel %vm3192, %v4680, %v4110
      %v4713 = vsel %vm3192, %v4681, %v4112
      %v4714 = vsel %vm3192, %v4682, %v4114
      %v4715 = vsel %vm3192, %v4683, %v4116
      %v4716 = vsel %vm3192, %v4684, %v4118
      %v4717 = vsel %vm3192, %v4685, %v4120
      %v4718 = vsel %vm3192, %v4686, %v4122
      %v4719 = vsel %vm3192, %v4687, %v4124
      %v4720 = vsel %vm3192, %v4688, %v4126
      %v4721 = vsel %vm3192, %v4689, %v4128
      %v4722 = vsel %vm3192, %v4690, %v4130
      %v4723 = vsel %vm3192, %v4691, %v4132
      %v4724 = vsel %vm3192, %v4692, %v4134
      %v4725 = vsel %vm3192, %v4693, %v4136
      %v4726 = vsel %vm3192, %v4694, %v4138
      %v4727 = vsel %vm3192, %v4695, %v4140
      %v4728 = vsel %vm3192, %v4696, %v4142
      %v4729 = vsel %vm3192, %v4697, %v4144
      %v4730 = vsel %vm3192, %v4698, %v4146
      %v4731 = vsel %vm3192, %v4699, %v4148
      %v4732 = vsel %vm3192, %v4700, %v4150
      %v4733 = vsel %vm3192, %v4701, %v4152
      %v4734 = vsel %vm3192, %v4702, %v4154
      %v4735 = vsel %vm3192, %v4703, %v4156
      %v4736 = vsel %vm3192, %v4704, %v4158
      %v4737 = vsel %vm3192, %v4705, %v4160
      %v4738 = vsel %vm3192, %v4706, %v4162
      %v4739 = vsel %vm3225, %v4707, %v4228
      %v4740 = vsel %vm3225, %v4708, %v4230
      %v4741 = vsel %vm3225, %v4709, %v4232
      %v4742 = vsel %vm3225, %v4710, %v4234
      %v4743 = vsel %vm3225, %v4711, %v4236
      %v4744 = vsel %vm3225, %v4712, %v4238
      %v4745 = vsel %vm3225, %v4713, %v4240
      %v4746 = vsel %vm3225, %v4714, %v4242
      %v4747 = vsel %vm3225, %v4715, %v4244
      %v4748 = vsel %vm3225, %v4716, %v4246
      %v4749 = vsel %vm3225, %v4717, %v4248
      %v4750 = vsel %vm3225, %v4718, %v4250
      %v4751 = vsel %vm3225, %v4719, %v4252
      %v4752 = vsel %vm3225, %v4720, %v4254
      %v4753 = vsel %vm3225, %v4721, %v4256
      %v4754 = vsel %vm3225, %v4722, %v4258
      %v4755 = vsel %vm3225, %v4723, %v4260
      %v4756 = vsel %vm3225, %v4724, %v4262
      %v4757 = vsel %vm3225, %v4725, %v4264
      %v4758 = vsel %vm3225, %v4726, %v4266
      %v4759 = vsel %vm3225, %v4727, %v4268
      %v4760 = vsel %vm3225, %v4728, %v4270
      %v4761 = vsel %vm3225, %v4729, %v4272
      %v4762 = vsel %vm3225, %v4730, %v4274
      %v4763 = vsel %vm3225, %v4731, %v4276
      %v4764 = vsel %vm3225, %v4732, %v4278
      %v4765 = vsel %vm3225, %v4733, %v4280
      %v4766 = vsel %vm3225, %v4734, %v4282
      %v4767 = vsel %vm3225, %v4735, %v4284
      %v4768 = vsel %vm3225, %v4736, %v4286
      %v4769 = vsel %vm3225, %v4737, %v4288
      %v4770 = vsel %vm3225, %v4738, %v4290
      %v4771 = vsel %vm3258, %v4739, %v4356
      %v4772 = vsel %vm3258, %v4740, %v4358
      %v4773 = vsel %vm3258, %v4741, %v4360
      %v4774 = vsel %vm3258, %v4742, %v4362
      %v4775 = vsel %vm3258, %v4743, %v4364
      %v4776 = vsel %vm3258, %v4744, %v4366
      %v4777 = vsel %vm3258, %v4745, %v4368
      %v4778 = vsel %vm3258, %v4746, %v4370
      %v4779 = vsel %vm3258, %v4747, %v4372
      %v4780 = vsel %vm3258, %v4748, %v4374
      %v4781 = vsel %vm3258, %v4749, %v4376
      %v4782 = vsel %vm3258, %v4750, %v4378
      %v4783 = vsel %vm3258, %v4751, %v4380
      %v4784 = vsel %vm3258, %v4752, %v4382
      %v4785 = vsel %vm3258, %v4753, %v4384
      %v4786 = vsel %vm3258, %v4754, %v4386
      %v4787 = vsel %vm3258, %v4755, %v4388
      %v4788 = vsel %vm3258, %v4756, %v4390
      %v4789 = vsel %vm3258, %v4757, %v4392
      %v4790 = vsel %vm3258, %v4758, %v4394
      %v4791 = vsel %vm3258, %v4759, %v4396
      %v4792 = vsel %vm3258, %v4760, %v4398
      %v4793 = vsel %vm3258, %v4761, %v4400
      %v4794 = vsel %vm3258, %v4762, %v4402
      %v4795 = vsel %vm3258, %v4763, %v4404
      %v4796 = vsel %vm3258, %v4764, %v4406
      %v4797 = vsel %vm3258, %v4765, %v4408
      %v4798 = vsel %vm3258, %v4766, %v4410
      %v4799 = vsel %vm3258, %v4767, %v4412
      %v4800 = vsel %vm3258, %v4768, %v4414
      %v4801 = vsel %vm3258, %v4769, %v4416
      %v4802 = vsel %vm3258, %v4770, %v4418
      %v4803 = vsel %vm3291, %v4771, %v4484
      %v4804 = vsel %vm3291, %v4772, %v4486
      %v4805 = vsel %vm3291, %v4773, %v4488
      %v4806 = vsel %vm3291, %v4774, %v4490
      %v4807 = vsel %vm3291, %v4775, %v4492
      %v4808 = vsel %vm3291, %v4776, %v4494
      %v4809 = vsel %vm3291, %v4777, %v4496
      %v4810 = vsel %vm3291, %v4778, %v4498
      %v4811 = vsel %vm3291, %v4779, %v4500
      %v4812 = vsel %vm3291, %v4780, %v4502
      %v4813 = vsel %vm3291, %v4781, %v4504
      %v4814 = vsel %vm3291, %v4782, %v4506
      %v4815 = vsel %vm3291, %v4783, %v4508
      %v4816 = vsel %vm3291, %v4784, %v4510
      %v4817 = vsel %vm3291, %v4785, %v4512
      %v4818 = vsel %vm3291, %v4786, %v4514
      %v4819 = vsel %vm3291, %v4787, %v4516
      %v4820 = vsel %vm3291, %v4788, %v4518
      %v4821 = vsel %vm3291, %v4789, %v4520
      %v4822 = vsel %vm3291, %v4790, %v4522
      %v4823 = vsel %vm3291, %v4791, %v4524
      %v4824 = vsel %vm3291, %v4792, %v4526
      %v4825 = vsel %vm3291, %v4793, %v4528
      %v4826 = vsel %vm3291, %v4794, %v4530
      %v4827 = vsel %vm3291, %v4795, %v4532
      %v4828 = vsel %vm3291, %v4796, %v4534
      %v4829 = vsel %vm3291, %v4797, %v4536
      %v4830 = vsel %vm3291, %v4798, %v4538
      %v4831 = vsel %vm3291, %v4799, %v4540
      %v4832 = vsel %vm3291, %v4800, %v4542
      %v4833 = vsel %vm3291, %v4801, %v4544
      %v4834 = vsel %vm3291, %v4802, %v4546
      %4867 = vrot.lane.b32.xlu0 %v4803, 64
      %v4868 = vpop.permute.xlu0 %4867
      %4869 = vrot.lane.b32.xlu0 %v4804, 64
      %v4870 = vpop.permute.xlu0 %4869
      %4871 = vrot.lane.b32.xlu0 %v4805, 64
      %v4872 = vpop.permute.xlu0 %4871
      %4873 = vrot.lane.b32.xlu0 %v4806, 64
      %v4874 = vpop.permute.xlu0 %4873
      %4875 = vrot.lane.b32.xlu0 %v4807, 64
      %v4876 = vpop.permute.xlu0 %4875
      %4877 = vrot.lane.b32.xlu0 %v4808, 64
      %v4878 = vpop.permute.xlu0 %4877
      %4879 = vrot.lane.b32.xlu0 %v4809, 64
      %v4880 = vpop.permute.xlu0 %4879
      %4881 = vrot.lane.b32.xlu0 %v4810, 64
      %v4882 = vpop.permute.xlu0 %4881
      %4883 = vrot.lane.b32.xlu0 %v4811, 64
      %v4884 = vpop.permute.xlu0 %4883
      %4885 = vrot.lane.b32.xlu0 %v4812, 64
      %v4886 = vpop.permute.xlu0 %4885
      %4887 = vrot.lane.b32.xlu0 %v4813, 64
      %v4888 = vpop.permute.xlu0 %4887
      %4889 = vrot.lane.b32.xlu0 %v4814, 64
      %v4890 = vpop.permute.xlu0 %4889
      %4891 = vrot.lane.b32.xlu0 %v4815, 64
      %v4892 = vpop.permute.xlu0 %4891
      %4893 = vrot.lane.b32.xlu0 %v4816, 64
      %v4894 = vpop.permute.xlu0 %4893
      %4895 = vrot.lane.b32.xlu0 %v4817, 64
      %v4896 = vpop.permute.xlu0 %4895
      %4897 = vrot.lane.b32.xlu0 %v4818, 64
      %v4898 = vpop.permute.xlu0 %4897
      %4899 = vrot.lane.b32.xlu0 %v4819, 64
      %v4900 = vpop.permute.xlu0 %4899
      %4901 = vrot.lane.b32.xlu0 %v4820, 64
      %v4902 = vpop.permute.xlu0 %4901
      %4903 = vrot.lane.b32.xlu0 %v4821, 64
      %v4904 = vpop.permute.xlu0 %4903
      %4905 = vrot.lane.b32.xlu0 %v4822, 64
      %v4906 = vpop.permute.xlu0 %4905
      %4907 = vrot.lane.b32.xlu0 %v4823, 64
      %v4908 = vpop.permute.xlu0 %4907
      %4909 = vrot.lane.b32.xlu0 %v4824, 64
      %v4910 = vpop.permute.xlu0 %4909
      %4911 = vrot.lane.b32.xlu0 %v4825, 64
      %v4912 = vpop.permute.xlu0 %4911
      %4913 = vrot.lane.b32.xlu0 %v4826, 64
      %v4914 = vpop.permute.xlu0 %4913
      %4915 = vrot.lane.b32.xlu0 %v4827, 64
      %v4916 = vpop.permute.xlu0 %4915
      %4917 = vrot.lane.b32.xlu0 %v4828, 64
      %v4918 = vpop.permute.xlu0 %4917
      %4919 = vrot.lane.b32.xlu0 %v4829, 64
      %v4920 = vpop.permute.xlu0 %4919
      %4921 = vrot.lane.b32.xlu0 %v4830, 64
      %v4922 = vpop.permute.xlu0 %4921
      %4923 = vrot.lane.b32.xlu0 %v4831, 64
      %v4924 = vpop.permute.xlu0 %4923
      %4925 = vrot.lane.b32.xlu0 %v4832, 64
      %v4926 = vpop.permute.xlu0 %4925
      %4927 = vrot.lane.b32.xlu0 %v4833, 64
      %v4928 = vpop.permute.xlu0 %4927
      %4929 = vrot.lane.b32.xlu0 %v4834, 64
      %v4930 = vpop.permute.xlu0 %4929
      %vm4963 = vcmask 523264
      %v4964 = vsel %vm4963, %v3523, %v4868
      %v4965 = vsel %vm4963, %v3524, %v4870
      %v4966 = vsel %vm4963, %v3525, %v4872
      %v4967 = vsel %vm4963, %v3526, %v4874
      %v4968 = vsel %vm4963, %v3527, %v4876
      %v4969 = vsel %vm4963, %v3528, %v4878
      %v4970 = vsel %vm4963, %v3529, %v4880
      %v4971 = vsel %vm4963, %v3530, %v4882
      %v4972 = vsel %vm4963, %v3531, %v4884
      %v4973 = vsel %vm4963, %v3532, %v4886
      %v4974 = vsel %vm4963, %v3533, %v4888
      %v4975 = vsel %vm4963, %v3534, %v4890
      %v4976 = vsel %vm4963, %v3535, %v4892
      %v4977 = vsel %vm4963, %v3536, %v4894
      %v4978 = vsel %vm4963, %v3537, %v4896
      %v4979 = vsel %vm4963, %v3538, %v4898
      %v4980 = vsel %vm4963, %v3539, %v4900
      %v4981 = vsel %vm4963, %v3540, %v4902
      %v4982 = vsel %vm4963, %v3541, %v4904
      %v4983 = vsel %vm4963, %v3542, %v4906
      %v4984 = vsel %vm4963, %v3543, %v4908
      %v4985 = vsel %vm4963, %v3544, %v4910
      %v4986 = vsel %vm4963, %v3545, %v4912
      %v4987 = vsel %vm4963, %v3546, %v4914
      %v4988 = vsel %vm4963, %v3547, %v4916
      %v4989 = vsel %vm4963, %v3548, %v4918
      %v4990 = vsel %vm4963, %v3549, %v4920
      %v4991 = vsel %vm4963, %v3550, %v4922
      %v4992 = vsel %vm4963, %v3551, %v4924
      %v4993 = vsel %vm4963, %v3552, %v4926
      %v4994 = vsel %vm4963, %v3553, %v4928
      %v4995 = vsel %vm4963, %v3554, %v4930
      %v4996 = vld [vmem:[%s1] sm:$0xff]
      %v4997 = vld [vmem:[%s1 + $0x8] sm:$0xff]
      %v4998 = vld [vmem:[%s1 + $0x10] sm:$0xff]
      %v4999 = vld [vmem:[%s1 + $0x18] sm:$0xff]
      %v5000 = vld [vmem:[%s1 + $0x20] sm:$0xff]
      %v5001 = vld [vmem:[%s1 + $0x28] sm:$0xff]
      %v5002 = vld [vmem:[%s1 + $0x30] sm:$0xff]
      %v5003 = vld [vmem:[%s1 + $0x38] sm:$0xff]
      %v5004 = vld [vmem:[%s1 + $0x40] sm:$0xff]
      %v5005 = vld [vmem:[%s1 + $0x48] sm:$0xff]
      %v5006 = vld [vmem:[%s1 + $0x50] sm:$0xff]
      %v5007 = vld [vmem:[%s1 + $0x58] sm:$0xff]
      %v5008 = vld [vmem:[%s1 + $0x60] sm:$0xf]
      %v5009 = vld [vmem:[%s2] sm:$0x1]
      %v5011 = vperm.slane %v5009, 0
      %vm5013 = vcmask 818176
      %v5015 = vsel %vm5013, %v4964, 0
      %v5018 = vsel %vm5013, %v4965, 0
      %v5021 = vsel %vm5013, %v4966, 0
      %v5024 = vsel %vm5013, %v4967, 0
      %v5027 = vsel %vm5013, %v4968, 0
      %v5030 = vsel %vm5013, %v4969, 0
      %v5033 = vsel %vm5013, %v4970, 0
      %v5036 = vsel %vm5013, %v4971, 0
      %v5039 = vsel %vm5013, %v4972, 0
      %v5042 = vsel %vm5013, %v4973, 0
      %v5045 = vsel %vm5013, %v4974, 0
      %v5048 = vsel %vm5013, %v4975, 0
      %v5051 = vsel %vm5013, %v4976, 0
      %v5054 = vsel %vm5013, %v4977, 0
      %v5057 = vsel %vm5013, %v4978, 0
      %v5060 = vsel %vm5013, %v4979, 0
      %v5063 = vsel %vm5013, %v4980, 0
      %v5066 = vsel %vm5013, %v4981, 0
      %v5069 = vsel %vm5013, %v4982, 0
      %v5072 = vsel %vm5013, %v4983, 0
      %v5075 = vsel %vm5013, %v4984, 0
      %v5078 = vsel %vm5013, %v4985, 0
      %v5081 = vsel %vm5013, %v4986, 0
      %v5084 = vsel %vm5013, %v4987, 0
      %v5087 = vsel %vm5013, %v4988, 0
      %v5090 = vsel %vm5013, %v4989, 0
      %v5093 = vsel %vm5013, %v4990, 0
      %v5096 = vsel %vm5013, %v4991, 0
      %v5099 = vsel %vm5013, %v4992, 0
      %v5102 = vsel %vm5013, %v4993, 0
      %v5105 = vsel %vm5013, %v4994, 0
      %v5108 = vsel %vm5013, %v4995, 0
      %vm5110 = vcmask 1043456
      %v5112 = vsel %vm5110, %v5008, 0
      %5114 = vmatpush.msra.mxu0 0.0
      %5115 = vmatpush.msra.mxu0 0.0
      %5116 = vmatpush.msra.mxu0 0.0
      %5117 = vmatpush.msra.mxu0 %v5112
      %5118 = vmatpush.msra.mxu0 %v5007
      %5119 = vmatpush.msra.mxu0 %v5006
      %5120 = vmatpush.msra.mxu0 %v5005
      %5121 = vmatpush.msra.mxu0 %v5004
      %5122 = vmatpush.msra.mxu0 %v5003
      %5123 = vmatpush.msra.mxu0 %v5002
      %5124 = vmatpush.msra.mxu0 %v5001
      %5125 = vmatpush.msra.mxu0 %v5000
      %5126 = vmatpush.msra.mxu0 %v4999
      %5127 = vmatpush.msra.mxu0 %v4998
      %5128 = vmatpush.msra.mxu0 %v4997
      %5129 = vmatpush.msra.mxu0 %v4996
      %5130 = vmatmul.f32.gmra.mxu0 %v5015
      %v5131 = vpop.f32.mrf.mxu0
      %v5132 = vadd.f32 %v5011, %v5131
      %5133 = vmatmul.f32.gmra.mxu0 %v5018
      %v5134 = vpop.f32.mrf.mxu0
      %v5135 = vadd.f32 %v5011, %v5134
      %5136 = vmatmul.f32.gmra.mxu0 %v5021
      %v5137 = vpop.f32.mrf.mxu0
      %v5138 = vadd.f32 %v5011, %v5137
      %5139 = vmatmul.f32.gmra.mxu0 %v5024
      %v5140 = vpop.f32.mrf.mxu0
      %v5141 = vadd.f32 %v5011, %v5140
      %5142 = vmatmul.f32.gmra.mxu0 %v5027
      %v5143 = vpop.f32.mrf.mxu0
      %v5144 = vadd.f32 %v5011, %v5143
      %5145 = vmatmul.f32.gmra.mxu0 %v5030
      %v5146 = vpop.f32.mrf.mxu0
      %v5147 = vadd.f32 %v5011, %v5146
      %5148 = vmatmul.f32.gmra.mxu0 %v5033
      %v5149 = vpop.f32.mrf.mxu0
      %v5150 = vadd.f32 %v5011, %v5149
      %5151 = vmatmul.f32.gmra.mxu0 %v5036
      %v5152 = vpop.f32.mrf.mxu0
      %v5153 = vadd.f32 %v5011, %v5152
      %5154 = vmatmul.f32.gmra.mxu0 %v5039
      %v5155 = vpop.f32.mrf.mxu0
      %v5156 = vadd.f32 %v5011, %v5155
      %5157 = vmatmul.f32.gmra.mxu0 %v5042
      %v5158 = vpop.f32.mrf.mxu0
      %v5159 = vadd.f32 %v5011, %v5158
      %5160 = vmatmul.f32.gmra.mxu0 %v5045
      %v5161 = vpop.f32.mrf.mxu0
      %v5162 = vadd.f32 %v5011, %v5161
      %5163 = vmatmul.f32.gmra.mxu0 %v5048
      %v5164 = vpop.f32.mrf.mxu0
      %v5165 = vadd.f32 %v5011, %v5164
      %5166 = vmatmul.f32.gmra.mxu0 %v5051
      %v5167 = vpop.f32.mrf.mxu0
      %v5168 = vadd.f32 %v5011, %v5167
      %5169 = vmatmul.f32.gmra.mxu0 %v5054
      %v5170 = vpop.f32.mrf.mxu0
      %v5171 = vadd.f32 %v5011, %v5170
      %5172 = vmatmul.f32.gmra.mxu0 %v5057
      %v5173 = vpop.f32.mrf.mxu0
      %v5174 = vadd.f32 %v5011, %v5173
      %5175 = vmatmul.f32.gmra.mxu0 %v5060
      %v5176 = vpop.f32.mrf.mxu0
      %v5177 = vadd.f32 %v5011, %v5176
      %5178 = vmatmul.f32.gmra.mxu0 %v5063
      %v5179 = vpop.f32.mrf.mxu0
      %v5180 = vadd.f32 %v5011, %v5179
      %5181 = vmatmul.f32.gmra.mxu0 %v5066
      %v5182 = vpop.f32.mrf.mxu0
      %v5183 = vadd.f32 %v5011, %v5182
      %5184 = vmatmul.f32.gmra.mxu0 %v5069
      %v5185 = vpop.f32.mrf.mxu0
      %v5186 = vadd.f32 %v5011, %v5185
      %5187 = vmatmul.f32.gmra.mxu0 %v5072
      %v5188 = vpop.f32.mrf.mxu0
      %v5189 = vadd.f32 %v5011, %v5188
      %5190 = vmatmul.f32.gmra.mxu0 %v5075
      %v5191 = vpop.f32.mrf.mxu0
      %v5192 = vadd.f32 %v5011, %v5191
      %5193 = vmatmul.f32.gmra.mxu0 %v5078
      %v5194 = vpop.f32.mrf.mxu0
      %v5195 = vadd.f32 %v5011, %v5194
      %5196 = vmatmul.f32.gmra.mxu0 %v5081
      %v5197 = vpop.f32.mrf.mxu0
      %v5198 = vadd.f32 %v5011, %v5197
      %5199 = vmatmul.f32.gmra.mxu0 %v5084
      %v5200 = vpop.f32.mrf.mxu0
      %v5201 = vadd.f32 %v5011, %v5200
      %5202 = vmatmul.f32.gmra.mxu0 %v5087
      %v5203 = vpop.f32.mrf.mxu0
      %v5204 = vadd.f32 %v5011, %v5203
      %5205 = vmatmul.f32.gmra.mxu0 %v5090
      %v5206 = vpop.f32.mrf.mxu0
      %v5207 = vadd.f32 %v5011, %v5206
      %5208 = vmatmul.f32.gmra.mxu0 %v5093
      %v5209 = vpop.f32.mrf.mxu0
      %v5210 = vadd.f32 %v5011, %v5209
      %5211 = vmatmul.f32.gmra.mxu0 %v5096
      %v5212 = vpop.f32.mrf.mxu0
      %v5213 = vadd.f32 %v5011, %v5212
      %5214 = vmatmul.f32.gmra.mxu0 %v5099
      %v5215 = vpop.f32.mrf.mxu0
      %v5216 = vadd.f32 %v5011, %v5215
      %5217 = vmatmul.f32.gmra.mxu0 %v5102
      %v5218 = vpop.f32.mrf.mxu0
      %v5219 = vadd.f32 %v5011, %v5218
      %5220 = vmatmul.f32.gmra.mxu0 %v5105
      %v5221 = vpop.f32.mrf.mxu0
      %v5222 = vadd.f32 %v5011, %v5221
      %5223 = vmatmul.f32.gmra.mxu0 %v5108
      %v5224 = vpop.f32.mrf.mxu0
      %v5225 = vadd.f32 %v5011, %v5224
      %5226 = vdwg.mxu0
      %5227 = vst.msk [vmem:[%s170] sm:$0xff] %vm3093, %v5132
      %5228 = vst.msk [vmem:[%s170 + $0x8] sm:$0xff] %vm3093, %v5135
      %5229 = vst.msk [vmem:[%s170 + $0x10] sm:$0xff] %vm3093, %v5138
      %5230 = vst.msk [vmem:[%s170 + $0x18] sm:$0xff] %vm3093, %v5141
      %5231 = vst.msk [vmem:[%s170 + $0x20] sm:$0xff] %vm3093, %v5144
      %5232 = vst.msk [vmem:[%s170 + $0x28] sm:$0xff] %vm3093, %v5147
      %5233 = vst.msk [vmem:[%s170 + $0x30] sm:$0xff] %vm3093, %v5150
      %5234 = vst.msk [vmem:[%s170 + $0x38] sm:$0xff] %vm3093, %v5153
      %5235 = vst.msk [vmem:[%s170 + $0x40] sm:$0xff] %vm3093, %v5156
      %5236 = vst.msk [vmem:[%s170 + $0x48] sm:$0xff] %vm3093, %v5159
      %5237 = vst.msk [vmem:[%s170 + $0x50] sm:$0xff] %vm3093, %v5162
      %5238 = vst.msk [vmem:[%s170 + $0x58] sm:$0xff] %vm3093, %v5165
      %5239 = vst.msk [vmem:[%s170 + $0x60] sm:$0xff] %vm3093, %v5168
      %5240 = vst.msk [vmem:[%s170 + $0x68] sm:$0xff] %vm3093, %v5171
      %5241 = vst.msk [vmem:[%s170 + $0x70] sm:$0xff] %vm3093, %v5174
      %5242 = vst.msk [vmem:[%s170 + $0x78] sm:$0xff] %vm3093, %v5177
      %5243 = vst.msk [vmem:[%s170 + $0x80] sm:$0xff] %vm3093, %v5180
      %5244 = vst.msk [vmem:[%s170 + $0x88] sm:$0xff] %vm3093, %v5183
      %5245 = vst.msk [vmem:[%s170 + $0x90] sm:$0xff] %vm3093, %v5186
      %5246 = vst.msk [vmem:[%s170 + $0x98] sm:$0xff] %vm3093, %v5189
      %5247 = vst.msk [vmem:[%s170 + $0xa0] sm:$0xff] %vm3093, %v5192
      %5248 = vst.msk [vmem:[%s170 + $0xa8] sm:$0xff] %vm3093, %v5195
      %5249 = vst.msk [vmem:[%s170 + $0xb0] sm:$0xff] %vm3093, %v5198
      %5250 = vst.msk [vmem:[%s170 + $0xb8] sm:$0xff] %vm3093, %v5201
      %5251 = vst.msk [vmem:[%s170 + $0xc0] sm:$0xff] %vm3093, %v5204
      %5252 = vst.msk [vmem:[%s170 + $0xc8] sm:$0xff] %vm3093, %v5207
      %5253 = vst.msk [vmem:[%s170 + $0xd0] sm:$0xff] %vm3093, %v5210
      %5254 = vst.msk [vmem:[%s170 + $0xd8] sm:$0xff] %vm3093, %v5213
      %5255 = vst.msk [vmem:[%s170 + $0xe0] sm:$0xff] %vm3093, %v5216
      %5256 = vst.msk [vmem:[%s170 + $0xe8] sm:$0xff] %vm3093, %v5219
      %5257 = vst.msk [vmem:[%s170 + $0xf0] sm:$0xff] %vm3093, %v5222
      %5258 = vst.msk [vmem:[%s170 + $0xf8] sm:$0xff] %vm3093, %v5225
      %p5259 = scmp.lt.s32.totalorder %s14, 1
      %s5260 = scalar_select %p5259, %s14, 1
      %s5261 = smul.addr %s5260, 32
      %s5262 = smul.addr %s5261, 8
      %s5263 = scalar_lea.vmem %s3, %s5262
      // Predicated region
      $region33: #{tpu_custom_call.1} parent=31 // pred_check
        %p5264 = pneg %p100
      $region34: #{tpu_custom_call.1} parent=31 // pred_check_branch
        %5266 = sbr.rel (%p5264) target = $region36
      $region35: #{tpu_custom_call.1} parent=31 // pred_region
        _
      $region36: #{tpu_custom_call.1} parent=31 // pred_fallthru
        _
    $region32: #{tpu_custom_call.1} parent=5 // pred_fallthru
      _
    %p5267 = scmp.le.s32.totalorder 2, %s9
    // Predicated region
    $region37: #{tpu_custom_call.1} parent=5 // pred_check
      %p5268 = pneg %p5267
    $region38: #{tpu_custom_call.1} parent=5 // pred_check_branch
      %5270 = sbr.rel (%p5268) target = $region40
    $region39: #{tpu_custom_call.1} parent=5 // pred_region
      %s5271 = ssub.s32 %s9, 2
      // Predicated region
      $region41: #{tpu_custom_call.1} parent=39 // pred_check
        %p5272 = pneg %p106
      $region42: #{tpu_custom_call.1} parent=39 // pred_check_branch
        %5274 = sbr.rel (%p5272) target = $region44
      $region43: #{tpu_custom_call.1} parent=39 // pred_region
        %p5275 = scmp.lt.s32.totalorder %s15, 1
        %s5276 = scalar_select %p5275, %s15, 1
        %s5277 = smul.addr %s5276, 32
        %s5278 = smul.addr %s5277, 8
        %s5279 = scalar_lea.vmem %s3, %s5278
      $region44: #{tpu_custom_call.1} parent=39 // pred_fallthru
        _
    $region40: #{tpu_custom_call.1} parent=5 // pred_fallthru
      _
  $region6: #{tpu_custom_call.1} parent=0 // loop_footer
    %s13 = sadd.s32 1, %s9
  $region7: #{tpu_custom_call.1} parent=0 // loop_footer_branch
    %8 = sbr.rel target = $region3
  $region8: #{tpu_custom_call.1} parent=0 // loop_exit
    _

</llo_original>
